<compile_context>
chip_gen: v7x
topology: tpu7x:2x2x1
jax: 0.10.0
libtpu: 0.0.40
codegen_flags: <defaults>
</compile_context>

<pallas_src>
import functools
import math

import jax
import jax.numpy as jnp
from jax.experimental import pallas as pl
from jax.experimental.pallas import tpu as pltpu

# ---------------------------------------------------------------- config ----
INPUT_SIZE = 4
SEQ_STEPS = 8
HIDDEN_N = 32
NUM_LAYERS_N = 2          # kernel below is specialized to 2-layer stacks
HIDDEN_PSI = 32
NUM_LAYERS_PSI = 2
BATCH = 2

NR_MEAN, NR_STD = 0.1, 1.5
NI_MEAN, NI_STD = -0.2, 2.0


# ------------------------------------------------------------ fused kernel --
def _ciwlstm_kernel(k_ref, nr_ref,
                    wk_n0_ref, wx_n0_ref, whh_n0_ref, b_n0_ref,
                    wih_n1_ref, whh_n1_ref, b_n1_ref,
                    fc1w_ref, fc1b_ref,
                    fc2wx_ref, fc2wk_ref, fc2b_ref,
                    wk_p0_ref, wnr_p0_ref, wni_p0_ref, whh_p0_ref, b_p0_ref,
                    wih_p1_ref, whh_p1_ref, b_p1_ref,
                    fcpw_ref, fcpb_ref,
                    out_ref,
                    seq0, seq1, xp, ni1tb, ni2tb, psitb,
                    *, T, B, I, Hn, Hp):
    """Whole CIWLSTM forward on VMEM-resident data (single invocation)."""
    f32 = jnp.float32

    def run_layer(kb, whh_ref, seq_ref, H):
        """LSTM recurrence.  The input projection (incl. fused bias) already
        lives in xp[:, :4H] (rows t*B..t*B+B per step); `kb` is an optional
        per-batch constant term (the folded k input column)."""
        whh = whh_ref[...]                              # (H, 4H)
        h = jnp.zeros((B, H), f32)
        c = jnp.zeros((B, H), f32)
        for t in range(T):                              # fully unrolled (T=8)
            g = xp[t * B:(t + 1) * B, 0:4 * H] + jnp.dot(
                h, whh, preferred_element_type=f32)
            if kb is not None:
                g = g + kb
            # one sigmoid + one tanh EUP push over the full 4H lanes,
            # then slice the results (PyTorch gate order i, f, g, o)
            sig = jax.nn.sigmoid(g)
            tnh = jnp.tanh(g)
            i_g = sig[:, 0 * H:1 * H]
            f_g = sig[:, 1 * H:2 * H]
            g_g = tnh[:, 2 * H:3 * H]
            o_g = sig[:, 3 * H:4 * H]
            c = f_g * c + i_g * g_g
            h = o_g * jnp.tanh(c)
            seq_ref[t * B:(t + 1) * B, 0:H] = h

    k = k_ref[...]                                      # (B, 1)
    nr_tb = nr_ref[...]                                 # (T*B, I), time-major

    # ---------------- lstm_n layer 0 (k column folded into a rank-1 term) ---
    xp[:, 0:4 * Hn] = jnp.dot(nr_tb, wx_n0_ref[...],
                              preferred_element_type=f32) + b_n0_ref[...]
    run_layer(k * wk_n0_ref[...], whh_n0_ref, seq0, Hn)

    # ---------------- lstm_n layer 1 -----------------------------------------
    xp[:, 0:4 * Hn] = jnp.dot(seq0[:, 0:Hn], wih_n1_ref[...],
                              preferred_element_type=f32) + b_n1_ref[...]
    run_layer(None, whh_n1_ref, seq1, Hn)

    # ---------------- fc1_n over all T*B rows + ReLU (one matmul) -----------
    ni1tb[...] = jnp.maximum(
        jnp.dot(seq1[:, 0:Hn], fc1w_ref[...],
                preferred_element_type=f32) + fc1b_ref[...], 0.0)
    # (T*B, I) rows -> (B, T*I) PyTorch flattening order (one-time lane concat)
    ni1 = jnp.concatenate(
        [ni1tb[t * B:(t + 1) * B, :] for t in range(T)], axis=1)

    # ---------------- fc2_n (k column applied as rank-1 term) ---------------
    ni2 = (jnp.dot(ni1, fc2wx_ref[...], preferred_element_type=f32)
           + k * fc2wk_ref[...] + fc2b_ref[...])        # (B, T*I)

    # ---------------- lstm_psi layer 0 (bdn affine folded at prep) ----------
    for t in range(T):                                  # (B, T*I) -> (T*B, I)
        ni2tb[t * B:(t + 1) * B, :] = ni2[:, t * I:(t + 1) * I]
    xp[:, 0:4 * Hp] = (
        jnp.dot(nr_tb, wnr_p0_ref[...], preferred_element_type=f32)
        + jnp.dot(ni2tb[...], wni_p0_ref[...], preferred_element_type=f32)
        + b_p0_ref[...])
    run_layer(k * wk_p0_ref[...], whh_p0_ref, seq0, Hp)

    # ---------------- lstm_psi layer 1 ---------------------------------------
    xp[:, 0:4 * Hp] = jnp.dot(seq0[:, 0:Hp], wih_p1_ref[...],
                              preferred_element_type=f32) + b_p1_ref[...]
    run_layer(None, whh_p1_ref, seq1, Hp)

    # ---------------- fc_psi over all T*B rows (one matmul) -----------------
    psitb[...] = jnp.dot(seq1[:, 0:Hp], fcpw_ref[...],
                         preferred_element_type=f32) + fcpb_ref[...]
    psi = jnp.concatenate(
        [psitb[t * B:(t + 1) * B, :] for t in range(T)], axis=1)  # (B, 2*T*I)

    S = T * I
    psi_r = psi[:, :S]      # literal split at the flat midpoint (== the
    psi_i = psi[:, S:]      # hard-coded 10000 index of the original module)
    intens = psi_r * psi_r + psi_i * psi_i

    # single lane-dense (B, 4*T*I) store: [ni | psi_r | psi_i | Int]
    out_ref[...] = jnp.concatenate([ni2, psi_r, psi_i, intens], axis=1)


# ---------------------------------------------------------- weight prep -----
def prepare_params(params):
    """Transpose / split / fold weights once, outside the jitted forward."""
    I, T = INPUT_SIZE, SEQ_STEPS

    def lstm_upper(layer):
        return (jnp.transpose(layer["w_ih"]), jnp.transpose(layer["w_hh"]),
                (layer["b_ih"] + layer["b_hh"]).reshape(1, -1))

    # lstm_n layer 0: split W_ih into k column / nr columns
    l = params["lstm_n"][0]
    wk_n0 = jnp.transpose(l["w_ih"][:, 0:1])                     # (1, 4Hn)
    wx_n0 = jnp.transpose(l["w_ih"][:, 1:])                      # (I, 4Hn)
    whh_n0 = jnp.transpose(l["w_hh"])                            # (Hn, 4Hn)
    b_n0 = (l["b_ih"] + l["b_hh"]).reshape(1, -1)

    wih_n1, whh_n1, b_n1 = lstm_upper(params["lstm_n"][1])

    fc1w = jnp.transpose(params["fc1_n"]["w"])                   # (Hn, I)
    fc1b = params["fc1_n"]["b"].reshape(1, -1)

    fc2wT = jnp.transpose(params["fc2_n"]["w"])                  # (T*I+1, T*I)
    fc2wx = fc2wT[:T * I, :]
    fc2wk = fc2wT[T * I:, :]                                     # (1, T*I)
    fc2b = params["fc2_n"]["b"].reshape(1, -1)

    # lstm_psi layer 0: fold bdn affine (scale into weights, shift into bias)
    l = params["lstm_psi"][0]
    w = l["w_ih"]                                                # (4Hp, 2I+1)
    wk_p0 = NR_STD * jnp.transpose(w[:, 0:1])                    # (1, 4Hp)
    wnr_p0 = NR_STD * jnp.transpose(w[:, 1:I + 1])               # (I, 4Hp)
    wni_p0 = NI_STD * jnp.transpose(w[:, I + 1:])                # (I, 4Hp)
    b_p0 = ((l["b_ih"] + l["b_hh"])
            + NR_MEAN * jnp.sum(w[:, :I + 1], axis=1)
            + NI_MEAN * jnp.sum(w[:, I + 1:], axis=1)).reshape(1, -1)
    whh_p0 = jnp.transpose(l["w_hh"])

    wih_p1, whh_p1, b_p1 = lstm_upper(params["lstm_psi"][1])

    fcpw = jnp.transpose(params["fc_psi"]["w"])                  # (Hp, 2I)
    fcpb = params["fc_psi"]["b"].reshape(1, -1)

    return dict(wk_n0=wk_n0, wx_n0=wx_n0, whh_n0=whh_n0, b_n0=b_n0,
                wih_n1=wih_n1, whh_n1=whh_n1, b_n1=b_n1,
                fc1w=fc1w, fc1b=fc1b,
                fc2wx=fc2wx, fc2wk=fc2wk, fc2b=fc2b,
                wk_p0=wk_p0, wnr_p0=wnr_p0, wni_p0=wni_p0,
                whh_p0=whh_p0, b_p0=b_p0,
                wih_p1=wih_p1, whh_p1=whh_p1, b_p1=b_p1,
                fcpw=fcpw, fcpb=fcpb)


# -------------------------------------------------------------- forward -----
@jax.jit
def ciwlstm_forward(knr, p):
    B = knr.shape[0]
    T, I, Hn, Hp = SEQ_STEPS, INPUT_SIZE, HIDDEN_N, HIDDEN_PSI
    Hm = max(Hn, Hp)

    # layout plumbing only: time-major (T*B, I) view of nr so the kernel does
    # each layer-0 input projection as one M = T*B matmul.
    k = knr[:, 0:1]
    nr_tb = jnp.transpose(knr[:, 1:].reshape(B, T, I),
                          (1, 0, 2)).reshape(T * B, I)

    kernel = functools.partial(_ciwlstm_kernel, T=T, B=B, I=I, Hn=Hn, Hp=Hp)

    args = (k, nr_tb,
            p["wk_n0"], p["wx_n0"], p["whh_n0"], p["b_n0"],
            p["wih_n1"], p["whh_n1"], p["b_n1"],
            p["fc1w"], p["fc1b"],
            p["fc2wx"], p["fc2wk"], p["fc2b"],
            p["wk_p0"], p["wnr_p0"], p["wni_p0"], p["whh_p0"], p["b_p0"],
            p["wih_p1"], p["whh_p1"], p["b_p1"],
            p["fcpw"], p["fcpb"])

    out = pl.pallas_call(
        kernel,
        out_shape=jax.ShapeDtypeStruct((B, 4 * T * I), jnp.float32),
        # no grid: a single invocation, all operands whole-array VMEM blocks
        scratch_shapes=[
            pltpu.VMEM((T * B, Hm), jnp.float32),       # seq0: layer-0 hidden
            pltpu.VMEM((T * B, Hm), jnp.float32),       # seq1: layer-1 hidden
            pltpu.VMEM((T * B, 4 * Hm), jnp.float32),   # xp: input-proj slab
            pltpu.VMEM((T * B, I), jnp.float32),        # ni1 (time-major rows)
            pltpu.VMEM((T * B, I), jnp.float32),        # ni2 (time-major rows)
            pltpu.VMEM((T * B, 2 * I), jnp.float32),    # psi (time-major rows)
        ],
        cost_estimate=pl.CostEstimate(flops=1_200_000,
                                      transcendentals=20_000,
                                      bytes_accessed=250_000),
    )(*args)

    S = T * I
    return out[:, :S], out[:, S:2 * S], out[:, 2 * S:3 * S], out[:, 3 * S:]


# --------------------------------------------------- pure-JAX reference -----
def _reference_forward(knr, params):
    """Direct translation of the PyTorch module (for correctness check)."""
    B = knr.shape[0]
    T, I, Hn, Hp = SEQ_STEPS, INPUT_SIZE, HIDDEN_N, HIDDEN_PSI
    k = knr[:, 0:1]
    nr = knr[:, 1:].reshape(B, T, I)
    x = jnp.concatenate(
        [jnp.broadcast_to(k[:, None, :], (B, T, 1)), nr], axis=2)  # (B,T,I+1)

    def lstm_stack(x, layers, H):
        for layer in layers:
            w_ih, w_hh = layer["w_ih"], layer["w_hh"]
            b = layer["b_ih"] + layer["b_hh"]
            h = jnp.zeros((B, H), jnp.float32)
            c = jnp.zeros((B, H), jnp.float32)
            outs = []
            for t in range(x.shape[1]):
                g = x[:, t, :] @ w_ih.T + h @ w_hh.T + b
                i_g = jax.nn.sigmoid(g[:, :H])
                f_g = jax.nn.sigmoid(g[:, H:2 * H])
                g_g = jnp.tanh(g[:, 2 * H:3 * H])
                o_g = jax.nn.sigmoid(g[:, 3 * H:])
                c = f_g * c + i_g * g_g
                h = o_g * jnp.tanh(c)
                outs.append(h)
            x = jnp.stack(outs, axis=1)
        return x

    hn = lstm_stack(x, params["lstm_n"], Hn)
    ni1 = jax.nn.relu(hn.reshape(B * T, Hn) @ params["fc1_n"]["w"].T
                      + params["fc1_n"]["b"]).reshape(B, T * I)
    ni2 = (jnp.concatenate([ni1, k], axis=1) @ params["fc2_n"]["w"].T
           + params["fc2_n"]["b"])
    inp = jnp.concatenate([x * NR_STD + NR_MEAN,
                           ni2.reshape(B, T, I) * NI_STD + NI_MEAN], axis=2)
    hp = lstm_stack(inp, params["lstm_psi"], Hp)
    psi = (hp.reshape(B * T, Hp) @ params["fc_psi"]["w"].T
           + params["fc_psi"]["b"]).reshape(B, T * 2 * I)
    S = T * I
    psi_r, psi_i = psi[:, :S], psi[:, S:]
    return ni2, psi_r, psi_i, psi_r ** 2 + psi_i ** 2


# --------------------------------------------------------------- params -----
def init_params(key):
    keys = iter(jax.random.split(key, 64))

    def uni(kk, shape, bound):
        return jax.random.uniform(kk, shape, jnp.float32, -bound, bound)

    def lstm_stack(num_layers, input_size, hidden):
        bound = 1.0 / math.sqrt(hidden)
        layers = []
        for l in range(num_layers):
            din = input_size if l == 0 else hidden
            layers.append({
                "w_ih": uni(next(keys), (4 * hidden, din), bound),
                "w_hh": uni(next(keys), (4 * hidden, hidden), bound),
                "b_ih": uni(next(keys), (4 * hidden,), bound),
                "b_hh": uni(next(keys), (4 * hidden,), bound),
            })
        return layers

    def lin(out_f, in_f):
        bound = 1.0 / math.sqrt(in_f)
        return {"w": uni(next(keys), (out_f, in_f), bound),
                "b": uni(next(keys), (out_f,), bound)}

    return {
        "lstm_n": lstm_stack(NUM_LAYERS_N, INPUT_SIZE + 1, HIDDEN_N),
        "lstm_psi": lstm_stack(NUM_LAYERS_PSI, 2 * INPUT_SIZE + 1, HIDDEN_PSI),
        "fc1_n": lin(INPUT_SIZE, HIDDEN_N),
        "fc2_n": lin(SEQ_STEPS * INPUT_SIZE, SEQ_STEPS * INPUT_SIZE + 1),
        "fc_psi": lin(2 * INPUT_SIZE, HIDDEN_PSI),
    }


# ------------------------------------------------------------------ main ----
if __name__ == "__main__":
    key = jax.random.PRNGKey(0)
    pkey, xkey = jax.random.split(key)
    params = init_params(pkey)
    prepped = prepare_params(params)          # weight fusion / folds done once

    # knr: (batch, 1 + seq_steps * input_size)
    knr = jax.random.normal(
        xkey, (BATCH, 1 + SEQ_STEPS * INPUT_SIZE), jnp.float32)

    outs = ciwlstm_forward(knr, prepped)
    jax.block_until_ready(outs)
    ni, psi_r, psi_i, Int = outs

    S = SEQ_STEPS * INPUT_SIZE
    assert ni.shape == (BATCH, S)
    assert psi_r.shape == (BATCH, S)
    assert psi_i.shape == (BATCH, S)
    assert Int.shape == (BATCH, S)

    # cross-check against a plain-JAX translation of the PyTorch module
    r_ni, r_pr, r_pi, r_int = _reference_forward(knr, params)
    for a, b in ((ni, r_ni), (psi_r, r_pr), (psi_i, r_pi), (Int, r_int)):
        err = float(jnp.max(jnp.abs(a - b)))
        assert err < 5e-2, f"kernel/reference mismatch: max abs err = {err}"

    print("KERNEL_OK")
</pallas_src>

<mosaic_0001>
module attributes {stable_mosaic.version = 11 : i64} {
  func.func @_ciwlstm_kernel(%arg0: memref<2x1xf32, #tpu.memory_space<vmem>>, %arg1: memref<16x4xf32, #tpu.memory_space<vmem>>, %arg2: memref<1x128xf32, #tpu.memory_space<vmem>>, %arg3: memref<4x128xf32, #tpu.memory_space<vmem>>, %arg4: memref<32x128xf32, #tpu.memory_space<vmem>>, %arg5: memref<1x128xf32, #tpu.memory_space<vmem>>, %arg6: memref<32x128xf32, #tpu.memory_space<vmem>>, %arg7: memref<32x128xf32, #tpu.memory_space<vmem>>, %arg8: memref<1x128xf32, #tpu.memory_space<vmem>>, %arg9: memref<32x4xf32, #tpu.memory_space<vmem>>, %arg10: memref<1x4xf32, #tpu.memory_space<vmem>>, %arg11: memref<32x32xf32, #tpu.memory_space<vmem>>, %arg12: memref<1x32xf32, #tpu.memory_space<vmem>>, %arg13: memref<1x32xf32, #tpu.memory_space<vmem>>, %arg14: memref<1x128xf32, #tpu.memory_space<vmem>>, %arg15: memref<4x128xf32, #tpu.memory_space<vmem>>, %arg16: memref<4x128xf32, #tpu.memory_space<vmem>>, %arg17: memref<32x128xf32, #tpu.memory_space<vmem>>, %arg18: memref<1x128xf32, #tpu.memory_space<vmem>>, %arg19: memref<32x128xf32, #tpu.memory_space<vmem>>, %arg20: memref<32x128xf32, #tpu.memory_space<vmem>>, %arg21: memref<1x128xf32, #tpu.memory_space<vmem>>, %arg22: memref<32x8xf32, #tpu.memory_space<vmem>>, %arg23: memref<1x8xf32, #tpu.memory_space<vmem>>, %arg24: memref<2x128xf32, #tpu.memory_space<vmem>>, %arg25: memref<16x32xf32, #tpu.memory_space<vmem>>, %arg26: memref<16x32xf32, #tpu.memory_space<vmem>>, %arg27: memref<16x128xf32, #tpu.memory_space<vmem>>, %arg28: memref<16x4xf32, #tpu.memory_space<vmem>>, %arg29: memref<16x4xf32, #tpu.memory_space<vmem>>, %arg30: memref<16x8xf32, #tpu.memory_space<vmem>>) attributes {dimension_semantics = [], scalar_prefetch = 0 : i64, scratch_operands = 6 : i64, tpu.core_type = #tpu.core_type<tc>} {
    %c0 = arith.constant 0 : index
    %c0_0 = arith.constant 0 : index
    %0 = vector.load %arg0[%c0, %c0_0] : memref<2x1xf32, #tpu.memory_space<vmem>>, vector<2x1xf32>
    %c0_1 = arith.constant 0 : index
    %c0_2 = arith.constant 0 : index
    %1 = vector.load %arg1[%c0_1, %c0_2] : memref<16x4xf32, #tpu.memory_space<vmem>>, vector<16x4xf32>
    %c0_3 = arith.constant 0 : index
    %c0_4 = arith.constant 0 : index
    %2 = vector.load %arg3[%c0_3, %c0_4] : memref<4x128xf32, #tpu.memory_space<vmem>>, vector<4x128xf32>
    %cst = arith.constant dense<0.000000e+00> : vector<16x128xf32>
    %3 = tpu.matmul %1, %2, %cst {dimension_numbers = #tpu.dot_dimension_numbers<[1], [0], [0], [1], [0, 0, 1, 1], [], []>} : vector<16x4xf32>, vector<4x128xf32>, vector<16x128xf32> -> vector<16x128xf32>
    %c0_5 = arith.constant 0 : index
    %c0_6 = arith.constant 0 : index
    %4 = vector.load %arg5[%c0_5, %c0_6] : memref<1x128xf32, #tpu.memory_space<vmem>>, vector<1x128xf32>
    %5 = vector.broadcast %4 : vector<1x128xf32> to vector<16x128xf32>
    %6 = arith.addf %3, %5 : vector<16x128xf32>
    %c0_7 = arith.constant 0 : index
    %c0_8 = arith.constant 0 : index
    %7 = vector.load %arg27[%c0_7, %c0_8] : memref<16x128xf32, #tpu.memory_space<vmem>>, vector<16x128xf32>
    tpu.vector_store %arg27[%c0_7, %c0_8], %6 {strides = array<i32>} : memref<16x128xf32, #tpu.memory_space<vmem>>, vector<16x128xf32>,
    %c0_9 = arith.constant 0 : index
    %c0_10 = arith.constant 0 : index
    %8 = vector.load %arg2[%c0_9, %c0_10] : memref<1x128xf32, #tpu.memory_space<vmem>>, vector<1x128xf32>
    %9 = vector.broadcast %0 : vector<2x1xf32> to vector<2x128xf32>
    %10 = vector.broadcast %8 : vector<1x128xf32> to vector<2x128xf32>
    %11 = arith.mulf %9, %10 : vector<2x128xf32>
    %c0_11 = arith.constant 0 : index
    %c0_12 = arith.constant 0 : index
    %12 = vector.load %arg4[%c0_11, %c0_12] : memref<32x128xf32, #tpu.memory_space<vmem>>, vector<32x128xf32>
    %cst_13 = arith.constant 0.000000e+00 : f32
    %13 = vector.broadcast %cst_13 : f32 to vector<2x32xf32>
    %cst_14 = arith.constant 0.000000e+00 : f32
    %14 = vector.broadcast %cst_14 : f32 to vector<2x32xf32>
    %c0_15 = arith.constant 0 : index
    %c0_16 = arith.constant 0 : index
    %15 = vector.load %arg27[%c0_15, %c0_16] : memref<16x128xf32, #tpu.memory_space<vmem>>, vector<2x128xf32>
    %cst_17 = arith.constant dense<0.000000e+00> : vector<2x128xf32>
    %16 = tpu.matmul %13, %12, %cst_17 {dimension_numbers = #tpu.dot_dimension_numbers<[1], [0], [0], [1], [0, 0, 1, 1], [], []>} : vector<2x32xf32>, vector<32x128xf32>, vector<2x128xf32> -> vector<2x128xf32>
    %17 = arith.addf %15, %16 : vector<2x128xf32>
    %18 = arith.addf %17, %11 : vector<2x128xf32>
    %19 = arith.negf %18 : vector<2x128xf32>
    %20 = math.exp %19 : vector<2x128xf32>
    %cst_18 = arith.constant 1.000000e+00 : f32
    %21 = vector.broadcast %cst_18 : f32 to vector<2x128xf32>
    %22 = arith.addf %21, %20 : vector<2x128xf32>
    %23 = arith.divf %21, %22 : vector<2x128xf32>
    %24 = math.tanh %18 : vector<2x128xf32>
    %25 = vector.extract_strided_slice %23 {offsets = [0, 0], sizes = [2, 32], strides = [1, 1]} : vector<2x128xf32> to vector<2x32xf32>
    %26 = vector.extract_strided_slice %23 {offsets = [0, 32], sizes = [2, 32], strides = [1, 1]} : vector<2x128xf32> to vector<2x32xf32>
    %27 = vector.extract_strided_slice %24 {offsets = [0, 64], sizes = [2, 32], strides = [1, 1]} : vector<2x128xf32> to vector<2x32xf32>
    %28 = vector.extract_strided_slice %23 {offsets = [0, 96], sizes = [2, 32], strides = [1, 1]} : vector<2x128xf32> to vector<2x32xf32>
    %29 = arith.mulf %26, %14 : vector<2x32xf32>
    %30 = arith.mulf %25, %27 : vector<2x32xf32>
    %31 = arith.addf %29, %30 : vector<2x32xf32>
    %32 = math.tanh %31 : vector<2x32xf32>
    %33 = arith.mulf %28, %32 : vector<2x32xf32>
    %c0_19 = arith.constant 0 : index
    %c0_20 = arith.constant 0 : index
    %34 = vector.load %arg25[%c0_19, %c0_20] : memref<16x32xf32, #tpu.memory_space<vmem>>, vector<2x32xf32>
    tpu.vector_store %arg25[%c0_19, %c0_20], %33 {strides = array<i32>} : memref<16x32xf32, #tpu.memory_space<vmem>>, vector<2x32xf32>,
    %c2 = arith.constant 2 : index
    %c0_21 = arith.constant 0 : index
    %35 = vector.load %arg27[%c2, %c0_21] : memref<16x128xf32, #tpu.memory_space<vmem>>, vector<2x128xf32>
    %cst_22 = arith.constant dense<0.000000e+00> : vector<2x128xf32>
    %36 = tpu.matmul %33, %12, %cst_22 {dimension_numbers = #tpu.dot_dimension_numbers<[1], [0], [0], [1], [0, 0, 1, 1], [], []>} : vector<2x32xf32>, vector<32x128xf32>, vector<2x128xf32> -> vector<2x128xf32>
    %37 = arith.addf %35, %36 : vector<2x128xf32>
    %38 = arith.addf %37, %11 : vector<2x128xf32>
    %39 = arith.negf %38 : vector<2x128xf32>
    %40 = math.exp %39 : vector<2x128xf32>
    %cst_23 = arith.constant 1.000000e+00 : f32
    %41 = vector.broadcast %cst_23 : f32 to vector<2x128xf32>
    %42 = arith.addf %41, %40 : vector<2x128xf32>
    %43 = arith.divf %41, %42 : vector<2x128xf32>
    %44 = math.tanh %38 : vector<2x128xf32>
    %45 = vector.extract_strided_slice %43 {offsets = [0, 0], sizes = [2, 32], strides = [1, 1]} : vector<2x128xf32> to vector<2x32xf32>
    %46 = vector.extract_strided_slice %43 {offsets = [0, 32], sizes = [2, 32], strides = [1, 1]} : vector<2x128xf32> to vector<2x32xf32>
    %47 = vector.extract_strided_slice %44 {offsets = [0, 64], sizes = [2, 32], strides = [1, 1]} : vector<2x128xf32> to vector<2x32xf32>
    %48 = vector.extract_strided_slice %43 {offsets = [0, 96], sizes = [2, 32], strides = [1, 1]} : vector<2x128xf32> to vector<2x32xf32>
    %49 = arith.mulf %46, %31 : vector<2x32xf32>
    %50 = arith.mulf %45, %47 : vector<2x32xf32>
    %51 = arith.addf %49, %50 : vector<2x32xf32>
    %52 = math.tanh %51 : vector<2x32xf32>
    %53 = arith.mulf %48, %52 : vector<2x32xf32>
    %c2_24 = arith.constant 2 : index
    %c0_25 = arith.constant 0 : index
    %54 = vector.load %arg25[%c2_24, %c0_25] : memref<16x32xf32, #tpu.memory_space<vmem>>, vector<2x32xf32>
    tpu.vector_store %arg25[%c2_24, %c0_25], %53 {strides = array<i32>} : memref<16x32xf32, #tpu.memory_space<vmem>>, vector<2x32xf32>,
    %c4 = arith.constant 4 : index
    %c0_26 = arith.constant 0 : index
    %55 = vector.load %arg27[%c4, %c0_26] : memref<16x128xf32, #tpu.memory_space<vmem>>, vector<2x128xf32>
    %cst_27 = arith.constant dense<0.000000e+00> : vector<2x128xf32>
    %56 = tpu.matmul %53, %12, %cst_27 {dimension_numbers = #tpu.dot_dimension_numbers<[1], [0], [0], [1], [0, 0, 1, 1], [], []>} : vector<2x32xf32>, vector<32x128xf32>, vector<2x128xf32> -> vector<2x128xf32>
    %57 = arith.addf %55, %56 : vector<2x128xf32>
    %58 = arith.addf %57, %11 : vector<2x128xf32>
    %59 = arith.negf %58 : vector<2x128xf32>
    %60 = math.exp %59 : vector<2x128xf32>
    %cst_28 = arith.constant 1.000000e+00 : f32
    %61 = vector.broadcast %cst_28 : f32 to vector<2x128xf32>
    %62 = arith.addf %61, %60 : vector<2x128xf32>
    %63 = arith.divf %61, %62 : vector<2x128xf32>
    %64 = math.tanh %58 : vector<2x128xf32>
    %65 = vector.extract_strided_slice %63 {offsets = [0, 0], sizes = [2, 32], strides = [1, 1]} : vector<2x128xf32> to vector<2x32xf32>
    %66 = vector.extract_strided_slice %63 {offsets = [0, 32], sizes = [2, 32], strides = [1, 1]} : vector<2x128xf32> to vector<2x32xf32>
    %67 = vector.extract_strided_slice %64 {offsets = [0, 64], sizes = [2, 32], strides = [1, 1]} : vector<2x128xf32> to vector<2x32xf32>
    %68 = vector.extract_strided_slice %63 {offsets = [0, 96], sizes = [2, 32], strides = [1, 1]} : vector<2x128xf32> to vector<2x32xf32>
    %69 = arith.mulf %66, %51 : vector<2x32xf32>
    %70 = arith.mulf %65, %67 : vector<2x32xf32>
    %71 = arith.addf %69, %70 : vector<2x32xf32>
    %72 = math.tanh %71 : vector<2x32xf32>
    %73 = arith.mulf %68, %72 : vector<2x32xf32>
    %c4_29 = arith.constant 4 : index
    %c0_30 = arith.constant 0 : index
    %74 = vector.load %arg25[%c4_29, %c0_30] : memref<16x32xf32, #tpu.memory_space<vmem>>, vector<2x32xf32>
    tpu.vector_store %arg25[%c4_29, %c0_30], %73 {strides = array<i32>} : memref<16x32xf32, #tpu.memory_space<vmem>>, vector<2x32xf32>,
    %c6 = arith.constant 6 : index
    %c0_31 = arith.constant 0 : index
    %75 = vector.load %arg27[%c6, %c0_31] : memref<16x128xf32, #tpu.memory_space<vmem>>, vector<2x128xf32>
    %cst_32 = arith.constant dense<0.000000e+00> : vector<2x128xf32>
    %76 = tpu.matmul %73, %12, %cst_32 {dimension_numbers = #tpu.dot_dimension_numbers<[1], [0], [0], [1], [0, 0, 1, 1], [], []>} : vector<2x32xf32>, vector<32x128xf32>, vector<2x128xf32> -> vector<2x128xf32>
    %77 = arith.addf %75, %76 : vector<2x128xf32>
    %78 = arith.addf %77, %11 : vector<2x128xf32>
    %79 = arith.negf %78 : vector<2x128xf32>
    %80 = math.exp %79 : vector<2x128xf32>
    %cst_33 = arith.constant 1.000000e+00 : f32
    %81 = vector.broadcast %cst_33 : f32 to vector<2x128xf32>
    %82 = arith.addf %81, %80 : vector<2x128xf32>
    %83 = arith.divf %81, %82 : vector<2x128xf32>
    %84 = math.tanh %78 : vector<2x128xf32>
    %85 = vector.extract_strided_slice %83 {offsets = [0, 0], sizes = [2, 32], strides = [1, 1]} : vector<2x128xf32> to vector<2x32xf32>
    %86 = vector.extract_strided_slice %83 {offsets = [0, 32], sizes = [2, 32], strides = [1, 1]} : vector<2x128xf32> to vector<2x32xf32>
    %87 = vector.extract_strided_slice %84 {offsets = [0, 64], sizes = [2, 32], strides = [1, 1]} : vector<2x128xf32> to vector<2x32xf32>
    %88 = vector.extract_strided_slice %83 {offsets = [0, 96], sizes = [2, 32], strides = [1, 1]} : vector<2x128xf32> to vector<2x32xf32>
    %89 = arith.mulf %86, %71 : vector<2x32xf32>
    %90 = arith.mulf %85, %87 : vector<2x32xf32>
    %91 = arith.addf %89, %90 : vector<2x32xf32>
    %92 = math.tanh %91 : vector<2x32xf32>
    %93 = arith.mulf %88, %92 : vector<2x32xf32>
    %c6_34 = arith.constant 6 : index
    %c0_35 = arith.constant 0 : index
    %94 = vector.load %arg25[%c6_34, %c0_35] : memref<16x32xf32, #tpu.memory_space<vmem>>, vector<2x32xf32>
    tpu.vector_store %arg25[%c6_34, %c0_35], %93 {strides = array<i32>} : memref<16x32xf32, #tpu.memory_space<vmem>>, vector<2x32xf32>,
    %c8 = arith.constant 8 : index
    %c0_36 = arith.constant 0 : index
    %95 = vector.load %arg27[%c8, %c0_36] : memref<16x128xf32, #tpu.memory_space<vmem>>, vector<2x128xf32>
    %cst_37 = arith.constant dense<0.000000e+00> : vector<2x128xf32>
    %96 = tpu.matmul %93, %12, %cst_37 {dimension_numbers = #tpu.dot_dimension_numbers<[1], [0], [0], [1], [0, 0, 1, 1], [], []>} : vector<2x32xf32>, vector<32x128xf32>, vector<2x128xf32> -> vector<2x128xf32>
    %97 = arith.addf %95, %96 : vector<2x128xf32>
    %98 = arith.addf %97, %11 : vector<2x128xf32>
    %99 = arith.negf %98 : vector<2x128xf32>
    %100 = math.exp %99 : vector<2x128xf32>
    %cst_38 = arith.constant 1.000000e+00 : f32
    %101 = vector.broadcast %cst_38 : f32 to vector<2x128xf32>
    %102 = arith.addf %101, %100 : vector<2x128xf32>
    %103 = arith.divf %101, %102 : vector<2x128xf32>
    %104 = math.tanh %98 : vector<2x128xf32>
    %105 = vector.extract_strided_slice %103 {offsets = [0, 0], sizes = [2, 32], strides = [1, 1]} : vector<2x128xf32> to vector<2x32xf32>
    %106 = vector.extract_strided_slice %103 {offsets = [0, 32], sizes = [2, 32], strides = [1, 1]} : vector<2x128xf32> to vector<2x32xf32>
    %107 = vector.extract_strided_slice %104 {offsets = [0, 64], sizes = [2, 32], strides = [1, 1]} : vector<2x128xf32> to vector<2x32xf32>
    %108 = vector.extract_strided_slice %103 {offsets = [0, 96], sizes = [2, 32], strides = [1, 1]} : vector<2x128xf32> to vector<2x32xf32>
    %109 = arith.mulf %106, %91 : vector<2x32xf32>
    %110 = arith.mulf %105, %107 : vector<2x32xf32>
    %111 = arith.addf %109, %110 : vector<2x32xf32>
    %112 = math.tanh %111 : vector<2x32xf32>
    %113 = arith.mulf %108, %112 : vector<2x32xf32>
    %c8_39 = arith.constant 8 : index
    %c0_40 = arith.constant 0 : index
    %114 = vector.load %arg25[%c8_39, %c0_40] : memref<16x32xf32, #tpu.memory_space<vmem>>, vector<2x32xf32>
    tpu.vector_store %arg25[%c8_39, %c0_40], %113 {strides = array<i32>} : memref<16x32xf32, #tpu.memory_space<vmem>>, vector<2x32xf32>,
    %c10 = arith.constant 10 : index
    %c0_41 = arith.constant 0 : index
    %115 = vector.load %arg27[%c10, %c0_41] : memref<16x128xf32, #tpu.memory_space<vmem>>, vector<2x128xf32>
    %cst_42 = arith.constant dense<0.000000e+00> : vector<2x128xf32>
    %116 = tpu.matmul %113, %12, %cst_42 {dimension_numbers = #tpu.dot_dimension_numbers<[1], [0], [0], [1], [0, 0, 1, 1], [], []>} : vector<2x32xf32>, vector<32x128xf32>, vector<2x128xf32> -> vector<2x128xf32>
    %117 = arith.addf %115, %116 : vector<2x128xf32>
    %118 = arith.addf %117, %11 : vector<2x128xf32>
    %119 = arith.negf %118 : vector<2x128xf32>
    %120 = math.exp %119 : vector<2x128xf32>
    %cst_43 = arith.constant 1.000000e+00 : f32
    %121 = vector.broadcast %cst_43 : f32 to vector<2x128xf32>
    %122 = arith.addf %121, %120 : vector<2x128xf32>
    %123 = arith.divf %121, %122 : vector<2x128xf32>
    %124 = math.tanh %118 : vector<2x128xf32>
    %125 = vector.extract_strided_slice %123 {offsets = [0, 0], sizes = [2, 32], strides = [1, 1]} : vector<2x128xf32> to vector<2x32xf32>
    %126 = vector.extract_strided_slice %123 {offsets = [0, 32], sizes = [2, 32], strides = [1, 1]} : vector<2x128xf32> to vector<2x32xf32>
    %127 = vector.extract_strided_slice %124 {offsets = [0, 64], sizes = [2, 32], strides = [1, 1]} : vector<2x128xf32> to vector<2x32xf32>
    %128 = vector.extract_strided_slice %123 {offsets = [0, 96], sizes = [2, 32], strides = [1, 1]} : vector<2x128xf32> to vector<2x32xf32>
    %129 = arith.mulf %126, %111 : vector<2x32xf32>
    %130 = arith.mulf %125, %127 : vector<2x32xf32>
    %131 = arith.addf %129, %130 : vector<2x32xf32>
    %132 = math.tanh %131 : vector<2x32xf32>
    %133 = arith.mulf %128, %132 : vector<2x32xf32>
    %c10_44 = arith.constant 10 : index
    %c0_45 = arith.constant 0 : index
    %134 = vector.load %arg25[%c10_44, %c0_45] : memref<16x32xf32, #tpu.memory_space<vmem>>, vector<2x32xf32>
    tpu.vector_store %arg25[%c10_44, %c0_45], %133 {strides = array<i32>} : memref<16x32xf32, #tpu.memory_space<vmem>>, vector<2x32xf32>,
    %c12 = arith.constant 12 : index
    %c0_46 = arith.constant 0 : index
    %135 = vector.load %arg27[%c12, %c0_46] : memref<16x128xf32, #tpu.memory_space<vmem>>, vector<2x128xf32>
    %cst_47 = arith.constant dense<0.000000e+00> : vector<2x128xf32>
    %136 = tpu.matmul %133, %12, %cst_47 {dimension_numbers = #tpu.dot_dimension_numbers<[1], [0], [0], [1], [0, 0, 1, 1], [], []>} : vector<2x32xf32>, vector<32x128xf32>, vector<2x128xf32> -> vector<2x128xf32>
    %137 = arith.addf %135, %136 : vector<2x128xf32>
    %138 = arith.addf %137, %11 : vector<2x128xf32>
    %139 = arith.negf %138 : vector<2x128xf32>
    %140 = math.exp %139 : vector<2x128xf32>
    %cst_48 = arith.constant 1.000000e+00 : f32
    %141 = vector.broadcast %cst_48 : f32 to vector<2x128xf32>
    %142 = arith.addf %141, %140 : vector<2x128xf32>
    %143 = arith.divf %141, %142 : vector<2x128xf32>
    %144 = math.tanh %138 : vector<2x128xf32>
    %145 = vector.extract_strided_slice %143 {offsets = [0, 0], sizes = [2, 32], strides = [1, 1]} : vector<2x128xf32> to vector<2x32xf32>
    %146 = vector.extract_strided_slice %143 {offsets = [0, 32], sizes = [2, 32], strides = [1, 1]} : vector<2x128xf32> to vector<2x32xf32>
    %147 = vector.extract_strided_slice %144 {offsets = [0, 64], sizes = [2, 32], strides = [1, 1]} : vector<2x128xf32> to vector<2x32xf32>
    %148 = vector.extract_strided_slice %143 {offsets = [0, 96], sizes = [2, 32], strides = [1, 1]} : vector<2x128xf32> to vector<2x32xf32>
    %149 = arith.mulf %146, %131 : vector<2x32xf32>
    %150 = arith.mulf %145, %147 : vector<2x32xf32>
    %151 = arith.addf %149, %150 : vector<2x32xf32>
    %152 = math.tanh %151 : vector<2x32xf32>
    %153 = arith.mulf %148, %152 : vector<2x32xf32>
    %c12_49 = arith.constant 12 : index
    %c0_50 = arith.constant 0 : index
    %154 = vector.load %arg25[%c12_49, %c0_50] : memref<16x32xf32, #tpu.memory_space<vmem>>, vector<2x32xf32>
    tpu.vector_store %arg25[%c12_49, %c0_50], %153 {strides = array<i32>} : memref<16x32xf32, #tpu.memory_space<vmem>>, vector<2x32xf32>,
    %c14 = arith.constant 14 : index
    %c0_51 = arith.constant 0 : index
    %155 = vector.load %arg27[%c14, %c0_51] : memref<16x128xf32, #tpu.memory_space<vmem>>, vector<2x128xf32>
    %cst_52 = arith.constant dense<0.000000e+00> : vector<2x128xf32>
    %156 = tpu.matmul %153, %12, %cst_52 {dimension_numbers = #tpu.dot_dimension_numbers<[1], [0], [0], [1], [0, 0, 1, 1], [], []>} : vector<2x32xf32>, vector<32x128xf32>, vector<2x128xf32> -> vector<2x128xf32>
    %157 = arith.addf %155, %156 : vector<2x128xf32>
    %158 = arith.addf %157, %11 : vector<2x128xf32>
    %159 = arith.negf %158 : vector<2x128xf32>
    %160 = math.exp %159 : vector<2x128xf32>
    %cst_53 = arith.constant 1.000000e+00 : f32
    %161 = vector.broadcast %cst_53 : f32 to vector<2x128xf32>
    %162 = arith.addf %161, %160 : vector<2x128xf32>
    %163 = arith.divf %161, %162 : vector<2x128xf32>
    %164 = math.tanh %158 : vector<2x128xf32>
    %165 = vector.extract_strided_slice %163 {offsets = [0, 0], sizes = [2, 32], strides = [1, 1]} : vector<2x128xf32> to vector<2x32xf32>
    %166 = vector.extract_strided_slice %163 {offsets = [0, 32], sizes = [2, 32], strides = [1, 1]} : vector<2x128xf32> to vector<2x32xf32>
    %167 = vector.extract_strided_slice %164 {offsets = [0, 64], sizes = [2, 32], strides = [1, 1]} : vector<2x128xf32> to vector<2x32xf32>
    %168 = vector.extract_strided_slice %163 {offsets = [0, 96], sizes = [2, 32], strides = [1, 1]} : vector<2x128xf32> to vector<2x32xf32>
    %169 = arith.mulf %166, %151 : vector<2x32xf32>
    %170 = arith.mulf %165, %167 : vector<2x32xf32>
    %171 = arith.addf %169, %170 : vector<2x32xf32>
    %172 = math.tanh %171 : vector<2x32xf32>
    %173 = arith.mulf %168, %172 : vector<2x32xf32>
    %c14_54 = arith.constant 14 : index
    %c0_55 = arith.constant 0 : index
    %174 = vector.load %arg25[%c14_54, %c0_55] : memref<16x32xf32, #tpu.memory_space<vmem>>, vector<2x32xf32>
    tpu.vector_store %arg25[%c14_54, %c0_55], %173 {strides = array<i32>} : memref<16x32xf32, #tpu.memory_space<vmem>>, vector<2x32xf32>,
    %c0_56 = arith.constant 0 : index
    %c0_57 = arith.constant 0 : index
    %175 = vector.load %arg25[%c0_56, %c0_57] : memref<16x32xf32, #tpu.memory_space<vmem>>, vector<16x32xf32>
    %c0_58 = arith.constant 0 : index
    %c0_59 = arith.constant 0 : index
    %176 = vector.load %arg6[%c0_58, %c0_59] : memref<32x128xf32, #tpu.memory_space<vmem>>, vector<32x128xf32>
    %cst_60 = arith.constant dense<0.000000e+00> : vector<16x128xf32>
    %177 = tpu.matmul %175, %176, %cst_60 {dimension_numbers = #tpu.dot_dimension_numbers<[1], [0], [0], [1], [0, 0, 1, 1], [], []>} : vector<16x32xf32>, vector<32x128xf32>, vector<16x128xf32> -> vector<16x128xf32>
    %c0_61 = arith.constant 0 : index
    %c0_62 = arith.constant 0 : index
    %178 = vector.load %arg8[%c0_61, %c0_62] : memref<1x128xf32, #tpu.memory_space<vmem>>, vector<1x128xf32>
    %179 = vector.broadcast %178 : vector<1x128xf32> to vector<16x128xf32>
    %180 = arith.addf %177, %179 : vector<16x128xf32>
    %c0_63 = arith.constant 0 : index
    %c0_64 = arith.constant 0 : index
    %181 = vector.load %arg27[%c0_63, %c0_64] : memref<16x128xf32, #tpu.memory_space<vmem>>, vector<16x128xf32>
    tpu.vector_store %arg27[%c0_63, %c0_64], %180 {strides = array<i32>} : memref<16x128xf32, #tpu.memory_space<vmem>>, vector<16x128xf32>,
    %c0_65 = arith.constant 0 : index
    %c0_66 = arith.constant 0 : index
    %182 = vector.load %arg7[%c0_65, %c0_66] : memref<32x128xf32, #tpu.memory_space<vmem>>, vector<32x128xf32>
    %cst_67 = arith.constant 0.000000e+00 : f32
    %183 = vector.broadcast %cst_67 : f32 to vector<2x32xf32>
    %cst_68 = arith.constant 0.000000e+00 : f32
    %184 = vector.broadcast %cst_68 : f32 to vector<2x32xf32>
    %c0_69 = arith.constant 0 : index
    %c0_70 = arith.constant 0 : index
    %185 = vector.load %arg27[%c0_69, %c0_70] : memref<16x128xf32, #tpu.memory_space<vmem>>, vector<2x128xf32>
    %cst_71 = arith.constant dense<0.000000e+00> : vector<2x128xf32>
    %186 = tpu.matmul %183, %182, %cst_71 {dimension_numbers = #tpu.dot_dimension_numbers<[1], [0], [0], [1], [0, 0, 1, 1], [], []>} : vector<2x32xf32>, vector<32x128xf32>, vector<2x128xf32> -> vector<2x128xf32>
    %187 = arith.addf %185, %186 : vector<2x128xf32>
    %188 = arith.negf %187 : vector<2x128xf32>
    %189 = math.exp %188 : vector<2x128xf32>
    %cst_72 = arith.constant 1.000000e+00 : f32
    %190 = vector.broadcast %cst_72 : f32 to vector<2x128xf32>
    %191 = arith.addf %190, %189 : vector<2x128xf32>
    %192 = arith.divf %190, %191 : vector<2x128xf32>
    %193 = math.tanh %187 : vector<2x128xf32>
    %194 = vector.extract_strided_slice %192 {offsets = [0, 0], sizes = [2, 32], strides = [1, 1]} : vector<2x128xf32> to vector<2x32xf32>
    %195 = vector.extract_strided_slice %192 {offsets = [0, 32], sizes = [2, 32], strides = [1, 1]} : vector<2x128xf32> to vector<2x32xf32>
    %196 = vector.extract_strided_slice %193 {offsets = [0, 64], sizes = [2, 32], strides = [1, 1]} : vector<2x128xf32> to vector<2x32xf32>
    %197 = vector.extract_strided_slice %192 {offsets = [0, 96], sizes = [2, 32], strides = [1, 1]} : vector<2x128xf32> to vector<2x32xf32>
    %198 = arith.mulf %195, %184 : vector<2x32xf32>
    %199 = arith.mulf %194, %196 : vector<2x32xf32>
    %200 = arith.addf %198, %199 : vector<2x32xf32>
    %201 = math.tanh %200 : vector<2x32xf32>
    %202 = arith.mulf %197, %201 : vector<2x32xf32>
    %c0_73 = arith.constant 0 : index
    %c0_74 = arith.constant 0 : index
    %203 = vector.load %arg26[%c0_73, %c0_74] : memref<16x32xf32, #tpu.memory_space<vmem>>, vector<2x32xf32>
    tpu.vector_store %arg26[%c0_73, %c0_74], %202 {strides = array<i32>} : memref<16x32xf32, #tpu.memory_space<vmem>>, vector<2x32xf32>,
    %c2_75 = arith.constant 2 : index
    %c0_76 = arith.constant 0 : index
    %204 = vector.load %arg27[%c2_75, %c0_76] : memref<16x128xf32, #tpu.memory_space<vmem>>, vector<2x128xf32>
    %cst_77 = arith.constant dense<0.000000e+00> : vector<2x128xf32>
    %205 = tpu.matmul %202, %182, %cst_77 {dimension_numbers = #tpu.dot_dimension_numbers<[1], [0], [0], [1], [0, 0, 1, 1], [], []>} : vector<2x32xf32>, vector<32x128xf32>, vector<2x128xf32> -> vector<2x128xf32>
    %206 = arith.addf %204, %205 : vector<2x128xf32>
    %207 = arith.negf %206 : vector<2x128xf32>
    %208 = math.exp %207 : vector<2x128xf32>
    %cst_78 = arith.constant 1.000000e+00 : f32
    %209 = vector.broadcast %cst_78 : f32 to vector<2x128xf32>
    %210 = arith.addf %209, %208 : vector<2x128xf32>
    %211 = arith.divf %209, %210 : vector<2x128xf32>
    %212 = math.tanh %206 : vector<2x128xf32>
    %213 = vector.extract_strided_slice %211 {offsets = [0, 0], sizes = [2, 32], strides = [1, 1]} : vector<2x128xf32> to vector<2x32xf32>
    %214 = vector.extract_strided_slice %211 {offsets = [0, 32], sizes = [2, 32], strides = [1, 1]} : vector<2x128xf32> to vector<2x32xf32>
    %215 = vector.extract_strided_slice %212 {offsets = [0, 64], sizes = [2, 32], strides = [1, 1]} : vector<2x128xf32> to vector<2x32xf32>
    %216 = vector.extract_strided_slice %211 {offsets = [0, 96], sizes = [2, 32], strides = [1, 1]} : vector<2x128xf32> to vector<2x32xf32>
    %217 = arith.mulf %214, %200 : vector<2x32xf32>
    %218 = arith.mulf %213, %215 : vector<2x32xf32>
    %219 = arith.addf %217, %218 : vector<2x32xf32>
    %220 = math.tanh %219 : vector<2x32xf32>
    %221 = arith.mulf %216, %220 : vector<2x32xf32>
    %c2_79 = arith.constant 2 : index
    %c0_80 = arith.constant 0 : index
    %222 = vector.load %arg26[%c2_79, %c0_80] : memref<16x32xf32, #tpu.memory_space<vmem>>, vector<2x32xf32>
    tpu.vector_store %arg26[%c2_79, %c0_80], %221 {strides = array<i32>} : memref<16x32xf32, #tpu.memory_space<vmem>>, vector<2x32xf32>,
    %c4_81 = arith.constant 4 : index
    %c0_82 = arith.constant 0 : index
    %223 = vector.load %arg27[%c4_81, %c0_82] : memref<16x128xf32, #tpu.memory_space<vmem>>, vector<2x128xf32>
    %cst_83 = arith.constant dense<0.000000e+00> : vector<2x128xf32>
    %224 = tpu.matmul %221, %182, %cst_83 {dimension_numbers = #tpu.dot_dimension_numbers<[1], [0], [0], [1], [0, 0, 1, 1], [], []>} : vector<2x32xf32>, vector<32x128xf32>, vector<2x128xf32> -> vector<2x128xf32>
    %225 = arith.addf %223, %224 : vector<2x128xf32>
    %226 = arith.negf %225 : vector<2x128xf32>
    %227 = math.exp %226 : vector<2x128xf32>
    %cst_84 = arith.constant 1.000000e+00 : f32
    %228 = vector.broadcast %cst_84 : f32 to vector<2x128xf32>
    %229 = arith.addf %228, %227 : vector<2x128xf32>
    %230 = arith.divf %228, %229 : vector<2x128xf32>
    %231 = math.tanh %225 : vector<2x128xf32>
    %232 = vector.extract_strided_slice %230 {offsets = [0, 0], sizes = [2, 32], strides = [1, 1]} : vector<2x128xf32> to vector<2x32xf32>
    %233 = vector.extract_strided_slice %230 {offsets = [0, 32], sizes = [2, 32], strides = [1, 1]} : vector<2x128xf32> to vector<2x32xf32>
    %234 = vector.extract_strided_slice %231 {offsets = [0, 64], sizes = [2, 32], strides = [1, 1]} : vector<2x128xf32> to vector<2x32xf32>
    %235 = vector.extract_strided_slice %230 {offsets = [0, 96], sizes = [2, 32], strides = [1, 1]} : vector<2x128xf32> to vector<2x32xf32>
    %236 = arith.mulf %233, %219 : vector<2x32xf32>
    %237 = arith.mulf %232, %234 : vector<2x32xf32>
    %238 = arith.addf %236, %237 : vector<2x32xf32>
    %239 = math.tanh %238 : vector<2x32xf32>
    %240 = arith.mulf %235, %239 : vector<2x32xf32>
    %c4_85 = arith.constant 4 : index
    %c0_86 = arith.constant 0 : index
    %241 = vector.load %arg26[%c4_85, %c0_86] : memref<16x32xf32, #tpu.memory_space<vmem>>, vector<2x32xf32>
    tpu.vector_store %arg26[%c4_85, %c0_86], %240 {strides = array<i32>} : memref<16x32xf32, #tpu.memory_space<vmem>>, vector<2x32xf32>,
    %c6_87 = arith.constant 6 : index
    %c0_88 = arith.constant 0 : index
    %242 = vector.load %arg27[%c6_87, %c0_88] : memref<16x128xf32, #tpu.memory_space<vmem>>, vector<2x128xf32>
    %cst_89 = arith.constant dense<0.000000e+00> : vector<2x128xf32>
    %243 = tpu.matmul %240, %182, %cst_89 {dimension_numbers = #tpu.dot_dimension_numbers<[1], [0], [0], [1], [0, 0, 1, 1], [], []>} : vector<2x32xf32>, vector<32x128xf32>, vector<2x128xf32> -> vector<2x128xf32>
    %244 = arith.addf %242, %243 : vector<2x128xf32>
    %245 = arith.negf %244 : vector<2x128xf32>
    %246 = math.exp %245 : vector<2x128xf32>
    %cst_90 = arith.constant 1.000000e+00 : f32
    %247 = vector.broadcast %cst_90 : f32 to vector<2x128xf32>
    %248 = arith.addf %247, %246 : vector<2x128xf32>
    %249 = arith.divf %247, %248 : vector<2x128xf32>
    %250 = math.tanh %244 : vector<2x128xf32>
    %251 = vector.extract_strided_slice %249 {offsets = [0, 0], sizes = [2, 32], strides = [1, 1]} : vector<2x128xf32> to vector<2x32xf32>
    %252 = vector.extract_strided_slice %249 {offsets = [0, 32], sizes = [2, 32], strides = [1, 1]} : vector<2x128xf32> to vector<2x32xf32>
    %253 = vector.extract_strided_slice %250 {offsets = [0, 64], sizes = [2, 32], strides = [1, 1]} : vector<2x128xf32> to vector<2x32xf32>
    %254 = vector.extract_strided_slice %249 {offsets = [0, 96], sizes = [2, 32], strides = [1, 1]} : vector<2x128xf32> to vector<2x32xf32>
    %255 = arith.mulf %252, %238 : vector<2x32xf32>
    %256 = arith.mulf %251, %253 : vector<2x32xf32>
    %257 = arith.addf %255, %256 : vector<2x32xf32>
    %258 = math.tanh %257 : vector<2x32xf32>
    %259 = arith.mulf %254, %258 : vector<2x32xf32>
    %c6_91 = arith.constant 6 : index
    %c0_92 = arith.constant 0 : index
    %260 = vector.load %arg26[%c6_91, %c0_92] : memref<16x32xf32, #tpu.memory_space<vmem>>, vector<2x32xf32>
    tpu.vector_store %arg26[%c6_91, %c0_92], %259 {strides = array<i32>} : memref<16x32xf32, #tpu.memory_space<vmem>>, vector<2x32xf32>,
    %c8_93 = arith.constant 8 : index
    %c0_94 = arith.constant 0 : index
    %261 = vector.load %arg27[%c8_93, %c0_94] : memref<16x128xf32, #tpu.memory_space<vmem>>, vector<2x128xf32>
    %cst_95 = arith.constant dense<0.000000e+00> : vector<2x128xf32>
    %262 = tpu.matmul %259, %182, %cst_95 {dimension_numbers = #tpu.dot_dimension_numbers<[1], [0], [0], [1], [0, 0, 1, 1], [], []>} : vector<2x32xf32>, vector<32x128xf32>, vector<2x128xf32> -> vector<2x128xf32>
    %263 = arith.addf %261, %262 : vector<2x128xf32>
    %264 = arith.negf %263 : vector<2x128xf32>
    %265 = math.exp %264 : vector<2x128xf32>
    %cst_96 = arith.constant 1.000000e+00 : f32
    %266 = vector.broadcast %cst_96 : f32 to vector<2x128xf32>
    %267 = arith.addf %266, %265 : vector<2x128xf32>
    %268 = arith.divf %266, %267 : vector<2x128xf32>
    %269 = math.tanh %263 : vector<2x128xf32>
    %270 = vector.extract_strided_slice %268 {offsets = [0, 0], sizes = [2, 32], strides = [1, 1]} : vector<2x128xf32> to vector<2x32xf32>
    %271 = vector.extract_strided_slice %268 {offsets = [0, 32], sizes = [2, 32], strides = [1, 1]} : vector<2x128xf32> to vector<2x32xf32>
    %272 = vector.extract_strided_slice %269 {offsets = [0, 64], sizes = [2, 32], strides = [1, 1]} : vector<2x128xf32> to vector<2x32xf32>
    %273 = vector.extract_strided_slice %268 {offsets = [0, 96], sizes = [2, 32], strides = [1, 1]} : vector<2x128xf32> to vector<2x32xf32>
    %274 = arith.mulf %271, %257 : vector<2x32xf32>
    %275 = arith.mulf %270, %272 : vector<2x32xf32>
    %276 = arith.addf %274, %275 : vector<2x32xf32>
    %277 = math.tanh %276 : vector<2x32xf32>
    %278 = arith.mulf %273, %277 : vector<2x32xf32>
    %c8_97 = arith.constant 8 : index
    %c0_98 = arith.constant 0 : index
    %279 = vector.load %arg26[%c8_97, %c0_98] : memref<16x32xf32, #tpu.memory_space<vmem>>, vector<2x32xf32>
    tpu.vector_store %arg26[%c8_97, %c0_98], %278 {strides = array<i32>} : memref<16x32xf32, #tpu.memory_space<vmem>>, vector<2x32xf32>,
    %c10_99 = arith.constant 10 : index
    %c0_100 = arith.constant 0 : index
    %280 = vector.load %arg27[%c10_99, %c0_100] : memref<16x128xf32, #tpu.memory_space<vmem>>, vector<2x128xf32>
    %cst_101 = arith.constant dense<0.000000e+00> : vector<2x128xf32>
    %281 = tpu.matmul %278, %182, %cst_101 {dimension_numbers = #tpu.dot_dimension_numbers<[1], [0], [0], [1], [0, 0, 1, 1], [], []>} : vector<2x32xf32>, vector<32x128xf32>, vector<2x128xf32> -> vector<2x128xf32>
    %282 = arith.addf %280, %281 : vector<2x128xf32>
    %283 = arith.negf %282 : vector<2x128xf32>
    %284 = math.exp %283 : vector<2x128xf32>
    %cst_102 = arith.constant 1.000000e+00 : f32
    %285 = vector.broadcast %cst_102 : f32 to vector<2x128xf32>
    %286 = arith.addf %285, %284 : vector<2x128xf32>
    %287 = arith.divf %285, %286 : vector<2x128xf32>
    %288 = math.tanh %282 : vector<2x128xf32>
    %289 = vector.extract_strided_slice %287 {offsets = [0, 0], sizes = [2, 32], strides = [1, 1]} : vector<2x128xf32> to vector<2x32xf32>
    %290 = vector.extract_strided_slice %287 {offsets = [0, 32], sizes = [2, 32], strides = [1, 1]} : vector<2x128xf32> to vector<2x32xf32>
    %291 = vector.extract_strided_slice %288 {offsets = [0, 64], sizes = [2, 32], strides = [1, 1]} : vector<2x128xf32> to vector<2x32xf32>
    %292 = vector.extract_strided_slice %287 {offsets = [0, 96], sizes = [2, 32], strides = [1, 1]} : vector<2x128xf32> to vector<2x32xf32>
    %293 = arith.mulf %290, %276 : vector<2x32xf32>
    %294 = arith.mulf %289, %291 : vector<2x32xf32>
    %295 = arith.addf %293, %294 : vector<2x32xf32>
    %296 = math.tanh %295 : vector<2x32xf32>
    %297 = arith.mulf %292, %296 : vector<2x32xf32>
    %c10_103 = arith.constant 10 : index
    %c0_104 = arith.constant 0 : index
    %298 = vector.load %arg26[%c10_103, %c0_104] : memref<16x32xf32, #tpu.memory_space<vmem>>, vector<2x32xf32>
    tpu.vector_store %arg26[%c10_103, %c0_104], %297 {strides = array<i32>} : memref<16x32xf32, #tpu.memory_space<vmem>>, vector<2x32xf32>,
    %c12_105 = arith.constant 12 : index
    %c0_106 = arith.constant 0 : index
    %299 = vector.load %arg27[%c12_105, %c0_106] : memref<16x128xf32, #tpu.memory_space<vmem>>, vector<2x128xf32>
    %cst_107 = arith.constant dense<0.000000e+00> : vector<2x128xf32>
    %300 = tpu.matmul %297, %182, %cst_107 {dimension_numbers = #tpu.dot_dimension_numbers<[1], [0], [0], [1], [0, 0, 1, 1], [], []>} : vector<2x32xf32>, vector<32x128xf32>, vector<2x128xf32> -> vector<2x128xf32>
    %301 = arith.addf %299, %300 : vector<2x128xf32>
    %302 = arith.negf %301 : vector<2x128xf32>
    %303 = math.exp %302 : vector<2x128xf32>
    %cst_108 = arith.constant 1.000000e+00 : f32
    %304 = vector.broadcast %cst_108 : f32 to vector<2x128xf32>
    %305 = arith.addf %304, %303 : vector<2x128xf32>
    %306 = arith.divf %304, %305 : vector<2x128xf32>
    %307 = math.tanh %301 : vector<2x128xf32>
    %308 = vector.extract_strided_slice %306 {offsets = [0, 0], sizes = [2, 32], strides = [1, 1]} : vector<2x128xf32> to vector<2x32xf32>
    %309 = vector.extract_strided_slice %306 {offsets = [0, 32], sizes = [2, 32], strides = [1, 1]} : vector<2x128xf32> to vector<2x32xf32>
    %310 = vector.extract_strided_slice %307 {offsets = [0, 64], sizes = [2, 32], strides = [1, 1]} : vector<2x128xf32> to vector<2x32xf32>
    %311 = vector.extract_strided_slice %306 {offsets = [0, 96], sizes = [2, 32], strides = [1, 1]} : vector<2x128xf32> to vector<2x32xf32>
    %312 = arith.mulf %309, %295 : vector<2x32xf32>
    %313 = arith.mulf %308, %310 : vector<2x32xf32>
    %314 = arith.addf %312, %313 : vector<2x32xf32>
    %315 = math.tanh %314 : vector<2x32xf32>
    %316 = arith.mulf %311, %315 : vector<2x32xf32>
    %c12_109 = arith.constant 12 : index
    %c0_110 = arith.constant 0 : index
    %317 = vector.load %arg26[%c12_109, %c0_110] : memref<16x32xf32, #tpu.memory_space<vmem>>, vector<2x32xf32>
    tpu.vector_store %arg26[%c12_109, %c0_110], %316 {strides = array<i32>} : memref<16x32xf32, #tpu.memory_space<vmem>>, vector<2x32xf32>,
    %c14_111 = arith.constant 14 : index
    %c0_112 = arith.constant 0 : index
    %318 = vector.load %arg27[%c14_111, %c0_112] : memref<16x128xf32, #tpu.memory_space<vmem>>, vector<2x128xf32>
    %cst_113 = arith.constant dense<0.000000e+00> : vector<2x128xf32>
    %319 = tpu.matmul %316, %182, %cst_113 {dimension_numbers = #tpu.dot_dimension_numbers<[1], [0], [0], [1], [0, 0, 1, 1], [], []>} : vector<2x32xf32>, vector<32x128xf32>, vector<2x128xf32> -> vector<2x128xf32>
    %320 = arith.addf %318, %319 : vector<2x128xf32>
    %321 = arith.negf %320 : vector<2x128xf32>
    %322 = math.exp %321 : vector<2x128xf32>
    %cst_114 = arith.constant 1.000000e+00 : f32
    %323 = vector.broadcast %cst_114 : f32 to vector<2x128xf32>
    %324 = arith.addf %323, %322 : vector<2x128xf32>
    %325 = arith.divf %323, %324 : vector<2x128xf32>
    %326 = math.tanh %320 : vector<2x128xf32>
    %327 = vector.extract_strided_slice %325 {offsets = [0, 0], sizes = [2, 32], strides = [1, 1]} : vector<2x128xf32> to vector<2x32xf32>
    %328 = vector.extract_strided_slice %325 {offsets = [0, 32], sizes = [2, 32], strides = [1, 1]} : vector<2x128xf32> to vector<2x32xf32>
    %329 = vector.extract_strided_slice %326 {offsets = [0, 64], sizes = [2, 32], strides = [1, 1]} : vector<2x128xf32> to vector<2x32xf32>
    %330 = vector.extract_strided_slice %325 {offsets = [0, 96], sizes = [2, 32], strides = [1, 1]} : vector<2x128xf32> to vector<2x32xf32>
    %331 = arith.mulf %328, %314 : vector<2x32xf32>
    %332 = arith.mulf %327, %329 : vector<2x32xf32>
    %333 = arith.addf %331, %332 : vector<2x32xf32>
    %334 = math.tanh %333 : vector<2x32xf32>
    %335 = arith.mulf %330, %334 : vector<2x32xf32>
    %c14_115 = arith.constant 14 : index
    %c0_116 = arith.constant 0 : index
    %336 = vector.load %arg26[%c14_115, %c0_116] : memref<16x32xf32, #tpu.memory_space<vmem>>, vector<2x32xf32>
    tpu.vector_store %arg26[%c14_115, %c0_116], %335 {strides = array<i32>} : memref<16x32xf32, #tpu.memory_space<vmem>>, vector<2x32xf32>,
    %c0_117 = arith.constant 0 : index
    %c0_118 = arith.constant 0 : index
    %337 = vector.load %arg26[%c0_117, %c0_118] : memref<16x32xf32, #tpu.memory_space<vmem>>, vector<16x32xf32>
    %c0_119 = arith.constant 0 : index
    %c0_120 = arith.constant 0 : index
    %338 = vector.load %arg9[%c0_119, %c0_120] : memref<32x4xf32, #tpu.memory_space<vmem>>, vector<32x4xf32>
    %cst_121 = arith.constant dense<0.000000e+00> : vector<16x4xf32>
    %339 = tpu.matmul %337, %338, %cst_121 {dimension_numbers = #tpu.dot_dimension_numbers<[1], [0], [0], [1], [0, 0, 1, 1], [], []>} : vector<16x32xf32>, vector<32x4xf32>, vector<16x4xf32> -> vector<16x4xf32>
    %c0_122 = arith.constant 0 : index
    %c0_123 = arith.constant 0 : index
    %340 = vector.load %arg10[%c0_122, %c0_123] : memref<1x4xf32, #tpu.memory_space<vmem>>, vector<1x4xf32>
    %341 = vector.broadcast %340 : vector<1x4xf32> to vector<16x4xf32>
    %342 = arith.addf %339, %341 : vector<16x4xf32>
    %cst_124 = arith.constant 0.000000e+00 : f32
    %343 = vector.broadcast %cst_124 : f32 to vector<16x4xf32>
    %344 = arith.maximumf %342, %343 : vector<16x4xf32>
    %c0_125 = arith.constant 0 : index
    %c0_126 = arith.constant 0 : index
    %345 = vector.load %arg28[%c0_125, %c0_126] : memref<16x4xf32, #tpu.memory_space<vmem>>, vector<16x4xf32>
    tpu.vector_store %arg28[%c0_125, %c0_126], %344 {strides = array<i32>} : memref<16x4xf32, #tpu.memory_space<vmem>>, vector<16x4xf32>,
    %c0_127 = arith.constant 0 : index
    %c0_128 = arith.constant 0 : index
    %346 = vector.load %arg28[%c0_127, %c0_128] : memref<16x4xf32, #tpu.memory_space<vmem>>, vector<2x4xf32>
    %c2_129 = arith.constant 2 : index
    %c0_130 = arith.constant 0 : index
    %347 = vector.load %arg28[%c2_129, %c0_130] : memref<16x4xf32, #tpu.memory_space<vmem>>, vector<2x4xf32>
    %c4_131 = arith.constant 4 : index
    %c0_132 = arith.constant 0 : index
    %348 = vector.load %arg28[%c4_131, %c0_132] : memref<16x4xf32, #tpu.memory_space<vmem>>, vector<2x4xf32>
    %c6_133 = arith.constant 6 : index
    %c0_134 = arith.constant 0 : index
    %349 = vector.load %arg28[%c6_133, %c0_134] : memref<16x4xf32, #tpu.memory_space<vmem>>, vector<2x4xf32>
    %c8_135 = arith.constant 8 : index
    %c0_136 = arith.constant 0 : index
    %350 = vector.load %arg28[%c8_135, %c0_136] : memref<16x4xf32, #tpu.memory_space<vmem>>, vector<2x4xf32>
    %c10_137 = arith.constant 10 : index
    %c0_138 = arith.constant 0 : index
    %351 = vector.load %arg28[%c10_137, %c0_138] : memref<16x4xf32, #tpu.memory_space<vmem>>, vector<2x4xf32>
    %c12_139 = arith.constant 12 : index
    %c0_140 = arith.constant 0 : index
    %352 = vector.load %arg28[%c12_139, %c0_140] : memref<16x4xf32, #tpu.memory_space<vmem>>, vector<2x4xf32>
    %c14_141 = arith.constant 14 : index
    %c0_142 = arith.constant 0 : index
    %353 = vector.load %arg28[%c14_141, %c0_142] : memref<16x4xf32, #tpu.memory_space<vmem>>, vector<2x4xf32>
    %354 = tpu.concatenate %346, %347, %348, %349, %350, %351, %352, %353 in 1 : vector<2x4xf32>, vector<2x4xf32>, vector<2x4xf32>, vector<2x4xf32>, vector<2x4xf32>, vector<2x4xf32>, vector<2x4xf32>, vector<2x4xf32> -> vector<2x32xf32>
    %c0_143 = arith.constant 0 : index
    %c0_144 = arith.constant 0 : index
    %355 = vector.load %arg11[%c0_143, %c0_144] : memref<32x32xf32, #tpu.memory_space<vmem>>, vector<32x32xf32>
    %cst_145 = arith.constant dense<0.000000e+00> : vector<2x32xf32>
    %356 = tpu.matmul %354, %355, %cst_145 {dimension_numbers = #tpu.dot_dimension_numbers<[1], [0], [0], [1], [0, 0, 1, 1], [], []>} : vector<2x32xf32>, vector<32x32xf32>, vector<2x32xf32> -> vector<2x32xf32>
    %c0_146 = arith.constant 0 : index
    %c0_147 = arith.constant 0 : index
    %357 = vector.load %arg12[%c0_146, %c0_147] : memref<1x32xf32, #tpu.memory_space<vmem>>, vector<1x32xf32>
    %358 = vector.broadcast %0 : vector<2x1xf32> to vector<2x32xf32>
    %359 = vector.broadcast %357 : vector<1x32xf32> to vector<2x32xf32>
    %360 = arith.mulf %358, %359 : vector<2x32xf32>
    %361 = arith.addf %356, %360 : vector<2x32xf32>
    %c0_148 = arith.constant 0 : index
    %c0_149 = arith.constant 0 : index
    %362 = vector.load %arg13[%c0_148, %c0_149] : memref<1x32xf32, #tpu.memory_space<vmem>>, vector<1x32xf32>
    %363 = vector.broadcast %362 : vector<1x32xf32> to vector<2x32xf32>
    %364 = arith.addf %361, %363 : vector<2x32xf32>
    %365 = vector.extract_strided_slice %364 {offsets = [0, 0], sizes = [2, 4], strides = [1, 1]} : vector<2x32xf32> to vector<2x4xf32>
    %c0_150 = arith.constant 0 : index
    %c0_151 = arith.constant 0 : index
    %366 = vector.load %arg29[%c0_150, %c0_151] : memref<16x4xf32, #tpu.memory_space<vmem>>, vector<2x4xf32>
    tpu.vector_store %arg29[%c0_150, %c0_151], %365 {strides = array<i32>} : memref<16x4xf32, #tpu.memory_space<vmem>>, vector<2x4xf32>,
    %367 = vector.extract_strided_slice %364 {offsets = [0, 4], sizes = [2, 4], strides = [1, 1]} : vector<2x32xf32> to vector<2x4xf32>
    %c2_152 = arith.constant 2 : index
    %c0_153 = arith.constant 0 : index
    %368 = vector.load %arg29[%c2_152, %c0_153] : memref<16x4xf32, #tpu.memory_space<vmem>>, vector<2x4xf32>
    tpu.vector_store %arg29[%c2_152, %c0_153], %367 {strides = array<i32>} : memref<16x4xf32, #tpu.memory_space<vmem>>, vector<2x4xf32>,
    %369 = vector.extract_strided_slice %364 {offsets = [0, 8], sizes = [2, 4], strides = [1, 1]} : vector<2x32xf32> to vector<2x4xf32>
    %c4_154 = arith.constant 4 : index
    %c0_155 = arith.constant 0 : index
    %370 = vector.load %arg29[%c4_154, %c0_155] : memref<16x4xf32, #tpu.memory_space<vmem>>, vector<2x4xf32>
    tpu.vector_store %arg29[%c4_154, %c0_155], %369 {strides = array<i32>} : memref<16x4xf32, #tpu.memory_space<vmem>>, vector<2x4xf32>,
    %371 = vector.extract_strided_slice %364 {offsets = [0, 12], sizes = [2, 4], strides = [1, 1]} : vector<2x32xf32> to vector<2x4xf32>
    %c6_156 = arith.constant 6 : index
    %c0_157 = arith.constant 0 : index
    %372 = vector.load %arg29[%c6_156, %c0_157] : memref<16x4xf32, #tpu.memory_space<vmem>>, vector<2x4xf32>
    tpu.vector_store %arg29[%c6_156, %c0_157], %371 {strides = array<i32>} : memref<16x4xf32, #tpu.memory_space<vmem>>, vector<2x4xf32>,
    %373 = vector.extract_strided_slice %364 {offsets = [0, 16], sizes = [2, 4], strides = [1, 1]} : vector<2x32xf32> to vector<2x4xf32>
    %c8_158 = arith.constant 8 : index
    %c0_159 = arith.constant 0 : index
    %374 = vector.load %arg29[%c8_158, %c0_159] : memref<16x4xf32, #tpu.memory_space<vmem>>, vector<2x4xf32>
    tpu.vector_store %arg29[%c8_158, %c0_159], %373 {strides = array<i32>} : memref<16x4xf32, #tpu.memory_space<vmem>>, vector<2x4xf32>,
    %375 = vector.extract_strided_slice %364 {offsets = [0, 20], sizes = [2, 4], strides = [1, 1]} : vector<2x32xf32> to vector<2x4xf32>
    %c10_160 = arith.constant 10 : index
    %c0_161 = arith.constant 0 : index
    %376 = vector.load %arg29[%c10_160, %c0_161] : memref<16x4xf32, #tpu.memory_space<vmem>>, vector<2x4xf32>
    tpu.vector_store %arg29[%c10_160, %c0_161], %375 {strides = array<i32>} : memref<16x4xf32, #tpu.memory_space<vmem>>, vector<2x4xf32>,
    %377 = vector.extract_strided_slice %364 {offsets = [0, 24], sizes = [2, 4], strides = [1, 1]} : vector<2x32xf32> to vector<2x4xf32>
    %c12_162 = arith.constant 12 : index
    %c0_163 = arith.constant 0 : index
    %378 = vector.load %arg29[%c12_162, %c0_163] : memref<16x4xf32, #tpu.memory_space<vmem>>, vector<2x4xf32>
    tpu.vector_store %arg29[%c12_162, %c0_163], %377 {strides = array<i32>} : memref<16x4xf32, #tpu.memory_space<vmem>>, vector<2x4xf32>,
    %379 = vector.extract_strided_slice %364 {offsets = [0, 28], sizes = [2, 4], strides = [1, 1]} : vector<2x32xf32> to vector<2x4xf32>
    %c14_164 = arith.constant 14 : index
    %c0_165 = arith.constant 0 : index
    %380 = vector.load %arg29[%c14_164, %c0_165] : memref<16x4xf32, #tpu.memory_space<vmem>>, vector<2x4xf32>
    tpu.vector_store %arg29[%c14_164, %c0_165], %379 {strides = array<i32>} : memref<16x4xf32, #tpu.memory_space<vmem>>, vector<2x4xf32>,
    %c0_166 = arith.constant 0 : index
    %c0_167 = arith.constant 0 : index
    %381 = vector.load %arg15[%c0_166, %c0_167] : memref<4x128xf32, #tpu.memory_space<vmem>>, vector<4x128xf32>
    %cst_168 = arith.constant dense<0.000000e+00> : vector<16x128xf32>
    %382 = tpu.matmul %1, %381, %cst_168 {dimension_numbers = #tpu.dot_dimension_numbers<[1], [0], [0], [1], [0, 0, 1, 1], [], []>} : vector<16x4xf32>, vector<4x128xf32>, vector<16x128xf32> -> vector<16x128xf32>
    %c0_169 = arith.constant 0 : index
    %c0_170 = arith.constant 0 : index
    %383 = vector.load %arg29[%c0_169, %c0_170] : memref<16x4xf32, #tpu.memory_space<vmem>>, vector<16x4xf32>
    %c0_171 = arith.constant 0 : index
    %c0_172 = arith.constant 0 : index
    %384 = vector.load %arg16[%c0_171, %c0_172] : memref<4x128xf32, #tpu.memory_space<vmem>>, vector<4x128xf32>
    %cst_173 = arith.constant dense<0.000000e+00> : vector<16x128xf32>
    %385 = tpu.matmul %383, %384, %cst_173 {dimension_numbers = #tpu.dot_dimension_numbers<[1], [0], [0], [1], [0, 0, 1, 1], [], []>} : vector<16x4xf32>, vector<4x128xf32>, vector<16x128xf32> -> vector<16x128xf32>
    %386 = arith.addf %382, %385 : vector<16x128xf32>
    %c0_174 = arith.constant 0 : index
    %c0_175 = arith.constant 0 : index
    %387 = vector.load %arg18[%c0_174, %c0_175] : memref<1x128xf32, #tpu.memory_space<vmem>>, vector<1x128xf32>
    %388 = vector.broadcast %387 : vector<1x128xf32> to vector<16x128xf32>
    %389 = arith.addf %386, %388 : vector<16x128xf32>
    %c0_176 = arith.constant 0 : index
    %c0_177 = arith.constant 0 : index
    %390 = vector.load %arg27[%c0_176, %c0_177] : memref<16x128xf32, #tpu.memory_space<vmem>>, vector<16x128xf32>
    tpu.vector_store %arg27[%c0_176, %c0_177], %389 {strides = array<i32>} : memref<16x128xf32, #tpu.memory_space<vmem>>, vector<16x128xf32>,
    %c0_178 = arith.constant 0 : index
    %c0_179 = arith.constant 0 : index
    %391 = vector.load %arg14[%c0_178, %c0_179] : memref<1x128xf32, #tpu.memory_space<vmem>>, vector<1x128xf32>
    %392 = vector.broadcast %0 : vector<2x1xf32> to vector<2x128xf32>
    %393 = vector.broadcast %391 : vector<1x128xf32> to vector<2x128xf32>
    %394 = arith.mulf %392, %393 : vector<2x128xf32>
    %c0_180 = arith.constant 0 : index
    %c0_181 = arith.constant 0 : index
    %395 = vector.load %arg17[%c0_180, %c0_181] : memref<32x128xf32, #tpu.memory_space<vmem>>, vector<32x128xf32>
    %cst_182 = arith.constant 0.000000e+00 : f32
    %396 = vector.broadcast %cst_182 : f32 to vector<2x32xf32>
    %cst_183 = arith.constant 0.000000e+00 : f32
    %397 = vector.broadcast %cst_183 : f32 to vector<2x32xf32>
    %c0_184 = arith.constant 0 : index
    %c0_185 = arith.constant 0 : index
    %398 = vector.load %arg27[%c0_184, %c0_185] : memref<16x128xf32, #tpu.memory_space<vmem>>, vector<2x128xf32>
    %cst_186 = arith.constant dense<0.000000e+00> : vector<2x128xf32>
    %399 = tpu.matmul %396, %395, %cst_186 {dimension_numbers = #tpu.dot_dimension_numbers<[1], [0], [0], [1], [0, 0, 1, 1], [], []>} : vector<2x32xf32>, vector<32x128xf32>, vector<2x128xf32> -> vector<2x128xf32>
    %400 = arith.addf %398, %399 : vector<2x128xf32>
    %401 = arith.addf %400, %394 : vector<2x128xf32>
    %402 = arith.negf %401 : vector<2x128xf32>
    %403 = math.exp %402 : vector<2x128xf32>
    %cst_187 = arith.constant 1.000000e+00 : f32
    %404 = vector.broadcast %cst_187 : f32 to vector<2x128xf32>
    %405 = arith.addf %404, %403 : vector<2x128xf32>
    %406 = arith.divf %404, %405 : vector<2x128xf32>
    %407 = math.tanh %401 : vector<2x128xf32>
    %408 = vector.extract_strided_slice %406 {offsets = [0, 0], sizes = [2, 32], strides = [1, 1]} : vector<2x128xf32> to vector<2x32xf32>
    %409 = vector.extract_strided_slice %406 {offsets = [0, 32], sizes = [2, 32], strides = [1, 1]} : vector<2x128xf32> to vector<2x32xf32>
    %410 = vector.extract_strided_slice %407 {offsets = [0, 64], sizes = [2, 32], strides = [1, 1]} : vector<2x128xf32> to vector<2x32xf32>
    %411 = vector.extract_strided_slice %406 {offsets = [0, 96], sizes = [2, 32], strides = [1, 1]} : vector<2x128xf32> to vector<2x32xf32>
    %412 = arith.mulf %409, %397 : vector<2x32xf32>
    %413 = arith.mulf %408, %410 : vector<2x32xf32>
    %414 = arith.addf %412, %413 : vector<2x32xf32>
    %415 = math.tanh %414 : vector<2x32xf32>
    %416 = arith.mulf %411, %415 : vector<2x32xf32>
    %c0_188 = arith.constant 0 : index
    %c0_189 = arith.constant 0 : index
    %417 = vector.load %arg25[%c0_188, %c0_189] : memref<16x32xf32, #tpu.memory_space<vmem>>, vector<2x32xf32>
    tpu.vector_store %arg25[%c0_188, %c0_189], %416 {strides = array<i32>} : memref<16x32xf32, #tpu.memory_space<vmem>>, vector<2x32xf32>,
    %c2_190 = arith.constant 2 : index
    %c0_191 = arith.constant 0 : index
    %418 = vector.load %arg27[%c2_190, %c0_191] : memref<16x128xf32, #tpu.memory_space<vmem>>, vector<2x128xf32>
    %cst_192 = arith.constant dense<0.000000e+00> : vector<2x128xf32>
    %419 = tpu.matmul %416, %395, %cst_192 {dimension_numbers = #tpu.dot_dimension_numbers<[1], [0], [0], [1], [0, 0, 1, 1], [], []>} : vector<2x32xf32>, vector<32x128xf32>, vector<2x128xf32> -> vector<2x128xf32>
    %420 = arith.addf %418, %419 : vector<2x128xf32>
    %421 = arith.addf %420, %394 : vector<2x128xf32>
    %422 = arith.negf %421 : vector<2x128xf32>
    %423 = math.exp %422 : vector<2x128xf32>
    %cst_193 = arith.constant 1.000000e+00 : f32
    %424 = vector.broadcast %cst_193 : f32 to vector<2x128xf32>
    %425 = arith.addf %424, %423 : vector<2x128xf32>
    %426 = arith.divf %424, %425 : vector<2x128xf32>
    %427 = math.tanh %421 : vector<2x128xf32>
    %428 = vector.extract_strided_slice %426 {offsets = [0, 0], sizes = [2, 32], strides = [1, 1]} : vector<2x128xf32> to vector<2x32xf32>
    %429 = vector.extract_strided_slice %426 {offsets = [0, 32], sizes = [2, 32], strides = [1, 1]} : vector<2x128xf32> to vector<2x32xf32>
    %430 = vector.extract_strided_slice %427 {offsets = [0, 64], sizes = [2, 32], strides = [1, 1]} : vector<2x128xf32> to vector<2x32xf32>
    %431 = vector.extract_strided_slice %426 {offsets = [0, 96], sizes = [2, 32], strides = [1, 1]} : vector<2x128xf32> to vector<2x32xf32>
    %432 = arith.mulf %429, %414 : vector<2x32xf32>
    %433 = arith.mulf %428, %430 : vector<2x32xf32>
    %434 = arith.addf %432, %433 : vector<2x32xf32>
    %435 = math.tanh %434 : vector<2x32xf32>
    %436 = arith.mulf %431, %435 : vector<2x32xf32>
    %c2_194 = arith.constant 2 : index
    %c0_195 = arith.constant 0 : index
    %437 = vector.load %arg25[%c2_194, %c0_195] : memref<16x32xf32, #tpu.memory_space<vmem>>, vector<2x32xf32>
    tpu.vector_store %arg25[%c2_194, %c0_195], %436 {strides = array<i32>} : memref<16x32xf32, #tpu.memory_space<vmem>>, vector<2x32xf32>,
    %c4_196 = arith.constant 4 : index
    %c0_197 = arith.constant 0 : index
    %438 = vector.load %arg27[%c4_196, %c0_197] : memref<16x128xf32, #tpu.memory_space<vmem>>, vector<2x128xf32>
    %cst_198 = arith.constant dense<0.000000e+00> : vector<2x128xf32>
    %439 = tpu.matmul %436, %395, %cst_198 {dimension_numbers = #tpu.dot_dimension_numbers<[1], [0], [0], [1], [0, 0, 1, 1], [], []>} : vector<2x32xf32>, vector<32x128xf32>, vector<2x128xf32> -> vector<2x128xf32>
    %440 = arith.addf %438, %439 : vector<2x128xf32>
    %441 = arith.addf %440, %394 : vector<2x128xf32>
    %442 = arith.negf %441 : vector<2x128xf32>
    %443 = math.exp %442 : vector<2x128xf32>
    %cst_199 = arith.constant 1.000000e+00 : f32
    %444 = vector.broadcast %cst_199 : f32 to vector<2x128xf32>
    %445 = arith.addf %444, %443 : vector<2x128xf32>
    %446 = arith.divf %444, %445 : vector<2x128xf32>
    %447 = math.tanh %441 : vector<2x128xf32>
    %448 = vector.extract_strided_slice %446 {offsets = [0, 0], sizes = [2, 32], strides = [1, 1]} : vector<2x128xf32> to vector<2x32xf32>
    %449 = vector.extract_strided_slice %446 {offsets = [0, 32], sizes = [2, 32], strides = [1, 1]} : vector<2x128xf32> to vector<2x32xf32>
    %450 = vector.extract_strided_slice %447 {offsets = [0, 64], sizes = [2, 32], strides = [1, 1]} : vector<2x128xf32> to vector<2x32xf32>
    %451 = vector.extract_strided_slice %446 {offsets = [0, 96], sizes = [2, 32], strides = [1, 1]} : vector<2x128xf32> to vector<2x32xf32>
    %452 = arith.mulf %449, %434 : vector<2x32xf32>
    %453 = arith.mulf %448, %450 : vector<2x32xf32>
    %454 = arith.addf %452, %453 : vector<2x32xf32>
    %455 = math.tanh %454 : vector<2x32xf32>
    %456 = arith.mulf %451, %455 : vector<2x32xf32>
    %c4_200 = arith.constant 4 : index
    %c0_201 = arith.constant 0 : index
    %457 = vector.load %arg25[%c4_200, %c0_201] : memref<16x32xf32, #tpu.memory_space<vmem>>, vector<2x32xf32>
    tpu.vector_store %arg25[%c4_200, %c0_201], %456 {strides = array<i32>} : memref<16x32xf32, #tpu.memory_space<vmem>>, vector<2x32xf32>,
    %c6_202 = arith.constant 6 : index
    %c0_203 = arith.constant 0 : index
    %458 = vector.load %arg27[%c6_202, %c0_203] : memref<16x128xf32, #tpu.memory_space<vmem>>, vector<2x128xf32>
    %cst_204 = arith.constant dense<0.000000e+00> : vector<2x128xf32>
    %459 = tpu.matmul %456, %395, %cst_204 {dimension_numbers = #tpu.dot_dimension_numbers<[1], [0], [0], [1], [0, 0, 1, 1], [], []>} : vector<2x32xf32>, vector<32x128xf32>, vector<2x128xf32> -> vector<2x128xf32>
    %460 = arith.addf %458, %459 : vector<2x128xf32>
    %461 = arith.addf %460, %394 : vector<2x128xf32>
    %462 = arith.negf %461 : vector<2x128xf32>
    %463 = math.exp %462 : vector<2x128xf32>
    %cst_205 = arith.constant 1.000000e+00 : f32
    %464 = vector.broadcast %cst_205 : f32 to vector<2x128xf32>
    %465 = arith.addf %464, %463 : vector<2x128xf32>
    %466 = arith.divf %464, %465 : vector<2x128xf32>
    %467 = math.tanh %461 : vector<2x128xf32>
    %468 = vector.extract_strided_slice %466 {offsets = [0, 0], sizes = [2, 32], strides = [1, 1]} : vector<2x128xf32> to vector<2x32xf32>
    %469 = vector.extract_strided_slice %466 {offsets = [0, 32], sizes = [2, 32], strides = [1, 1]} : vector<2x128xf32> to vector<2x32xf32>
    %470 = vector.extract_strided_slice %467 {offsets = [0, 64], sizes = [2, 32], strides = [1, 1]} : vector<2x128xf32> to vector<2x32xf32>
    %471 = vector.extract_strided_slice %466 {offsets = [0, 96], sizes = [2, 32], strides = [1, 1]} : vector<2x128xf32> to vector<2x32xf32>
    %472 = arith.mulf %469, %454 : vector<2x32xf32>
    %473 = arith.mulf %468, %470 : vector<2x32xf32>
    %474 = arith.addf %472, %473 : vector<2x32xf32>
    %475 = math.tanh %474 : vector<2x32xf32>
    %476 = arith.mulf %471, %475 : vector<2x32xf32>
    %c6_206 = arith.constant 6 : index
    %c0_207 = arith.constant 0 : index
    %477 = vector.load %arg25[%c6_206, %c0_207] : memref<16x32xf32, #tpu.memory_space<vmem>>, vector<2x32xf32>
    tpu.vector_store %arg25[%c6_206, %c0_207], %476 {strides = array<i32>} : memref<16x32xf32, #tpu.memory_space<vmem>>, vector<2x32xf32>,
    %c8_208 = arith.constant 8 : index
    %c0_209 = arith.constant 0 : index
    %478 = vector.load %arg27[%c8_208, %c0_209] : memref<16x128xf32, #tpu.memory_space<vmem>>, vector<2x128xf32>
    %cst_210 = arith.constant dense<0.000000e+00> : vector<2x128xf32>
    %479 = tpu.matmul %476, %395, %cst_210 {dimension_numbers = #tpu.dot_dimension_numbers<[1], [0], [0], [1], [0, 0, 1, 1], [], []>} : vector<2x32xf32>, vector<32x128xf32>, vector<2x128xf32> -> vector<2x128xf32>
    %480 = arith.addf %478, %479 : vector<2x128xf32>
    %481 = arith.addf %480, %394 : vector<2x128xf32>
    %482 = arith.negf %481 : vector<2x128xf32>
    %483 = math.exp %482 : vector<2x128xf32>
    %cst_211 = arith.constant 1.000000e+00 : f32
    %484 = vector.broadcast %cst_211 : f32 to vector<2x128xf32>
    %485 = arith.addf %484, %483 : vector<2x128xf32>
    %486 = arith.divf %484, %485 : vector<2x128xf32>
    %487 = math.tanh %481 : vector<2x128xf32>
    %488 = vector.extract_strided_slice %486 {offsets = [0, 0], sizes = [2, 32], strides = [1, 1]} : vector<2x128xf32> to vector<2x32xf32>
    %489 = vector.extract_strided_slice %486 {offsets = [0, 32], sizes = [2, 32], strides = [1, 1]} : vector<2x128xf32> to vector<2x32xf32>
    %490 = vector.extract_strided_slice %487 {offsets = [0, 64], sizes = [2, 32], strides = [1, 1]} : vector<2x128xf32> to vector<2x32xf32>
    %491 = vector.extract_strided_slice %486 {offsets = [0, 96], sizes = [2, 32], strides = [1, 1]} : vector<2x128xf32> to vector<2x32xf32>
    %492 = arith.mulf %489, %474 : vector<2x32xf32>
    %493 = arith.mulf %488, %490 : vector<2x32xf32>
    %494 = arith.addf %492, %493 : vector<2x32xf32>
    %495 = math.tanh %494 : vector<2x32xf32>
    %496 = arith.mulf %491, %495 : vector<2x32xf32>
    %c8_212 = arith.constant 8 : index
    %c0_213 = arith.constant 0 : index
    %497 = vector.load %arg25[%c8_212, %c0_213] : memref<16x32xf32, #tpu.memory_space<vmem>>, vector<2x32xf32>
    tpu.vector_store %arg25[%c8_212, %c0_213], %496 {strides = array<i32>} : memref<16x32xf32, #tpu.memory_space<vmem>>, vector<2x32xf32>,
    %c10_214 = arith.constant 10 : index
    %c0_215 = arith.constant 0 : index
    %498 = vector.load %arg27[%c10_214, %c0_215] : memref<16x128xf32, #tpu.memory_space<vmem>>, vector<2x128xf32>
    %cst_216 = arith.constant dense<0.000000e+00> : vector<2x128xf32>
    %499 = tpu.matmul %496, %395, %cst_216 {dimension_numbers = #tpu.dot_dimension_numbers<[1], [0], [0], [1], [0, 0, 1, 1], [], []>} : vector<2x32xf32>, vector<32x128xf32>, vector<2x128xf32> -> vector<2x128xf32>
    %500 = arith.addf %498, %499 : vector<2x128xf32>
    %501 = arith.addf %500, %394 : vector<2x128xf32>
    %502 = arith.negf %501 : vector<2x128xf32>
    %503 = math.exp %502 : vector<2x128xf32>
    %cst_217 = arith.constant 1.000000e+00 : f32
    %504 = vector.broadcast %cst_217 : f32 to vector<2x128xf32>
    %505 = arith.addf %504, %503 : vector<2x128xf32>
    %506 = arith.divf %504, %505 : vector<2x128xf32>
    %507 = math.tanh %501 : vector<2x128xf32>
    %508 = vector.extract_strided_slice %506 {offsets = [0, 0], sizes = [2, 32], strides = [1, 1]} : vector<2x128xf32> to vector<2x32xf32>
    %509 = vector.extract_strided_slice %506 {offsets = [0, 32], sizes = [2, 32], strides = [1, 1]} : vector<2x128xf32> to vector<2x32xf32>
    %510 = vector.extract_strided_slice %507 {offsets = [0, 64], sizes = [2, 32], strides = [1, 1]} : vector<2x128xf32> to vector<2x32xf32>
    %511 = vector.extract_strided_slice %506 {offsets = [0, 96], sizes = [2, 32], strides = [1, 1]} : vector<2x128xf32> to vector<2x32xf32>
    %512 = arith.mulf %509, %494 : vector<2x32xf32>
    %513 = arith.mulf %508, %510 : vector<2x32xf32>
    %514 = arith.addf %512, %513 : vector<2x32xf32>
    %515 = math.tanh %514 : vector<2x32xf32>
    %516 = arith.mulf %511, %515 : vector<2x32xf32>
    %c10_218 = arith.constant 10 : index
    %c0_219 = arith.constant 0 : index
    %517 = vector.load %arg25[%c10_218, %c0_219] : memref<16x32xf32, #tpu.memory_space<vmem>>, vector<2x32xf32>
    tpu.vector_store %arg25[%c10_218, %c0_219], %516 {strides = array<i32>} : memref<16x32xf32, #tpu.memory_space<vmem>>, vector<2x32xf32>,
    %c12_220 = arith.constant 12 : index
    %c0_221 = arith.constant 0 : index
    %518 = vector.load %arg27[%c12_220, %c0_221] : memref<16x128xf32, #tpu.memory_space<vmem>>, vector<2x128xf32>
    %cst_222 = arith.constant dense<0.000000e+00> : vector<2x128xf32>
    %519 = tpu.matmul %516, %395, %cst_222 {dimension_numbers = #tpu.dot_dimension_numbers<[1], [0], [0], [1], [0, 0, 1, 1], [], []>} : vector<2x32xf32>, vector<32x128xf32>, vector<2x128xf32> -> vector<2x128xf32>
    %520 = arith.addf %518, %519 : vector<2x128xf32>
    %521 = arith.addf %520, %394 : vector<2x128xf32>
    %522 = arith.negf %521 : vector<2x128xf32>
    %523 = math.exp %522 : vector<2x128xf32>
    %cst_223 = arith.constant 1.000000e+00 : f32
    %524 = vector.broadcast %cst_223 : f32 to vector<2x128xf32>
    %525 = arith.addf %524, %523 : vector<2x128xf32>
    %526 = arith.divf %524, %525 : vector<2x128xf32>
    %527 = math.tanh %521 : vector<2x128xf32>
    %528 = vector.extract_strided_slice %526 {offsets = [0, 0], sizes = [2, 32], strides = [1, 1]} : vector<2x128xf32> to vector<2x32xf32>
    %529 = vector.extract_strided_slice %526 {offsets = [0, 32], sizes = [2, 32], strides = [1, 1]} : vector<2x128xf32> to vector<2x32xf32>
    %530 = vector.extract_strided_slice %527 {offsets = [0, 64], sizes = [2, 32], strides = [1, 1]} : vector<2x128xf32> to vector<2x32xf32>
    %531 = vector.extract_strided_slice %526 {offsets = [0, 96], sizes = [2, 32], strides = [1, 1]} : vector<2x128xf32> to vector<2x32xf32>
    %532 = arith.mulf %529, %514 : vector<2x32xf32>
    %533 = arith.mulf %528, %530 : vector<2x32xf32>
    %534 = arith.addf %532, %533 : vector<2x32xf32>
    %535 = math.tanh %534 : vector<2x32xf32>
    %536 = arith.mulf %531, %535 : vector<2x32xf32>
    %c12_224 = arith.constant 12 : index
    %c0_225 = arith.constant 0 : index
    %537 = vector.load %arg25[%c12_224, %c0_225] : memref<16x32xf32, #tpu.memory_space<vmem>>, vector<2x32xf32>
    tpu.vector_store %arg25[%c12_224, %c0_225], %536 {strides = array<i32>} : memref<16x32xf32, #tpu.memory_space<vmem>>, vector<2x32xf32>,
    %c14_226 = arith.constant 14 : index
    %c0_227 = arith.constant 0 : index
    %538 = vector.load %arg27[%c14_226, %c0_227] : memref<16x128xf32, #tpu.memory_space<vmem>>, vector<2x128xf32>
    %cst_228 = arith.constant dense<0.000000e+00> : vector<2x128xf32>
    %539 = tpu.matmul %536, %395, %cst_228 {dimension_numbers = #tpu.dot_dimension_numbers<[1], [0], [0], [1], [0, 0, 1, 1], [], []>} : vector<2x32xf32>, vector<32x128xf32>, vector<2x128xf32> -> vector<2x128xf32>
    %540 = arith.addf %538, %539 : vector<2x128xf32>
    %541 = arith.addf %540, %394 : vector<2x128xf32>
    %542 = arith.negf %541 : vector<2x128xf32>
    %543 = math.exp %542 : vector<2x128xf32>
    %cst_229 = arith.constant 1.000000e+00 : f32
    %544 = vector.broadcast %cst_229 : f32 to vector<2x128xf32>
    %545 = arith.addf %544, %543 : vector<2x128xf32>
    %546 = arith.divf %544, %545 : vector<2x128xf32>
    %547 = math.tanh %541 : vector<2x128xf32>
    %548 = vector.extract_strided_slice %546 {offsets = [0, 0], sizes = [2, 32], strides = [1, 1]} : vector<2x128xf32> to vector<2x32xf32>
    %549 = vector.extract_strided_slice %546 {offsets = [0, 32], sizes = [2, 32], strides = [1, 1]} : vector<2x128xf32> to vector<2x32xf32>
    %550 = vector.extract_strided_slice %547 {offsets = [0, 64], sizes = [2, 32], strides = [1, 1]} : vector<2x128xf32> to vector<2x32xf32>
    %551 = vector.extract_strided_slice %546 {offsets = [0, 96], sizes = [2, 32], strides = [1, 1]} : vector<2x128xf32> to vector<2x32xf32>
    %552 = arith.mulf %549, %534 : vector<2x32xf32>
    %553 = arith.mulf %548, %550 : vector<2x32xf32>
    %554 = arith.addf %552, %553 : vector<2x32xf32>
    %555 = math.tanh %554 : vector<2x32xf32>
    %556 = arith.mulf %551, %555 : vector<2x32xf32>
    %c14_230 = arith.constant 14 : index
    %c0_231 = arith.constant 0 : index
    %557 = vector.load %arg25[%c14_230, %c0_231] : memref<16x32xf32, #tpu.memory_space<vmem>>, vector<2x32xf32>
    tpu.vector_store %arg25[%c14_230, %c0_231], %556 {strides = array<i32>} : memref<16x32xf32, #tpu.memory_space<vmem>>, vector<2x32xf32>,
    %c0_232 = arith.constant 0 : index
    %c0_233 = arith.constant 0 : index
    %558 = vector.load %arg25[%c0_232, %c0_233] : memref<16x32xf32, #tpu.memory_space<vmem>>, vector<16x32xf32>
    %c0_234 = arith.constant 0 : index
    %c0_235 = arith.constant 0 : index
    %559 = vector.load %arg19[%c0_234, %c0_235] : memref<32x128xf32, #tpu.memory_space<vmem>>, vector<32x128xf32>
    %cst_236 = arith.constant dense<0.000000e+00> : vector<16x128xf32>
    %560 = tpu.matmul %558, %559, %cst_236 {dimension_numbers = #tpu.dot_dimension_numbers<[1], [0], [0], [1], [0, 0, 1, 1], [], []>} : vector<16x32xf32>, vector<32x128xf32>, vector<16x128xf32> -> vector<16x128xf32>
    %c0_237 = arith.constant 0 : index
    %c0_238 = arith.constant 0 : index
    %561 = vector.load %arg21[%c0_237, %c0_238] : memref<1x128xf32, #tpu.memory_space<vmem>>, vector<1x128xf32>
    %562 = vector.broadcast %561 : vector<1x128xf32> to vector<16x128xf32>
    %563 = arith.addf %560, %562 : vector<16x128xf32>
    %c0_239 = arith.constant 0 : index
    %c0_240 = arith.constant 0 : index
    %564 = vector.load %arg27[%c0_239, %c0_240] : memref<16x128xf32, #tpu.memory_space<vmem>>, vector<16x128xf32>
    tpu.vector_store %arg27[%c0_239, %c0_240], %563 {strides = array<i32>} : memref<16x128xf32, #tpu.memory_space<vmem>>, vector<16x128xf32>,
    %c0_241 = arith.constant 0 : index
    %c0_242 = arith.constant 0 : index
    %565 = vector.load %arg20[%c0_241, %c0_242] : memref<32x128xf32, #tpu.memory_space<vmem>>, vector<32x128xf32>
    %cst_243 = arith.constant 0.000000e+00 : f32
    %566 = vector.broadcast %cst_243 : f32 to vector<2x32xf32>
    %cst_244 = arith.constant 0.000000e+00 : f32
    %567 = vector.broadcast %cst_244 : f32 to vector<2x32xf32>
    %c0_245 = arith.constant 0 : index
    %c0_246 = arith.constant 0 : index
    %568 = vector.load %arg27[%c0_245, %c0_246] : memref<16x128xf32, #tpu.memory_space<vmem>>, vector<2x128xf32>
    %cst_247 = arith.constant dense<0.000000e+00> : vector<2x128xf32>
    %569 = tpu.matmul %566, %565, %cst_247 {dimension_numbers = #tpu.dot_dimension_numbers<[1], [0], [0], [1], [0, 0, 1, 1], [], []>} : vector<2x32xf32>, vector<32x128xf32>, vector<2x128xf32> -> vector<2x128xf32>
    %570 = arith.addf %568, %569 : vector<2x128xf32>
    %571 = arith.negf %570 : vector<2x128xf32>
    %572 = math.exp %571 : vector<2x128xf32>
    %cst_248 = arith.constant 1.000000e+00 : f32
    %573 = vector.broadcast %cst_248 : f32 to vector<2x128xf32>
    %574 = arith.addf %573, %572 : vector<2x128xf32>
    %575 = arith.divf %573, %574 : vector<2x128xf32>
    %576 = math.tanh %570 : vector<2x128xf32>
    %577 = vector.extract_strided_slice %575 {offsets = [0, 0], sizes = [2, 32], strides = [1, 1]} : vector<2x128xf32> to vector<2x32xf32>
    %578 = vector.extract_strided_slice %575 {offsets = [0, 32], sizes = [2, 32], strides = [1, 1]} : vector<2x128xf32> to vector<2x32xf32>
    %579 = vector.extract_strided_slice %576 {offsets = [0, 64], sizes = [2, 32], strides = [1, 1]} : vector<2x128xf32> to vector<2x32xf32>
    %580 = vector.extract_strided_slice %575 {offsets = [0, 96], sizes = [2, 32], strides = [1, 1]} : vector<2x128xf32> to vector<2x32xf32>
    %581 = arith.mulf %578, %567 : vector<2x32xf32>
    %582 = arith.mulf %577, %579 : vector<2x32xf32>
    %583 = arith.addf %581, %582 : vector<2x32xf32>
    %584 = math.tanh %583 : vector<2x32xf32>
    %585 = arith.mulf %580, %584 : vector<2x32xf32>
    %c0_249 = arith.constant 0 : index
    %c0_250 = arith.constant 0 : index
    %586 = vector.load %arg26[%c0_249, %c0_250] : memref<16x32xf32, #tpu.memory_space<vmem>>, vector<2x32xf32>
    tpu.vector_store %arg26[%c0_249, %c0_250], %585 {strides = array<i32>} : memref<16x32xf32, #tpu.memory_space<vmem>>, vector<2x32xf32>,
    %c2_251 = arith.constant 2 : index
    %c0_252 = arith.constant 0 : index
    %587 = vector.load %arg27[%c2_251, %c0_252] : memref<16x128xf32, #tpu.memory_space<vmem>>, vector<2x128xf32>
    %cst_253 = arith.constant dense<0.000000e+00> : vector<2x128xf32>
    %588 = tpu.matmul %585, %565, %cst_253 {dimension_numbers = #tpu.dot_dimension_numbers<[1], [0], [0], [1], [0, 0, 1, 1], [], []>} : vector<2x32xf32>, vector<32x128xf32>, vector<2x128xf32> -> vector<2x128xf32>
    %589 = arith.addf %587, %588 : vector<2x128xf32>
    %590 = arith.negf %589 : vector<2x128xf32>
    %591 = math.exp %590 : vector<2x128xf32>
    %cst_254 = arith.constant 1.000000e+00 : f32
    %592 = vector.broadcast %cst_254 : f32 to vector<2x128xf32>
    %593 = arith.addf %592, %591 : vector<2x128xf32>
    %594 = arith.divf %592, %593 : vector<2x128xf32>
    %595 = math.tanh %589 : vector<2x128xf32>
    %596 = vector.extract_strided_slice %594 {offsets = [0, 0], sizes = [2, 32], strides = [1, 1]} : vector<2x128xf32> to vector<2x32xf32>
    %597 = vector.extract_strided_slice %594 {offsets = [0, 32], sizes = [2, 32], strides = [1, 1]} : vector<2x128xf32> to vector<2x32xf32>
    %598 = vector.extract_strided_slice %595 {offsets = [0, 64], sizes = [2, 32], strides = [1, 1]} : vector<2x128xf32> to vector<2x32xf32>
    %599 = vector.extract_strided_slice %594 {offsets = [0, 96], sizes = [2, 32], strides = [1, 1]} : vector<2x128xf32> to vector<2x32xf32>
    %600 = arith.mulf %597, %583 : vector<2x32xf32>
    %601 = arith.mulf %596, %598 : vector<2x32xf32>
    %602 = arith.addf %600, %601 : vector<2x32xf32>
    %603 = math.tanh %602 : vector<2x32xf32>
    %604 = arith.mulf %599, %603 : vector<2x32xf32>
    %c2_255 = arith.constant 2 : index
    %c0_256 = arith.constant 0 : index
    %605 = vector.load %arg26[%c2_255, %c0_256] : memref<16x32xf32, #tpu.memory_space<vmem>>, vector<2x32xf32>
    tpu.vector_store %arg26[%c2_255, %c0_256], %604 {strides = array<i32>} : memref<16x32xf32, #tpu.memory_space<vmem>>, vector<2x32xf32>,
    %c4_257 = arith.constant 4 : index
    %c0_258 = arith.constant 0 : index
    %606 = vector.load %arg27[%c4_257, %c0_258] : memref<16x128xf32, #tpu.memory_space<vmem>>, vector<2x128xf32>
    %cst_259 = arith.constant dense<0.000000e+00> : vector<2x128xf32>
    %607 = tpu.matmul %604, %565, %cst_259 {dimension_numbers = #tpu.dot_dimension_numbers<[1], [0], [0], [1], [0, 0, 1, 1], [], []>} : vector<2x32xf32>, vector<32x128xf32>, vector<2x128xf32> -> vector<2x128xf32>
    %608 = arith.addf %606, %607 : vector<2x128xf32>
    %609 = arith.negf %608 : vector<2x128xf32>
    %610 = math.exp %609 : vector<2x128xf32>
    %cst_260 = arith.constant 1.000000e+00 : f32
    %611 = vector.broadcast %cst_260 : f32 to vector<2x128xf32>
    %612 = arith.addf %611, %610 : vector<2x128xf32>
    %613 = arith.divf %611, %612 : vector<2x128xf32>
    %614 = math.tanh %608 : vector<2x128xf32>
    %615 = vector.extract_strided_slice %613 {offsets = [0, 0], sizes = [2, 32], strides = [1, 1]} : vector<2x128xf32> to vector<2x32xf32>
    %616 = vector.extract_strided_slice %613 {offsets = [0, 32], sizes = [2, 32], strides = [1, 1]} : vector<2x128xf32> to vector<2x32xf32>
    %617 = vector.extract_strided_slice %614 {offsets = [0, 64], sizes = [2, 32], strides = [1, 1]} : vector<2x128xf32> to vector<2x32xf32>
    %618 = vector.extract_strided_slice %613 {offsets = [0, 96], sizes = [2, 32], strides = [1, 1]} : vector<2x128xf32> to vector<2x32xf32>
    %619 = arith.mulf %616, %602 : vector<2x32xf32>
    %620 = arith.mulf %615, %617 : vector<2x32xf32>
    %621 = arith.addf %619, %620 : vector<2x32xf32>
    %622 = math.tanh %621 : vector<2x32xf32>
    %623 = arith.mulf %618, %622 : vector<2x32xf32>
    %c4_261 = arith.constant 4 : index
    %c0_262 = arith.constant 0 : index
    %624 = vector.load %arg26[%c4_261, %c0_262] : memref<16x32xf32, #tpu.memory_space<vmem>>, vector<2x32xf32>
    tpu.vector_store %arg26[%c4_261, %c0_262], %623 {strides = array<i32>} : memref<16x32xf32, #tpu.memory_space<vmem>>, vector<2x32xf32>,
    %c6_263 = arith.constant 6 : index
    %c0_264 = arith.constant 0 : index
    %625 = vector.load %arg27[%c6_263, %c0_264] : memref<16x128xf32, #tpu.memory_space<vmem>>, vector<2x128xf32>
    %cst_265 = arith.constant dense<0.000000e+00> : vector<2x128xf32>
    %626 = tpu.matmul %623, %565, %cst_265 {dimension_numbers = #tpu.dot_dimension_numbers<[1], [0], [0], [1], [0, 0, 1, 1], [], []>} : vector<2x32xf32>, vector<32x128xf32>, vector<2x128xf32> -> vector<2x128xf32>
    %627 = arith.addf %625, %626 : vector<2x128xf32>
    %628 = arith.negf %627 : vector<2x128xf32>
    %629 = math.exp %628 : vector<2x128xf32>
    %cst_266 = arith.constant 1.000000e+00 : f32
    %630 = vector.broadcast %cst_266 : f32 to vector<2x128xf32>
    %631 = arith.addf %630, %629 : vector<2x128xf32>
    %632 = arith.divf %630, %631 : vector<2x128xf32>
    %633 = math.tanh %627 : vector<2x128xf32>
    %634 = vector.extract_strided_slice %632 {offsets = [0, 0], sizes = [2, 32], strides = [1, 1]} : vector<2x128xf32> to vector<2x32xf32>
    %635 = vector.extract_strided_slice %632 {offsets = [0, 32], sizes = [2, 32], strides = [1, 1]} : vector<2x128xf32> to vector<2x32xf32>
    %636 = vector.extract_strided_slice %633 {offsets = [0, 64], sizes = [2, 32], strides = [1, 1]} : vector<2x128xf32> to vector<2x32xf32>
    %637 = vector.extract_strided_slice %632 {offsets = [0, 96], sizes = [2, 32], strides = [1, 1]} : vector<2x128xf32> to vector<2x32xf32>
    %638 = arith.mulf %635, %621 : vector<2x32xf32>
    %639 = arith.mulf %634, %636 : vector<2x32xf32>
    %640 = arith.addf %638, %639 : vector<2x32xf32>
    %641 = math.tanh %640 : vector<2x32xf32>
    %642 = arith.mulf %637, %641 : vector<2x32xf32>
    %c6_267 = arith.constant 6 : index
    %c0_268 = arith.constant 0 : index
    %643 = vector.load %arg26[%c6_267, %c0_268] : memref<16x32xf32, #tpu.memory_space<vmem>>, vector<2x32xf32>
    tpu.vector_store %arg26[%c6_267, %c0_268], %642 {strides = array<i32>} : memref<16x32xf32, #tpu.memory_space<vmem>>, vector<2x32xf32>,
    %c8_269 = arith.constant 8 : index
    %c0_270 = arith.constant 0 : index
    %644 = vector.load %arg27[%c8_269, %c0_270] : memref<16x128xf32, #tpu.memory_space<vmem>>, vector<2x128xf32>
    %cst_271 = arith.constant dense<0.000000e+00> : vector<2x128xf32>
    %645 = tpu.matmul %642, %565, %cst_271 {dimension_numbers = #tpu.dot_dimension_numbers<[1], [0], [0], [1], [0, 0, 1, 1], [], []>} : vector<2x32xf32>, vector<32x128xf32>, vector<2x128xf32> -> vector<2x128xf32>
    %646 = arith.addf %644, %645 : vector<2x128xf32>
    %647 = arith.negf %646 : vector<2x128xf32>
    %648 = math.exp %647 : vector<2x128xf32>
    %cst_272 = arith.constant 1.000000e+00 : f32
    %649 = vector.broadcast %cst_272 : f32 to vector<2x128xf32>
    %650 = arith.addf %649, %648 : vector<2x128xf32>
    %651 = arith.divf %649, %650 : vector<2x128xf32>
    %652 = math.tanh %646 : vector<2x128xf32>
    %653 = vector.extract_strided_slice %651 {offsets = [0, 0], sizes = [2, 32], strides = [1, 1]} : vector<2x128xf32> to vector<2x32xf32>
    %654 = vector.extract_strided_slice %651 {offsets = [0, 32], sizes = [2, 32], strides = [1, 1]} : vector<2x128xf32> to vector<2x32xf32>
    %655 = vector.extract_strided_slice %652 {offsets = [0, 64], sizes = [2, 32], strides = [1, 1]} : vector<2x128xf32> to vector<2x32xf32>
    %656 = vector.extract_strided_slice %651 {offsets = [0, 96], sizes = [2, 32], strides = [1, 1]} : vector<2x128xf32> to vector<2x32xf32>
    %657 = arith.mulf %654, %640 : vector<2x32xf32>
    %658 = arith.mulf %653, %655 : vector<2x32xf32>
    %659 = arith.addf %657, %658 : vector<2x32xf32>
    %660 = math.tanh %659 : vector<2x32xf32>
    %661 = arith.mulf %656, %660 : vector<2x32xf32>
    %c8_273 = arith.constant 8 : index
    %c0_274 = arith.constant 0 : index
    %662 = vector.load %arg26[%c8_273, %c0_274] : memref<16x32xf32, #tpu.memory_space<vmem>>, vector<2x32xf32>
    tpu.vector_store %arg26[%c8_273, %c0_274], %661 {strides = array<i32>} : memref<16x32xf32, #tpu.memory_space<vmem>>, vector<2x32xf32>,
    %c10_275 = arith.constant 10 : index
    %c0_276 = arith.constant 0 : index
    %663 = vector.load %arg27[%c10_275, %c0_276] : memref<16x128xf32, #tpu.memory_space<vmem>>, vector<2x128xf32>
    %cst_277 = arith.constant dense<0.000000e+00> : vector<2x128xf32>
    %664 = tpu.matmul %661, %565, %cst_277 {dimension_numbers = #tpu.dot_dimension_numbers<[1], [0], [0], [1], [0, 0, 1, 1], [], []>} : vector<2x32xf32>, vector<32x128xf32>, vector<2x128xf32> -> vector<2x128xf32>
    %665 = arith.addf %663, %664 : vector<2x128xf32>
    %666 = arith.negf %665 : vector<2x128xf32>
    %667 = math.exp %666 : vector<2x128xf32>
    %cst_278 = arith.constant 1.000000e+00 : f32
    %668 = vector.broadcast %cst_278 : f32 to vector<2x128xf32>
    %669 = arith.addf %668, %667 : vector<2x128xf32>
    %670 = arith.divf %668, %669 : vector<2x128xf32>
    %671 = math.tanh %665 : vector<2x128xf32>
    %672 = vector.extract_strided_slice %670 {offsets = [0, 0], sizes = [2, 32], strides = [1, 1]} : vector<2x128xf32> to vector<2x32xf32>
    %673 = vector.extract_strided_slice %670 {offsets = [0, 32], sizes = [2, 32], strides = [1, 1]} : vector<2x128xf32> to vector<2x32xf32>
    %674 = vector.extract_strided_slice %671 {offsets = [0, 64], sizes = [2, 32], strides = [1, 1]} : vector<2x128xf32> to vector<2x32xf32>
    %675 = vector.extract_strided_slice %670 {offsets = [0, 96], sizes = [2, 32], strides = [1, 1]} : vector<2x128xf32> to vector<2x32xf32>
    %676 = arith.mulf %673, %659 : vector<2x32xf32>
    %677 = arith.mulf %672, %674 : vector<2x32xf32>
    %678 = arith.addf %676, %677 : vector<2x32xf32>
    %679 = math.tanh %678 : vector<2x32xf32>
    %680 = arith.mulf %675, %679 : vector<2x32xf32>
    %c10_279 = arith.constant 10 : index
    %c0_280 = arith.constant 0 : index
    %681 = vector.load %arg26[%c10_279, %c0_280] : memref<16x32xf32, #tpu.memory_space<vmem>>, vector<2x32xf32>
    tpu.vector_store %arg26[%c10_279, %c0_280], %680 {strides = array<i32>} : memref<16x32xf32, #tpu.memory_space<vmem>>, vector<2x32xf32>,
    %c12_281 = arith.constant 12 : index
    %c0_282 = arith.constant 0 : index
    %682 = vector.load %arg27[%c12_281, %c0_282] : memref<16x128xf32, #tpu.memory_space<vmem>>, vector<2x128xf32>
    %cst_283 = arith.constant dense<0.000000e+00> : vector<2x128xf32>
    %683 = tpu.matmul %680, %565, %cst_283 {dimension_numbers = #tpu.dot_dimension_numbers<[1], [0], [0], [1], [0, 0, 1, 1], [], []>} : vector<2x32xf32>, vector<32x128xf32>, vector<2x128xf32> -> vector<2x128xf32>
    %684 = arith.addf %682, %683 : vector<2x128xf32>
    %685 = arith.negf %684 : vector<2x128xf32>
    %686 = math.exp %685 : vector<2x128xf32>
    %cst_284 = arith.constant 1.000000e+00 : f32
    %687 = vector.broadcast %cst_284 : f32 to vector<2x128xf32>
    %688 = arith.addf %687, %686 : vector<2x128xf32>
    %689 = arith.divf %687, %688 : vector<2x128xf32>
    %690 = math.tanh %684 : vector<2x128xf32>
    %691 = vector.extract_strided_slice %689 {offsets = [0, 0], sizes = [2, 32], strides = [1, 1]} : vector<2x128xf32> to vector<2x32xf32>
    %692 = vector.extract_strided_slice %689 {offsets = [0, 32], sizes = [2, 32], strides = [1, 1]} : vector<2x128xf32> to vector<2x32xf32>
    %693 = vector.extract_strided_slice %690 {offsets = [0, 64], sizes = [2, 32], strides = [1, 1]} : vector<2x128xf32> to vector<2x32xf32>
    %694 = vector.extract_strided_slice %689 {offsets = [0, 96], sizes = [2, 32], strides = [1, 1]} : vector<2x128xf32> to vector<2x32xf32>
    %695 = arith.mulf %692, %678 : vector<2x32xf32>
    %696 = arith.mulf %691, %693 : vector<2x32xf32>
    %697 = arith.addf %695, %696 : vector<2x32xf32>
    %698 = math.tanh %697 : vector<2x32xf32>
    %699 = arith.mulf %694, %698 : vector<2x32xf32>
    %c12_285 = arith.constant 12 : index
    %c0_286 = arith.constant 0 : index
    %700 = vector.load %arg26[%c12_285, %c0_286] : memref<16x32xf32, #tpu.memory_space<vmem>>, vector<2x32xf32>
    tpu.vector_store %arg26[%c12_285, %c0_286], %699 {strides = array<i32>} : memref<16x32xf32, #tpu.memory_space<vmem>>, vector<2x32xf32>,
    %c14_287 = arith.constant 14 : index
    %c0_288 = arith.constant 0 : index
    %701 = vector.load %arg27[%c14_287, %c0_288] : memref<16x128xf32, #tpu.memory_space<vmem>>, vector<2x128xf32>
    %cst_289 = arith.constant dense<0.000000e+00> : vector<2x128xf32>
    %702 = tpu.matmul %699, %565, %cst_289 {dimension_numbers = #tpu.dot_dimension_numbers<[1], [0], [0], [1], [0, 0, 1, 1], [], []>} : vector<2x32xf32>, vector<32x128xf32>, vector<2x128xf32> -> vector<2x128xf32>
    %703 = arith.addf %701, %702 : vector<2x128xf32>
    %704 = arith.negf %703 : vector<2x128xf32>
    %705 = math.exp %704 : vector<2x128xf32>
    %cst_290 = arith.constant 1.000000e+00 : f32
    %706 = vector.broadcast %cst_290 : f32 to vector<2x128xf32>
    %707 = arith.addf %706, %705 : vector<2x128xf32>
    %708 = arith.divf %706, %707 : vector<2x128xf32>
    %709 = math.tanh %703 : vector<2x128xf32>
    %710 = vector.extract_strided_slice %708 {offsets = [0, 0], sizes = [2, 32], strides = [1, 1]} : vector<2x128xf32> to vector<2x32xf32>
    %711 = vector.extract_strided_slice %708 {offsets = [0, 32], sizes = [2, 32], strides = [1, 1]} : vector<2x128xf32> to vector<2x32xf32>
    %712 = vector.extract_strided_slice %709 {offsets = [0, 64], sizes = [2, 32], strides = [1, 1]} : vector<2x128xf32> to vector<2x32xf32>
    %713 = vector.extract_strided_slice %708 {offsets = [0, 96], sizes = [2, 32], strides = [1, 1]} : vector<2x128xf32> to vector<2x32xf32>
    %714 = arith.mulf %711, %697 : vector<2x32xf32>
    %715 = arith.mulf %710, %712 : vector<2x32xf32>
    %716 = arith.addf %714, %715 : vector<2x32xf32>
    %717 = math.tanh %716 : vector<2x32xf32>
    %718 = arith.mulf %713, %717 : vector<2x32xf32>
    %c14_291 = arith.constant 14 : index
    %c0_292 = arith.constant 0 : index
    %719 = vector.load %arg26[%c14_291, %c0_292] : memref<16x32xf32, #tpu.memory_space<vmem>>, vector<2x32xf32>
    tpu.vector_store %arg26[%c14_291, %c0_292], %718 {strides = array<i32>} : memref<16x32xf32, #tpu.memory_space<vmem>>, vector<2x32xf32>,
    %c0_293 = arith.constant 0 : index
    %c0_294 = arith.constant 0 : index
    %720 = vector.load %arg26[%c0_293, %c0_294] : memref<16x32xf32, #tpu.memory_space<vmem>>, vector<16x32xf32>
    %c0_295 = arith.constant 0 : index
    %c0_296 = arith.constant 0 : index
    %721 = vector.load %arg22[%c0_295, %c0_296] : memref<32x8xf32, #tpu.memory_space<vmem>>, vector<32x8xf32>
    %cst_297 = arith.constant dense<0.000000e+00> : vector<16x8xf32>
    %722 = tpu.matmul %720, %721, %cst_297 {dimension_numbers = #tpu.dot_dimension_numbers<[1], [0], [0], [1], [0, 0, 1, 1], [], []>} : vector<16x32xf32>, vector<32x8xf32>, vector<16x8xf32> -> vector<16x8xf32>
    %c0_298 = arith.constant 0 : index
    %c0_299 = arith.constant 0 : index
    %723 = vector.load %arg23[%c0_298, %c0_299] : memref<1x8xf32, #tpu.memory_space<vmem>>, vector<1x8xf32>
    %724 = vector.broadcast %723 : vector<1x8xf32> to vector<16x8xf32>
    %725 = arith.addf %722, %724 : vector<16x8xf32>
    %c0_300 = arith.constant 0 : index
    %c0_301 = arith.constant 0 : index
    %726 = vector.load %arg30[%c0_300, %c0_301] : memref<16x8xf32, #tpu.memory_space<vmem>>, vector<16x8xf32>
    tpu.vector_store %arg30[%c0_300, %c0_301], %725 {strides = array<i32>} : memref<16x8xf32, #tpu.memory_space<vmem>>, vector<16x8xf32>,
    %c0_302 = arith.constant 0 : index
    %c0_303 = arith.constant 0 : index
    %727 = vector.load %arg30[%c0_302, %c0_303] : memref<16x8xf32, #tpu.memory_space<vmem>>, vector<2x8xf32>
    %c2_304 = arith.constant 2 : index
    %c0_305 = arith.constant 0 : index
    %728 = vector.load %arg30[%c2_304, %c0_305] : memref<16x8xf32, #tpu.memory_space<vmem>>, vector<2x8xf32>
    %c4_306 = arith.constant 4 : index
    %c0_307 = arith.constant 0 : index
    %729 = vector.load %arg30[%c4_306, %c0_307] : memref<16x8xf32, #tpu.memory_space<vmem>>, vector<2x8xf32>
    %c6_308 = arith.constant 6 : index
    %c0_309 = arith.constant 0 : index
    %730 = vector.load %arg30[%c6_308, %c0_309] : memref<16x8xf32, #tpu.memory_space<vmem>>, vector<2x8xf32>
    %c8_310 = arith.constant 8 : index
    %c0_311 = arith.constant 0 : index
    %731 = vector.load %arg30[%c8_310, %c0_311] : memref<16x8xf32, #tpu.memory_space<vmem>>, vector<2x8xf32>
    %c10_312 = arith.constant 10 : index
    %c0_313 = arith.constant 0 : index
    %732 = vector.load %arg30[%c10_312, %c0_313] : memref<16x8xf32, #tpu.memory_space<vmem>>, vector<2x8xf32>
    %c12_314 = arith.constant 12 : index
    %c0_315 = arith.constant 0 : index
    %733 = vector.load %arg30[%c12_314, %c0_315] : memref<16x8xf32, #tpu.memory_space<vmem>>, vector<2x8xf32>
    %c14_316 = arith.constant 14 : index
    %c0_317 = arith.constant 0 : index
    %734 = vector.load %arg30[%c14_316, %c0_317] : memref<16x8xf32, #tpu.memory_space<vmem>>, vector<2x8xf32>
    %735 = tpu.concatenate %727, %728, %729, %730, %731, %732, %733, %734 in 1 : vector<2x8xf32>, vector<2x8xf32>, vector<2x8xf32>, vector<2x8xf32>, vector<2x8xf32>, vector<2x8xf32>, vector<2x8xf32>, vector<2x8xf32> -> vector<2x64xf32>
    %736 = vector.extract_strided_slice %735 {offsets = [0, 0], sizes = [2, 32], strides = [1, 1]} : vector<2x64xf32> to vector<2x32xf32>
    %737 = vector.extract_strided_slice %735 {offsets = [0, 32], sizes = [2, 32], strides = [1, 1]} : vector<2x64xf32> to vector<2x32xf32>
    %738 = arith.mulf %736, %736 : vector<2x32xf32>
    %739 = arith.mulf %737, %737 : vector<2x32xf32>
    %740 = arith.addf %738, %739 : vector<2x32xf32>
    %741 = tpu.concatenate %364, %736, %737, %740 in 1 : vector<2x32xf32>, vector<2x32xf32>, vector<2x32xf32>, vector<2x32xf32> -> vector<2x128xf32>
    %c0_318 = arith.constant 0 : index
    %c0_319 = arith.constant 0 : index
    %742 = vector.load %arg24[%c0_318, %c0_319] : memref<2x128xf32, #tpu.memory_space<vmem>>, vector<2x128xf32>
    tpu.vector_store %arg24[%c0_318, %c0_319], %741 {strides = array<i32>} : memref<2x128xf32, #tpu.memory_space<vmem>>, vector<2x128xf32>,
    return
  }
}

</mosaic_0001>

<llo_original>
// kernel: ciwlstm_forward.1
$region0: #{ciwlstm_forward.1}
  #allocation0 [shape = 'u32[]', space=smem, size = 0x4, offset = 0x4, fixed_abs, tag = 'smem constant byte address 0x4 - core index']
  #allocation1 [shape = 'u32[144,128]{1,0:T(1,128)}', space=vmem, size = 0x12000, scoped, tag = 'internal scratch']
  #allocation2 [shape = 'f32[16,32]{1,0:T(8,128)}', space=vmem, size = 0x2000, scoped, tag = 'scratch operand']
  #allocation3 [shape = 'f32[16,32]{1,0:T(8,128)}', space=vmem, size = 0x2000, scoped, tag = 'scratch operand']
  #allocation4 [shape = 'f32[16,128]{1,0:T(8,128)}', space=vmem, size = 0x2000, scoped, tag = 'scratch operand']
  #allocation5 [shape = 'f32[16,4]{1,0:T(8,128)}', space=vmem, size = 0x2000, scoped, tag = 'scratch operand']
  #allocation6 [shape = 'f32[16,4]{1,0:T(8,128)}', space=vmem, size = 0x2000, scoped, tag = 'scratch operand']
  #allocation7 [shape = 'f32[16,8]{1,0:T(8,128)}', space=vmem, size = 0x2000, scoped, tag = 'scratch operand']
  %s0 = inlined_call_operand.vmem [shape: f32[2,1], index: 0, kind: input, shape index: {}]
  %s1 = inlined_call_operand.vmem [shape: f32[16,4], index: 1, kind: input, shape index: {}]
  %s2 = inlined_call_operand.vmem [shape: f32[1,128], index: 2, kind: input, shape index: {}]
  %s3 = inlined_call_operand.vmem [shape: f32[4,128], index: 3, kind: input, shape index: {}]
  %s4 = inlined_call_operand.vmem [shape: f32[32,128], index: 4, kind: input, shape index: {}]
  %s5 = inlined_call_operand.hbm [shape: f32[1,128], index: 5, kind: input, shape index: {}]
  %s6 = inlined_call_operand.vmem [shape: f32[32,128], index: 6, kind: input, shape index: {}]
  %s7 = inlined_call_operand.vmem [shape: f32[32,128], index: 7, kind: input, shape index: {}]
  %s8 = inlined_call_operand.hbm [shape: f32[1,128], index: 8, kind: input, shape index: {}]
  %s9 = inlined_call_operand.vmem [shape: f32[32,4], index: 9, kind: input, shape index: {}]
  %s10 = inlined_call_operand.hbm [shape: f32[1,4], index: 10, kind: input, shape index: {}]
  %s11 = inlined_call_operand.vmem [shape: f32[32,32], index: 11, kind: input, shape index: {}]
  %s12 = inlined_call_operand.hbm [shape: f32[1,32], index: 12, kind: input, shape index: {}]
  %s13 = inlined_call_operand.hbm [shape: f32[1,32], index: 13, kind: input, shape index: {}]
  %s14 = inlined_call_operand.vmem [shape: f32[1,128], index: 14, kind: input, shape index: {}]
  %s15 = inlined_call_operand.vmem [shape: f32[4,128], index: 15, kind: input, shape index: {}]
  %s16 = inlined_call_operand.vmem [shape: f32[4,128], index: 16, kind: input, shape index: {}]
  %s17 = inlined_call_operand.vmem [shape: f32[32,128], index: 17, kind: input, shape index: {}]
  %s18 = inlined_call_operand.hbm [shape: f32[1,128], index: 18, kind: input, shape index: {}]
  %s19 = inlined_call_operand.vmem [shape: f32[32,128], index: 19, kind: input, shape index: {}]
  %s20 = inlined_call_operand.hbm [shape: f32[32,128], index: 20, kind: input, shape index: {}]
  %s21 = inlined_call_operand.hbm [shape: f32[1,128], index: 21, kind: input, shape index: {}]
  %s22 = inlined_call_operand.vmem [shape: f32[32,8], index: 22, kind: input, shape index: {}]
  %s23 = inlined_call_operand.hbm [shape: f32[1,8], index: 23, kind: input, shape index: {}]
  %s24 = inlined_call_operand.vmem [shape: f32[2,128], index: 24, kind: output, shape index: {}]
  %s25 = sld [smem:[#allocation0]]
  $region142: #{ciwlstm_forward.1} parent=0
    _
  %s27 = ssub.s32 1, %s25
  %s28 = scalar_select 0, %s27, %s25
  $region1: #{ciwlstm_forward.1} parent=0
    #allocation8 [shape = 'u8[512]{0}', space=vmem, size = 0x400, scoped, tag = 'input window, operand 5, single buffered']
    #allocation9 [shape = 's32[1]{0}', space=sflag, size = 0x4, scoped, tag = 'scoped memory for ciwlstm_forward.1']
    #allocation10 [shape = 'u8[512]{0}', space=vmem, size = 0x400, scoped, tag = 'input window, operand 8, single buffered']
    #allocation11 [shape = 's32[1]{0}', space=sflag, size = 0x4, scoped, tag = 'scoped memory for ciwlstm_forward.1']
    #allocation12 [shape = 'u8[512]{0}', space=vmem, size = 0x400, scoped, tag = 'input window, operand 10, single buffered']
    #allocation13 [shape = 'u8[512]{0}', space=vmem, size = 0x400, scoped, tag = 'input window, operand 12, single buffered']
    #allocation14 [shape = 's32[1]{0}', space=sflag, size = 0x4, scoped, tag = 'scoped memory for ciwlstm_forward.1']
    #allocation15 [shape = 'u8[512]{0}', space=vmem, size = 0x400, scoped, tag = 'input window, operand 13, single buffered']
    #allocation16 [shape = 'u8[512]{0}', space=vmem, size = 0x400, scoped, tag = 'input window, operand 18, single buffered']
    #allocation17 [shape = 's32[1]{0}', space=sflag, size = 0x4, scoped, tag = 'scoped memory for ciwlstm_forward.1']
    #allocation18 [shape = 'u8[16384]{0}', space=vmem, size = 0x4000, scoped, tag = 'input window, operand 20, single buffered']
    #allocation19 [shape = 'u8[512]{0}', space=vmem, size = 0x400, scoped, tag = 'input window, operand 21, single buffered']
    #allocation20 [shape = 's32[1]{0}', space=sflag, size = 0x4, scoped, tag = 'scoped memory for ciwlstm_forward.1']
    #allocation21 [shape = 'u8[512]{0}', space=vmem, size = 0x400, scoped, tag = 'input window, operand 23, single buffered']
    %29 = vsyncpa [#allocation9], 0
    %30 = vsyncpa [#allocation11], 0
    %31 = vsyncpa [#allocation14], 0
    %32 = vsyncpa [#allocation17], 0
    %33 = vsyncpa [#allocation20], 0
    // Predicated region
    $region2: #{ciwlstm_forward.1} parent=1 // pred_check
      _
    $region3: #{ciwlstm_forward.1} parent=1 // pred_check_branch
      %35 = sbr.rel (0) target = $region5
    $region4: #{ciwlstm_forward.1} parent=1 // pred_region
      _
    $region5: #{ciwlstm_forward.1} parent=1 // pred_fallthru
      _
    // Predicated region
    $region6: #{ciwlstm_forward.1} parent=1 // pred_check
      _
    $region7: #{ciwlstm_forward.1} parent=1 // pred_check_branch
      %37 = sbr.rel (0) target = $region9
    $region8: #{ciwlstm_forward.1} parent=1 // pred_region
      _
    $region9: #{ciwlstm_forward.1} parent=1 // pred_fallthru
      _
    // Predicated region
    $region10: #{ciwlstm_forward.1} parent=1 // pred_check
      _
    $region11: #{ciwlstm_forward.1} parent=1 // pred_check_branch
      %39 = sbr.rel (0) target = $region13
    $region12: #{ciwlstm_forward.1} parent=1 // pred_region
      _
    $region13: #{ciwlstm_forward.1} parent=1 // pred_fallthru
      _
    // Predicated region
    $region14: #{ciwlstm_forward.1} parent=1 // pred_check
      _
    $region15: #{ciwlstm_forward.1} parent=1 // pred_check_branch
      %41 = sbr.rel (0) target = $region17
    $region16: #{ciwlstm_forward.1} parent=1 // pred_region
      _
    $region17: #{ciwlstm_forward.1} parent=1 // pred_fallthru
      _
    // Predicated region
    $region18: #{ciwlstm_forward.1} parent=1 // pred_check
      _
    $region19: #{ciwlstm_forward.1} parent=1 // pred_check_branch
      %43 = sbr.rel (0) target = $region21
    $region20: #{ciwlstm_forward.1} parent=1 // pred_region
      _
    $region21: #{ciwlstm_forward.1} parent=1 // pred_fallthru
      _
    // Predicated region
    $region22: #{ciwlstm_forward.1} parent=1 // pred_check
      _
    $region23: #{ciwlstm_forward.1} parent=1 // pred_check_branch
      %45 = sbr.rel (0) target = $region25
    $region24: #{ciwlstm_forward.1} parent=1 // pred_region
      %s47 = ssub.s32 16, 16
      %48 = vsyncadd [#allocation9], %s47
      %s50 = sshll.u32 [#allocation8], 4
      %s51 = int_to_ptr.vmem [resolvable:$true] %s50
      %53 = dma.hbm_to_vmem [thread:$0]  %s5, 16, %s51, [#allocation9]
    $region25: #{ciwlstm_forward.1} parent=1 // pred_fallthru
      _
    // Predicated region
    $region26: #{ciwlstm_forward.1} parent=1 // pred_check
      _
    $region27: #{ciwlstm_forward.1} parent=1 // pred_check_branch
      %55 = sbr.rel (0) target = $region29
    $region28: #{ciwlstm_forward.1} parent=1 // pred_region
      _
    $region29: #{ciwlstm_forward.1} parent=1 // pred_fallthru
      _
    // Predicated region
    $region30: #{ciwlstm_forward.1} parent=1 // pred_check
      _
    $region31: #{ciwlstm_forward.1} parent=1 // pred_check_branch
      %57 = sbr.rel (0) target = $region33
    $region32: #{ciwlstm_forward.1} parent=1 // pred_region
      _
    $region33: #{ciwlstm_forward.1} parent=1 // pred_fallthru
      _
    // Predicated region
    $region34: #{ciwlstm_forward.1} parent=1 // pred_check
      _
    $region35: #{ciwlstm_forward.1} parent=1 // pred_check_branch
      %59 = sbr.rel (0) target = $region37
    $region36: #{ciwlstm_forward.1} parent=1 // pred_region
      %s61 = ssub.s32 16, 16
      %62 = vsyncadd [#allocation11], %s61
      %s64 = sshll.u32 [#allocation10], 4
      %s65 = int_to_ptr.vmem [resolvable:$true] %s64
      %67 = dma.hbm_to_vmem [thread:$0]  %s8, 16, %s65, [#allocation11]
    $region37: #{ciwlstm_forward.1} parent=1 // pred_fallthru
      _
    // Predicated region
    $region38: #{ciwlstm_forward.1} parent=1 // pred_check
      _
    $region39: #{ciwlstm_forward.1} parent=1 // pred_check_branch
      %69 = sbr.rel (0) target = $region41
    $region40: #{ciwlstm_forward.1} parent=1 // pred_region
      _
    $region41: #{ciwlstm_forward.1} parent=1 // pred_fallthru
      _
    // Predicated region
    $region42: #{ciwlstm_forward.1} parent=1 // pred_check
      _
    $region43: #{ciwlstm_forward.1} parent=1 // pred_check_branch
      %71 = sbr.rel (0) target = $region45
    $region44: #{ciwlstm_forward.1} parent=1 // pred_region
      %s73 = ssub.s32 16, 16
      %74 = vsyncadd [#allocation11], %s73
      %s76 = sshll.u32 [#allocation12], 4
      %s77 = int_to_ptr.vmem [resolvable:$true] %s76
      %79 = dma.hbm_to_vmem [thread:$0]  %s10, 16, %s77, [#allocation11]
    $region45: #{ciwlstm_forward.1} parent=1 // pred_fallthru
      _
    // Predicated region
    $region46: #{ciwlstm_forward.1} parent=1 // pred_check
      _
    $region47: #{ciwlstm_forward.1} parent=1 // pred_check_branch
      %81 = sbr.rel (0) target = $region49
    $region48: #{ciwlstm_forward.1} parent=1 // pred_region
      _
    $region49: #{ciwlstm_forward.1} parent=1 // pred_fallthru
      _
    // Predicated region
    $region50: #{ciwlstm_forward.1} parent=1 // pred_check
      _
    $region51: #{ciwlstm_forward.1} parent=1 // pred_check_branch
      %83 = sbr.rel (0) target = $region53
    $region52: #{ciwlstm_forward.1} parent=1 // pred_region
      %s85 = ssub.s32 16, 16
      %86 = vsyncadd [#allocation14], %s85
      %s88 = sshll.u32 [#allocation13], 4
      %s89 = int_to_ptr.vmem [resolvable:$true] %s88
      %91 = dma.hbm_to_vmem [thread:$0]  %s12, 16, %s89, [#allocation14]
    $region53: #{ciwlstm_forward.1} parent=1 // pred_fallthru
      _
    // Predicated region
    $region54: #{ciwlstm_forward.1} parent=1 // pred_check
      _
    $region55: #{ciwlstm_forward.1} parent=1 // pred_check_branch
      %93 = sbr.rel (0) target = $region57
    $region56: #{ciwlstm_forward.1} parent=1 // pred_region
      %s95 = ssub.s32 16, 16
      %96 = vsyncadd [#allocation14], %s95
      %s98 = sshll.u32 [#allocation15], 4
      %s99 = int_to_ptr.vmem [resolvable:$true] %s98
      %101 = dma.hbm_to_vmem [thread:$0]  %s13, 16, %s99, [#allocation14]
    $region57: #{ciwlstm_forward.1} parent=1 // pred_fallthru
      _
    // Predicated region
    $region58: #{ciwlstm_forward.1} parent=1 // pred_check
      _
    $region59: #{ciwlstm_forward.1} parent=1 // pred_check_branch
      %103 = sbr.rel (0) target = $region61
    $region60: #{ciwlstm_forward.1} parent=1 // pred_region
      _
    $region61: #{ciwlstm_forward.1} parent=1 // pred_fallthru
      _
    // Predicated region
    $region62: #{ciwlstm_forward.1} parent=1 // pred_check
      _
    $region63: #{ciwlstm_forward.1} parent=1 // pred_check_branch
      %105 = sbr.rel (0) target = $region65
    $region64: #{ciwlstm_forward.1} parent=1 // pred_region
      _
    $region65: #{ciwlstm_forward.1} parent=1 // pred_fallthru
      _
    // Predicated region
    $region66: #{ciwlstm_forward.1} parent=1 // pred_check
      _
    $region67: #{ciwlstm_forward.1} parent=1 // pred_check_branch
      %107 = sbr.rel (0) target = $region69
    $region68: #{ciwlstm_forward.1} parent=1 // pred_region
      _
    $region69: #{ciwlstm_forward.1} parent=1 // pred_fallthru
      _
    // Predicated region
    $region70: #{ciwlstm_forward.1} parent=1 // pred_check
      _
    $region71: #{ciwlstm_forward.1} parent=1 // pred_check_branch
      %109 = sbr.rel (0) target = $region73
    $region72: #{ciwlstm_forward.1} parent=1 // pred_region
      _
    $region73: #{ciwlstm_forward.1} parent=1 // pred_fallthru
      _
    // Predicated region
    $region74: #{ciwlstm_forward.1} parent=1 // pred_check
      _
    $region75: #{ciwlstm_forward.1} parent=1 // pred_check_branch
      %111 = sbr.rel (0) target = $region77
    $region76: #{ciwlstm_forward.1} parent=1 // pred_region
      %s113 = ssub.s32 16, 16
      %114 = vsyncadd [#allocation17], %s113
      %s116 = sshll.u32 [#allocation16], 4
      %s117 = int_to_ptr.vmem [resolvable:$true] %s116
      %119 = dma.hbm_to_vmem [thread:$0]  %s18, 16, %s117, [#allocation17]
    $region77: #{ciwlstm_forward.1} parent=1 // pred_fallthru
      _
    // Predicated region
    $region78: #{ciwlstm_forward.1} parent=1 // pred_check
      _
    $region79: #{ciwlstm_forward.1} parent=1 // pred_check_branch
      %121 = sbr.rel (0) target = $region81
    $region80: #{ciwlstm_forward.1} parent=1 // pred_region
      _
    $region81: #{ciwlstm_forward.1} parent=1 // pred_fallthru
      _
    // Predicated region
    $region82: #{ciwlstm_forward.1} parent=1 // pred_check
      _
    $region83: #{ciwlstm_forward.1} parent=1 // pred_check_branch
      %123 = sbr.rel (0) target = $region85
    $region84: #{ciwlstm_forward.1} parent=1 // pred_region
      %s125 = ssub.s32 512, 512
      %126 = vsyncadd [#allocation17], %s125
      %s127 = sshll.u32 [#allocation18], 4
      %s128 = int_to_ptr.vmem [resolvable:$true] %s127
      %133 = dma.hbm_to_vmem [thread:$0]  %s20, 512, %s128, [#allocation17], 128, 128, 8
    $region85: #{ciwlstm_forward.1} parent=1 // pred_fallthru
      _
    // Predicated region
    $region86: #{ciwlstm_forward.1} parent=1 // pred_check
      _
    $region87: #{ciwlstm_forward.1} parent=1 // pred_check_branch
      %135 = sbr.rel (0) target = $region89
    $region88: #{ciwlstm_forward.1} parent=1 // pred_region
      %s137 = ssub.s32 16, 16
      %138 = vsyncadd [#allocation20], %s137
      %s140 = sshll.u32 [#allocation19], 4
      %s141 = int_to_ptr.vmem [resolvable:$true] %s140
      %143 = dma.hbm_to_vmem [thread:$0]  %s21, 16, %s141, [#allocation20]
    $region89: #{ciwlstm_forward.1} parent=1 // pred_fallthru
      _
    // Predicated region
    $region90: #{ciwlstm_forward.1} parent=1 // pred_check
      _
    $region91: #{ciwlstm_forward.1} parent=1 // pred_check_branch
      %145 = sbr.rel (0) target = $region93
    $region92: #{ciwlstm_forward.1} parent=1 // pred_region
      _
    $region93: #{ciwlstm_forward.1} parent=1 // pred_fallthru
      _
    // Predicated region
    $region94: #{ciwlstm_forward.1} parent=1 // pred_check
      _
    $region95: #{ciwlstm_forward.1} parent=1 // pred_check_branch
      %147 = sbr.rel (0) target = $region97
    $region96: #{ciwlstm_forward.1} parent=1 // pred_region
      %s149 = ssub.s32 16, 16
      %150 = vsyncadd [#allocation20], %s149
      %s152 = sshll.u32 [#allocation21], 4
      %s153 = int_to_ptr.vmem [resolvable:$true] %s152
      %155 = dma.hbm_to_vmem [thread:$0]  %s23, 16, %s153, [#allocation20]
    $region97: #{ciwlstm_forward.1} parent=1 // pred_fallthru
      _
    // Predicated region
    $region98: #{ciwlstm_forward.1} parent=1 // pred_check
      _
    $region99: #{ciwlstm_forward.1} parent=1 // pred_check_branch
      %157 = sbr.rel (0) target = $region101
    $region100: #{ciwlstm_forward.1} parent=1 // pred_region
      %158 = dma.done [#allocation9], 16
    $region101: #{ciwlstm_forward.1} parent=1 // pred_fallthru
      _
    // Predicated region
    $region102: #{ciwlstm_forward.1} parent=1 // pred_check
      _
    $region103: #{ciwlstm_forward.1} parent=1 // pred_check_branch
      %160 = sbr.rel (0) target = $region105
    $region104: #{ciwlstm_forward.1} parent=1 // pred_region
      %161 = dma.done [#allocation11], 16
    $region105: #{ciwlstm_forward.1} parent=1 // pred_fallthru
      _
    // Predicated region
    $region106: #{ciwlstm_forward.1} parent=1 // pred_check
      _
    $region107: #{ciwlstm_forward.1} parent=1 // pred_check_branch
      %163 = sbr.rel (0) target = $region109
    $region108: #{ciwlstm_forward.1} parent=1 // pred_region
      %164 = dma.done [#allocation11], 16
    $region109: #{ciwlstm_forward.1} parent=1 // pred_fallthru
      _
    // Predicated region
    $region110: #{ciwlstm_forward.1} parent=1 // pred_check
      _
    $region111: #{ciwlstm_forward.1} parent=1 // pred_check_branch
      %166 = sbr.rel (0) target = $region113
    $region112: #{ciwlstm_forward.1} parent=1 // pred_region
      %167 = dma.done [#allocation14], 16
    $region113: #{ciwlstm_forward.1} parent=1 // pred_fallthru
      _
    // Predicated region
    $region114: #{ciwlstm_forward.1} parent=1 // pred_check
      _
    $region115: #{ciwlstm_forward.1} parent=1 // pred_check_branch
      %169 = sbr.rel (0) target = $region117
    $region116: #{ciwlstm_forward.1} parent=1 // pred_region
      %170 = dma.done [#allocation14], 16
    $region117: #{ciwlstm_forward.1} parent=1 // pred_fallthru
      _
    // Predicated region
    $region118: #{ciwlstm_forward.1} parent=1 // pred_check
      _
    $region119: #{ciwlstm_forward.1} parent=1 // pred_check_branch
      %172 = sbr.rel (0) target = $region121
    $region120: #{ciwlstm_forward.1} parent=1 // pred_region
      %173 = dma.done [#allocation17], 16
    $region121: #{ciwlstm_forward.1} parent=1 // pred_fallthru
      _
    // Predicated region
    $region122: #{ciwlstm_forward.1} parent=1 // pred_check
      _
    $region123: #{ciwlstm_forward.1} parent=1 // pred_check_branch
      %175 = sbr.rel (0) target = $region125
    $region124: #{ciwlstm_forward.1} parent=1 // pred_region
      %176 = dma.done [#allocation17], 512
    $region125: #{ciwlstm_forward.1} parent=1 // pred_fallthru
      _
    // Predicated region
    $region126: #{ciwlstm_forward.1} parent=1 // pred_check
      _
    $region127: #{ciwlstm_forward.1} parent=1 // pred_check_branch
      %178 = sbr.rel (0) target = $region129
    $region128: #{ciwlstm_forward.1} parent=1 // pred_region
      %179 = dma.done [#allocation20], 16
    $region129: #{ciwlstm_forward.1} parent=1 // pred_fallthru
      _
    // Predicated region
    $region130: #{ciwlstm_forward.1} parent=1 // pred_check
      _
    $region131: #{ciwlstm_forward.1} parent=1 // pred_check_branch
      %181 = sbr.rel (0) target = $region133
    $region132: #{ciwlstm_forward.1} parent=1 // pred_region
      %182 = dma.done [#allocation20], 16
    $region133: #{ciwlstm_forward.1} parent=1 // pred_fallthru
      _
    %v183 = vld [vmem:[%s0] sm:$0x3]
    %v184 = vld [vmem:[%s1] sm:$0xff]
    %v185 = vld [vmem:[%s1 + $0x8] sm:$0xff]
    %v186 = vld [vmem:[%s3] sm:$0xf]
    %v187 = vld [vmem:[#allocation8] sm:$0x1]
    %v189 = vlaneseq
    %v190 = vshrl.u32 %v189, 7
    %v191 = vsub.s32 0, %v190
    %v192 = vrot.slane %v187, %v191
    %vm194 = vcmask 31744
    %v196 = vsel %vm194, %v184, 0
    %v199 = vsel %vm194, %v185, 0
    %vm201 = vcmask 1043456
    %v203 = vsel %vm201, %v186, 0
    %205 = vmatprep.subr.mxu0 0.0
    %206 = vmatpush1.msra.mxu0 %v203
    %207 = vmatprep.subr.mxu0 0.0
    %208 = vmatpush1.msra.mxu0 0.0
    %209 = vmatprep.subr.mxu0 0.0
    %210 = vmatpush1.msra.mxu0 0.0
    %211 = vmatprep.subr.mxu0 0.0
    %212 = vmatpush1.msra.mxu0 0.0
    %213 = vmatprep.subr.mxu0 0.0
    %214 = vmatpush1.msra.mxu0 0.0
    %215 = vmatprep.subr.mxu0 0.0
    %216 = vmatpush1.msra.mxu0 0.0
    %217 = vmatprep.subr.mxu0 0.0
    %218 = vmatpush1.msra.mxu0 0.0
    %219 = vmatprep.subr.mxu0 0.0
    %220 = vmatpush1.msra.mxu0 0.0
    %221 = vmatprep.subr.mxu0 0.0
    %222 = vmatpush1.msra.mxu0 0.0
    %223 = vmatprep.subr.mxu0 0.0
    %224 = vmatpush1.msra.mxu0 0.0
    %225 = vmatprep.subr.mxu0 0.0
    %226 = vmatpush1.msra.mxu0 0.0
    %227 = vmatprep.subr.mxu0 0.0
    %228 = vmatpush1.msra.mxu0 0.0
    %229 = vmatprep.subr.mxu0 0.0
    %230 = vmatpush1.msra.mxu0 0.0
    %231 = vmatprep.subr.mxu0 0.0
    %232 = vmatpush1.msra.mxu0 0.0
    %233 = vmatprep.subr.mxu0 0.0
    %234 = vmatpush1.msra.mxu0 0.0
    %235 = vmatprep.subr.mxu0 0.0
    %236 = vmatpush1.msra.mxu0 0.0
    %237 = vmatprep.subr.mxu0 0.0
    %238 = vmatpush1.msra.mxu0 0.0
    %239 = vmatprep.subr.mxu0 0.0
    %240 = vmatpush1.msra.mxu0 0.0
    %241 = vmatprep.subr.mxu0 0.0
    %242 = vmatpush1.msra.mxu0 0.0
    %243 = vmatprep.subr.mxu0 0.0
    %244 = vmatpush1.msra.mxu0 0.0
    %245 = vmatprep.subr.mxu0 0.0
    %246 = vmatpush1.msra.mxu0 0.0
    %247 = vmatprep.subr.mxu0 0.0
    %248 = vmatpush1.msra.mxu0 0.0
    %249 = vmatprep.subr.mxu0 0.0
    %250 = vmatpush1.msra.mxu0 0.0
    %251 = vmatprep.subr.mxu0 0.0
    %252 = vmatpush1.msra.mxu0 0.0
    %253 = vmatprep.subr.mxu0 0.0
    %254 = vmatpush1.msra.mxu0 0.0
    %255 = vmatprep.subr.mxu0 0.0
    %256 = vmatpush1.msra.mxu0 0.0
    %257 = vmatprep.subr.mxu0 0.0
    %258 = vmatpush1.msra.mxu0 0.0
    %259 = vmatprep.subr.mxu0 0.0
    %260 = vmatpush1.msra.mxu0 0.0
    %261 = vmatprep.subr.mxu0 0.0
    %262 = vmatpush1.msra.mxu0 0.0
    %263 = vmatprep.subr.mxu0 0.0
    %264 = vmatpush1.msra.mxu0 0.0
    %265 = vmatprep.subr.mxu0 0.0
    %266 = vmatpush1.msra.mxu0 0.0
    %267 = vmatprep.subr.mxu0 0.0
    %268 = vmatpush1.msra.mxu0 0.0
    %269 = vmatprep.mubr.f32.mxu0 0.0
    %270 = vmatmul.mubr.f32.gmra.mrb[0].mxu0 %v196
    %v271 = vpop.f32.mrb[0].mxu0
    %v272 = vadd.f32 %v192, %v271
    %v273 = vpop.f32.mrb[0].mxu0
    %274 = vmatprep.mubr.f32.mxu0 0.0
    %275 = vmatmul.mubr.f32.gmra.mrb[0].mxu0 %v199
    %v276 = vpop.f32.mrb[0].mxu0
    %v277 = vadd.f32 %v192, %v276
    %v278 = vpop.f32.mrb[0].mxu0
    %279 = vdwg.mxu0
    %280 = vst [vmem:[#allocation4] sm:$0xff] %v272
    %281 = vst [vmem:[#allocation4 + $0x8] sm:$0xff] %v277
    %v282 = vld [vmem:[%s2] sm:$0x1]
    %284 = vset.pattern.permute.xlu0 0
    %285 = vperm.xlu0 %284, %v183
    %v286 = vpop.permute.xlu0 %285
    %v289 = vlaneseq
    %v290 = vshrl.u32 %v289, 7
    %v291 = vsub.s32 0, %v290
    %v292 = vrot.slane %v282, %v291
    %v294 = vmul.f32 %v286, %v292
    %v295 = vld [vmem:[%s4] sm:$0xff]
    %v296 = vld [vmem:[%s4 + $0x8] sm:$0xff]
    %v297 = vld [vmem:[%s4 + $0x10] sm:$0xff]
    %v298 = vld [vmem:[%s4 + $0x18] sm:$0xff]
    %v299 = vld [vmem:[#allocation4] sm:$0x3]
    %vm300 = vcmask 261120
    %v302 = vsel %vm300, 0.0, 0
    %304 = vmatprep.subr.mxu0 0.0
    %305 = vmatpush1.msra.mxu0 %v295
    %306 = vmatprep.subr.mxu0 0.0
    %307 = vmatpush1.msra.mxu0 %v296
    %308 = vmatprep.subr.mxu0 0.0
    %309 = vmatpush1.msra.mxu0 %v297
    %310 = vmatprep.subr.mxu0 0.0
    %311 = vmatpush1.msra.mxu0 %v298
    %312 = vmatprep.subr.mxu0 0.0
    %313 = vmatpush1.msra.mxu0 0.0
    %314 = vmatprep.subr.mxu0 0.0
    %315 = vmatpush1.msra.mxu0 0.0
    %316 = vmatprep.subr.mxu0 0.0
    %317 = vmatpush1.msra.mxu0 0.0
    %318 = vmatprep.subr.mxu0 0.0
    %319 = vmatpush1.msra.mxu0 0.0
    %320 = vmatprep.subr.mxu0 0.0
    %321 = vmatpush1.msra.mxu0 0.0
    %322 = vmatprep.subr.mxu0 0.0
    %323 = vmatpush1.msra.mxu0 0.0
    %324 = vmatprep.subr.mxu0 0.0
    %325 = vmatpush1.msra.mxu0 0.0
    %326 = vmatprep.subr.mxu0 0.0
    %327 = vmatpush1.msra.mxu0 0.0
    %328 = vmatprep.subr.mxu0 0.0
    %329 = vmatpush1.msra.mxu0 0.0
    %330 = vmatprep.subr.mxu0 0.0
    %331 = vmatpush1.msra.mxu0 0.0
    %332 = vmatprep.subr.mxu0 0.0
    %333 = vmatpush1.msra.mxu0 0.0
    %334 = vmatprep.subr.mxu0 0.0
    %335 = vmatpush1.msra.mxu0 0.0
    %336 = vmatprep.subr.mxu0 0.0
    %337 = vmatpush1.msra.mxu0 0.0
    %338 = vmatprep.subr.mxu0 0.0
    %339 = vmatpush1.msra.mxu0 0.0
    %340 = vmatprep.subr.mxu0 0.0
    %341 = vmatpush1.msra.mxu0 0.0
    %342 = vmatprep.subr.mxu0 0.0
    %343 = vmatpush1.msra.mxu0 0.0
    %344 = vmatprep.subr.mxu0 0.0
    %345 = vmatpush1.msra.mxu0 0.0
    %346 = vmatprep.subr.mxu0 0.0
    %347 = vmatpush1.msra.mxu0 0.0
    %348 = vmatprep.subr.mxu0 0.0
    %349 = vmatpush1.msra.mxu0 0.0
    %350 = vmatprep.subr.mxu0 0.0
    %351 = vmatpush1.msra.mxu0 0.0
    %352 = vmatprep.subr.mxu0 0.0
    %353 = vmatpush1.msra.mxu0 0.0
    %354 = vmatprep.subr.mxu0 0.0
    %355 = vmatpush1.msra.mxu0 0.0
    %356 = vmatprep.subr.mxu0 0.0
    %357 = vmatpush1.msra.mxu0 0.0
    %358 = vmatprep.subr.mxu0 0.0
    %359 = vmatpush1.msra.mxu0 0.0
    %360 = vmatprep.subr.mxu0 0.0
    %361 = vmatpush1.msra.mxu0 0.0
    %362 = vmatprep.subr.mxu0 0.0
    %363 = vmatpush1.msra.mxu0 0.0
    %364 = vmatprep.subr.mxu0 0.0
    %365 = vmatpush1.msra.mxu0 0.0
    %366 = vmatprep.subr.mxu0 0.0
    %367 = vmatpush1.msra.mxu0 0.0
    %368 = vmatprep.mubr.f32.mxu0 0.0
    %369 = vmatmul.mubr.f32.gmra.mrb[0].mxu0 %v302
    %v370 = vpop.f32.mrb[0].mxu0
    %v371 = vadd.f32 0.0, %v370
    %v372 = vpop.f32.mrb[0].mxu0
    %373 = vdwg.mxu0
    %v374 = vadd.f32 %v299, %v371
    %v375 = vadd.f32 %v374, %v294
    %v376 = vxor.u32 %v375, 2147483648
    %v377 = vmul.f32 %v376, 1.442695
    %v378 = vpow.pop %v377
    %v379 = vadd.f32 %v378, 1.0
    %v380 = vrcp.pop %v379
    %v381 = vmul.f32 1.0, %v380
    %v382 = vtanh.pop %v375
    %v383 = vmul.f32 %v381, 0.0
    %385 = vrot.lane.b32.xlu0 %v382, 64
    %v386 = vpop.permute.xlu0 %385
    %v388 = vmul.f32 %v381, %v386
    %390 = vrot.lane.b32.xlu0 %v388, 32
    %v391 = vpop.permute.xlu0 %390
    %v393 = vadd.f32 %v383, %v391
    %v394 = vtanh.pop %v393
    %396 = vrot.lane.b32.xlu0 %v394, 64
    %v397 = vpop.permute.xlu0 %396
    %v399 = vmul.f32 %v381, %v397
    %401 = vrot.lane.b32.xlu0 %v399, 32
    %v402 = vpop.permute.xlu0 %401
    %vm404 = vcmask 254976
    %405 = vst.msk [vmem:[#allocation2] sm:$0x3] %vm404, %v402
    %v406 = vld [vmem:[#allocation4 + $0x2] sm:$0x3]
    %v407 = vsel %vm300, %v402, 0
    %409 = vmatprep.subr.mxu0 0.0
    %410 = vmatpush1.msra.mxu0 %v295
    %411 = vmatprep.subr.mxu0 0.0
    %412 = vmatpush1.msra.mxu0 %v296
    %413 = vmatprep.subr.mxu0 0.0
    %414 = vmatpush1.msra.mxu0 %v297
    %415 = vmatprep.subr.mxu0 0.0
    %416 = vmatpush1.msra.mxu0 %v298
    %417 = vmatprep.subr.mxu0 0.0
    %418 = vmatpush1.msra.mxu0 0.0
    %419 = vmatprep.subr.mxu0 0.0
    %420 = vmatpush1.msra.mxu0 0.0
    %421 = vmatprep.subr.mxu0 0.0
    %422 = vmatpush1.msra.mxu0 0.0
    %423 = vmatprep.subr.mxu0 0.0
    %424 = vmatpush1.msra.mxu0 0.0
    %425 = vmatprep.subr.mxu0 0.0
    %426 = vmatpush1.msra.mxu0 0.0
    %427 = vmatprep.subr.mxu0 0.0
    %428 = vmatpush1.msra.mxu0 0.0
    %429 = vmatprep.subr.mxu0 0.0
    %430 = vmatpush1.msra.mxu0 0.0
    %431 = vmatprep.subr.mxu0 0.0
    %432 = vmatpush1.msra.mxu0 0.0
    %433 = vmatprep.subr.mxu0 0.0
    %434 = vmatpush1.msra.mxu0 0.0
    %435 = vmatprep.subr.mxu0 0.0
    %436 = vmatpush1.msra.mxu0 0.0
    %437 = vmatprep.subr.mxu0 0.0
    %438 = vmatpush1.msra.mxu0 0.0
    %439 = vmatprep.subr.mxu0 0.0
    %440 = vmatpush1.msra.mxu0 0.0
    %441 = vmatprep.subr.mxu0 0.0
    %442 = vmatpush1.msra.mxu0 0.0
    %443 = vmatprep.subr.mxu0 0.0
    %444 = vmatpush1.msra.mxu0 0.0
    %445 = vmatprep.subr.mxu0 0.0
    %446 = vmatpush1.msra.mxu0 0.0
    %447 = vmatprep.subr.mxu0 0.0
    %448 = vmatpush1.msra.mxu0 0.0
    %449 = vmatprep.subr.mxu0 0.0
    %450 = vmatpush1.msra.mxu0 0.0
    %451 = vmatprep.subr.mxu0 0.0
    %452 = vmatpush1.msra.mxu0 0.0
    %453 = vmatprep.subr.mxu0 0.0
    %454 = vmatpush1.msra.mxu0 0.0
    %455 = vmatprep.subr.mxu0 0.0
    %456 = vmatpush1.msra.mxu0 0.0
    %457 = vmatprep.subr.mxu0 0.0
    %458 = vmatpush1.msra.mxu0 0.0
    %459 = vmatprep.subr.mxu0 0.0
    %460 = vmatpush1.msra.mxu0 0.0
    %461 = vmatprep.subr.mxu0 0.0
    %462 = vmatpush1.msra.mxu0 0.0
    %463 = vmatprep.subr.mxu0 0.0
    %464 = vmatpush1.msra.mxu0 0.0
    %465 = vmatprep.subr.mxu0 0.0
    %466 = vmatpush1.msra.mxu0 0.0
    %467 = vmatprep.subr.mxu0 0.0
    %468 = vmatpush1.msra.mxu0 0.0
    %469 = vmatprep.subr.mxu0 0.0
    %470 = vmatpush1.msra.mxu0 0.0
    %471 = vmatprep.subr.mxu0 0.0
    %472 = vmatpush1.msra.mxu0 0.0
    %473 = vmatprep.mubr.f32.mxu0 0.0
    %474 = vmatmul.mubr.f32.gmra.mrb[0].mxu0 %v407
    %v475 = vpop.f32.mrb[0].mxu0
    %v476 = vadd.f32 0.0, %v475
    %v477 = vpop.f32.mrb[0].mxu0
    %478 = vdwg.mxu0
    %v479 = vadd.f32 %v406, %v476
    %v480 = vadd.f32 %v479, %v294
    %v481 = vxor.u32 %v480, 2147483648
    %v482 = vmul.f32 %v481, 1.442695
    %v483 = vpow.pop %v482
    %v484 = vadd.f32 %v483, 1.0
    %v485 = vrcp.pop %v484
    %v486 = vmul.f32 1.0, %v485
    %v487 = vtanh.pop %v480
    %v488 = vmul.f32 %v486, %v393
    %490 = vrot.lane.b32.xlu0 %v487, 64
    %v491 = vpop.permute.xlu0 %490
    %v493 = vmul.f32 %v486, %v491
    %495 = vrot.lane.b32.xlu0 %v493, 32
    %v496 = vpop.permute.xlu0 %495
    %v498 = vadd.f32 %v488, %v496
    %v499 = vtanh.pop %v498
    %501 = vrot.lane.b32.xlu0 %v499, 64
    %v502 = vpop.permute.xlu0 %501
    %v504 = vmul.f32 %v486, %v502
    %506 = vrot.lane.b32.xlu0 %v504, 32
    %v507 = vpop.permute.xlu0 %506
    %509 = vst.msk [vmem:[#allocation2 + $0x2] sm:$0x3] %vm404, %v507
    %v510 = vld [vmem:[#allocation4 + $0x4] sm:$0x3]
    %v511 = vsel %vm300, %v507, 0
    %513 = vmatprep.subr.mxu0 0.0
    %514 = vmatpush1.msra.mxu0 %v295
    %515 = vmatprep.subr.mxu0 0.0
    %516 = vmatpush1.msra.mxu0 %v296
    %517 = vmatprep.subr.mxu0 0.0
    %518 = vmatpush1.msra.mxu0 %v297
    %519 = vmatprep.subr.mxu0 0.0
    %520 = vmatpush1.msra.mxu0 %v298
    %521 = vmatprep.subr.mxu0 0.0
    %522 = vmatpush1.msra.mxu0 0.0
    %523 = vmatprep.subr.mxu0 0.0
    %524 = vmatpush1.msra.mxu0 0.0
    %525 = vmatprep.subr.mxu0 0.0
    %526 = vmatpush1.msra.mxu0 0.0
    %527 = vmatprep.subr.mxu0 0.0
    %528 = vmatpush1.msra.mxu0 0.0
    %529 = vmatprep.subr.mxu0 0.0
    %530 = vmatpush1.msra.mxu0 0.0
    %531 = vmatprep.subr.mxu0 0.0
    %532 = vmatpush1.msra.mxu0 0.0
    %533 = vmatprep.subr.mxu0 0.0
    %534 = vmatpush1.msra.mxu0 0.0
    %535 = vmatprep.subr.mxu0 0.0
    %536 = vmatpush1.msra.mxu0 0.0
    %537 = vmatprep.subr.mxu0 0.0
    %538 = vmatpush1.msra.mxu0 0.0
    %539 = vmatprep.subr.mxu0 0.0
    %540 = vmatpush1.msra.mxu0 0.0
    %541 = vmatprep.subr.mxu0 0.0
    %542 = vmatpush1.msra.mxu0 0.0
    %543 = vmatprep.subr.mxu0 0.0
    %544 = vmatpush1.msra.mxu0 0.0
    %545 = vmatprep.subr.mxu0 0.0
    %546 = vmatpush1.msra.mxu0 0.0
    %547 = vmatprep.subr.mxu0 0.0
    %548 = vmatpush1.msra.mxu0 0.0
    %549 = vmatprep.subr.mxu0 0.0
    %550 = vmatpush1.msra.mxu0 0.0
    %551 = vmatprep.subr.mxu0 0.0
    %552 = vmatpush1.msra.mxu0 0.0
    %553 = vmatprep.subr.mxu0 0.0
    %554 = vmatpush1.msra.mxu0 0.0
    %555 = vmatprep.subr.mxu0 0.0
    %556 = vmatpush1.msra.mxu0 0.0
    %557 = vmatprep.subr.mxu0 0.0
    %558 = vmatpush1.msra.mxu0 0.0
    %559 = vmatprep.subr.mxu0 0.0
    %560 = vmatpush1.msra.mxu0 0.0
    %561 = vmatprep.subr.mxu0 0.0
    %562 = vmatpush1.msra.mxu0 0.0
    %563 = vmatprep.subr.mxu0 0.0
    %564 = vmatpush1.msra.mxu0 0.0
    %565 = vmatprep.subr.mxu0 0.0
    %566 = vmatpush1.msra.mxu0 0.0
    %567 = vmatprep.subr.mxu0 0.0
    %568 = vmatpush1.msra.mxu0 0.0
    %569 = vmatprep.subr.mxu0 0.0
    %570 = vmatpush1.msra.mxu0 0.0
    %571 = vmatprep.subr.mxu0 0.0
    %572 = vmatpush1.msra.mxu0 0.0
    %573 = vmatprep.subr.mxu0 0.0
    %574 = vmatpush1.msra.mxu0 0.0
    %575 = vmatprep.subr.mxu0 0.0
    %576 = vmatpush1.msra.mxu0 0.0
    %577 = vmatprep.mubr.f32.mxu0 0.0
    %578 = vmatmul.mubr.f32.gmra.mrb[0].mxu0 %v511
    %v579 = vpop.f32.mrb[0].mxu0
    %v580 = vadd.f32 0.0, %v579
    %v581 = vpop.f32.mrb[0].mxu0
    %582 = vdwg.mxu0
    %v583 = vadd.f32 %v510, %v580
    %v584 = vadd.f32 %v583, %v294
    %v585 = vxor.u32 %v584, 2147483648
    %v586 = vmul.f32 %v585, 1.442695
    %v587 = vpow.pop %v586
    %v588 = vadd.f32 %v587, 1.0
    %v589 = vrcp.pop %v588
    %v590 = vmul.f32 1.0, %v589
    %v591 = vtanh.pop %v584
    %v592 = vmul.f32 %v590, %v498
    %594 = vrot.lane.b32.xlu0 %v591, 64
    %v595 = vpop.permute.xlu0 %594
    %v597 = vmul.f32 %v590, %v595
    %599 = vrot.lane.b32.xlu0 %v597, 32
    %v600 = vpop.permute.xlu0 %599
    %v602 = vadd.f32 %v592, %v600
    %v603 = vtanh.pop %v602
    %605 = vrot.lane.b32.xlu0 %v603, 64
    %v606 = vpop.permute.xlu0 %605
    %v608 = vmul.f32 %v590, %v606
    %610 = vrot.lane.b32.xlu0 %v608, 32
    %v611 = vpop.permute.xlu0 %610
    %613 = vst.msk [vmem:[#allocation2 + $0x4] sm:$0x3] %vm404, %v611
    %v614 = vld [vmem:[#allocation4 + $0x6] sm:$0x3]
    %v615 = vsel %vm300, %v611, 0
    %617 = vmatprep.subr.mxu0 0.0
    %618 = vmatpush1.msra.mxu0 %v295
    %619 = vmatprep.subr.mxu0 0.0
    %620 = vmatpush1.msra.mxu0 %v296
    %621 = vmatprep.subr.mxu0 0.0
    %622 = vmatpush1.msra.mxu0 %v297
    %623 = vmatprep.subr.mxu0 0.0
    %624 = vmatpush1.msra.mxu0 %v298
    %625 = vmatprep.subr.mxu0 0.0
    %626 = vmatpush1.msra.mxu0 0.0
    %627 = vmatprep.subr.mxu0 0.0
    %628 = vmatpush1.msra.mxu0 0.0
    %629 = vmatprep.subr.mxu0 0.0
    %630 = vmatpush1.msra.mxu0 0.0
    %631 = vmatprep.subr.mxu0 0.0
    %632 = vmatpush1.msra.mxu0 0.0
    %633 = vmatprep.subr.mxu0 0.0
    %634 = vmatpush1.msra.mxu0 0.0
    %635 = vmatprep.subr.mxu0 0.0
    %636 = vmatpush1.msra.mxu0 0.0
    %637 = vmatprep.subr.mxu0 0.0
    %638 = vmatpush1.msra.mxu0 0.0
    %639 = vmatprep.subr.mxu0 0.0
    %640 = vmatpush1.msra.mxu0 0.0
    %641 = vmatprep.subr.mxu0 0.0
    %642 = vmatpush1.msra.mxu0 0.0
    %643 = vmatprep.subr.mxu0 0.0
    %644 = vmatpush1.msra.mxu0 0.0
    %645 = vmatprep.subr.mxu0 0.0
    %646 = vmatpush1.msra.mxu0 0.0
    %647 = vmatprep.subr.mxu0 0.0
    %648 = vmatpush1.msra.mxu0 0.0
    %649 = vmatprep.subr.mxu0 0.0
    %650 = vmatpush1.msra.mxu0 0.0
    %651 = vmatprep.subr.mxu0 0.0
    %652 = vmatpush1.msra.mxu0 0.0
    %653 = vmatprep.subr.mxu0 0.0
    %654 = vmatpush1.msra.mxu0 0.0
    %655 = vmatprep.subr.mxu0 0.0
    %656 = vmatpush1.msra.mxu0 0.0
    %657 = vmatprep.subr.mxu0 0.0
    %658 = vmatpush1.msra.mxu0 0.0
    %659 = vmatprep.subr.mxu0 0.0
    %660 = vmatpush1.msra.mxu0 0.0
    %661 = vmatprep.subr.mxu0 0.0
    %662 = vmatpush1.msra.mxu0 0.0
    %663 = vmatprep.subr.mxu0 0.0
    %664 = vmatpush1.msra.mxu0 0.0
    %665 = vmatprep.subr.mxu0 0.0
    %666 = vmatpush1.msra.mxu0 0.0
    %667 = vmatprep.subr.mxu0 0.0
    %668 = vmatpush1.msra.mxu0 0.0
    %669 = vmatprep.subr.mxu0 0.0
    %670 = vmatpush1.msra.mxu0 0.0
    %671 = vmatprep.subr.mxu0 0.0
    %672 = vmatpush1.msra.mxu0 0.0
    %673 = vmatprep.subr.mxu0 0.0
    %674 = vmatpush1.msra.mxu0 0.0
    %675 = vmatprep.subr.mxu0 0.0
    %676 = vmatpush1.msra.mxu0 0.0
    %677 = vmatprep.subr.mxu0 0.0
    %678 = vmatpush1.msra.mxu0 0.0
    %679 = vmatprep.subr.mxu0 0.0
    %680 = vmatpush1.msra.mxu0 0.0
    %681 = vmatprep.mubr.f32.mxu0 0.0
    %682 = vmatmul.mubr.f32.gmra.mrb[0].mxu0 %v615
    %v683 = vpop.f32.mrb[0].mxu0
    %v684 = vadd.f32 0.0, %v683
    %v685 = vpop.f32.mrb[0].mxu0
    %686 = vdwg.mxu0
    %v687 = vadd.f32 %v614, %v684
    %v688 = vadd.f32 %v687, %v294
    %v689 = vxor.u32 %v688, 2147483648
    %v690 = vmul.f32 %v689, 1.442695
    %v691 = vpow.pop %v690
    %v692 = vadd.f32 %v691, 1.0
    %v693 = vrcp.pop %v692
    %v694 = vmul.f32 1.0, %v693
    %v695 = vtanh.pop %v688
    %v696 = vmul.f32 %v694, %v602
    %698 = vrot.lane.b32.xlu0 %v695, 64
    %v699 = vpop.permute.xlu0 %698
    %v701 = vmul.f32 %v694, %v699
    %703 = vrot.lane.b32.xlu0 %v701, 32
    %v704 = vpop.permute.xlu0 %703
    %v706 = vadd.f32 %v696, %v704
    %v707 = vtanh.pop %v706
    %709 = vrot.lane.b32.xlu0 %v707, 64
    %v710 = vpop.permute.xlu0 %709
    %v712 = vmul.f32 %v694, %v710
    %714 = vrot.lane.b32.xlu0 %v712, 32
    %v715 = vpop.permute.xlu0 %714
    %717 = vst.msk [vmem:[#allocation2 + $0x6] sm:$0x3] %vm404, %v715
    %v718 = vld [vmem:[#allocation4 + $0x8] sm:$0x3]
    %v719 = vsel %vm300, %v715, 0
    %721 = vmatprep.subr.mxu0 0.0
    %722 = vmatpush1.msra.mxu0 %v295
    %723 = vmatprep.subr.mxu0 0.0
    %724 = vmatpush1.msra.mxu0 %v296
    %725 = vmatprep.subr.mxu0 0.0
    %726 = vmatpush1.msra.mxu0 %v297
    %727 = vmatprep.subr.mxu0 0.0
    %728 = vmatpush1.msra.mxu0 %v298
    %729 = vmatprep.subr.mxu0 0.0
    %730 = vmatpush1.msra.mxu0 0.0
    %731 = vmatprep.subr.mxu0 0.0
    %732 = vmatpush1.msra.mxu0 0.0
    %733 = vmatprep.subr.mxu0 0.0
    %734 = vmatpush1.msra.mxu0 0.0
    %735 = vmatprep.subr.mxu0 0.0
    %736 = vmatpush1.msra.mxu0 0.0
    %737 = vmatprep.subr.mxu0 0.0
    %738 = vmatpush1.msra.mxu0 0.0
    %739 = vmatprep.subr.mxu0 0.0
    %740 = vmatpush1.msra.mxu0 0.0
    %741 = vmatprep.subr.mxu0 0.0
    %742 = vmatpush1.msra.mxu0 0.0
    %743 = vmatprep.subr.mxu0 0.0
    %744 = vmatpush1.msra.mxu0 0.0
    %745 = vmatprep.subr.mxu0 0.0
    %746 = vmatpush1.msra.mxu0 0.0
    %747 = vmatprep.subr.mxu0 0.0
    %748 = vmatpush1.msra.mxu0 0.0
    %749 = vmatprep.subr.mxu0 0.0
    %750 = vmatpush1.msra.mxu0 0.0
    %751 = vmatprep.subr.mxu0 0.0
    %752 = vmatpush1.msra.mxu0 0.0
    %753 = vmatprep.subr.mxu0 0.0
    %754 = vmatpush1.msra.mxu0 0.0
    %755 = vmatprep.subr.mxu0 0.0
    %756 = vmatpush1.msra.mxu0 0.0
    %757 = vmatprep.subr.mxu0 0.0
    %758 = vmatpush1.msra.mxu0 0.0
    %759 = vmatprep.subr.mxu0 0.0
    %760 = vmatpush1.msra.mxu0 0.0
    %761 = vmatprep.subr.mxu0 0.0
    %762 = vmatpush1.msra.mxu0 0.0
    %763 = vmatprep.subr.mxu0 0.0
    %764 = vmatpush1.msra.mxu0 0.0
    %765 = vmatprep.subr.mxu0 0.0
    %766 = vmatpush1.msra.mxu0 0.0
    %767 = vmatprep.subr.mxu0 0.0
    %768 = vmatpush1.msra.mxu0 0.0
    %769 = vmatprep.subr.mxu0 0.0
    %770 = vmatpush1.msra.mxu0 0.0
    %771 = vmatprep.subr.mxu0 0.0
    %772 = vmatpush1.msra.mxu0 0.0
    %773 = vmatprep.subr.mxu0 0.0
    %774 = vmatpush1.msra.mxu0 0.0
    %775 = vmatprep.subr.mxu0 0.0
    %776 = vmatpush1.msra.mxu0 0.0
    %777 = vmatprep.subr.mxu0 0.0
    %778 = vmatpush1.msra.mxu0 0.0
    %779 = vmatprep.subr.mxu0 0.0
    %780 = vmatpush1.msra.mxu0 0.0
    %781 = vmatprep.subr.mxu0 0.0
    %782 = vmatpush1.msra.mxu0 0.0
    %783 = vmatprep.subr.mxu0 0.0
    %784 = vmatpush1.msra.mxu0 0.0
    %785 = vmatprep.mubr.f32.mxu0 0.0
    %786 = vmatmul.mubr.f32.gmra.mrb[0].mxu0 %v719
    %v787 = vpop.f32.mrb[0].mxu0
    %v788 = vadd.f32 0.0, %v787
    %v789 = vpop.f32.mrb[0].mxu0
    %790 = vdwg.mxu0
    %v791 = vadd.f32 %v718, %v788
    %v792 = vadd.f32 %v791, %v294
    %v793 = vxor.u32 %v792, 2147483648
    %v794 = vmul.f32 %v793, 1.442695
    %v795 = vpow.pop %v794
    %v796 = vadd.f32 %v795, 1.0
    %v797 = vrcp.pop %v796
    %v798 = vmul.f32 1.0, %v797
    %v799 = vtanh.pop %v792
    %v800 = vmul.f32 %v798, %v706
    %802 = vrot.lane.b32.xlu0 %v799, 64
    %v803 = vpop.permute.xlu0 %802
    %v805 = vmul.f32 %v798, %v803
    %807 = vrot.lane.b32.xlu0 %v805, 32
    %v808 = vpop.permute.xlu0 %807
    %v810 = vadd.f32 %v800, %v808
    %v811 = vtanh.pop %v810
    %813 = vrot.lane.b32.xlu0 %v811, 64
    %v814 = vpop.permute.xlu0 %813
    %v816 = vmul.f32 %v798, %v814
    %818 = vrot.lane.b32.xlu0 %v816, 32
    %v819 = vpop.permute.xlu0 %818
    %821 = vst.msk [vmem:[#allocation2 + $0x8] sm:$0x3] %vm404, %v819
    %v822 = vld [vmem:[#allocation4 + $0xa] sm:$0x3]
    %v823 = vsel %vm300, %v819, 0
    %825 = vmatprep.subr.mxu0 0.0
    %826 = vmatpush1.msra.mxu0 %v295
    %827 = vmatprep.subr.mxu0 0.0
    %828 = vmatpush1.msra.mxu0 %v296
    %829 = vmatprep.subr.mxu0 0.0
    %830 = vmatpush1.msra.mxu0 %v297
    %831 = vmatprep.subr.mxu0 0.0
    %832 = vmatpush1.msra.mxu0 %v298
    %833 = vmatprep.subr.mxu0 0.0
    %834 = vmatpush1.msra.mxu0 0.0
    %835 = vmatprep.subr.mxu0 0.0
    %836 = vmatpush1.msra.mxu0 0.0
    %837 = vmatprep.subr.mxu0 0.0
    %838 = vmatpush1.msra.mxu0 0.0
    %839 = vmatprep.subr.mxu0 0.0
    %840 = vmatpush1.msra.mxu0 0.0
    %841 = vmatprep.subr.mxu0 0.0
    %842 = vmatpush1.msra.mxu0 0.0
    %843 = vmatprep.subr.mxu0 0.0
    %844 = vmatpush1.msra.mxu0 0.0
    %845 = vmatprep.subr.mxu0 0.0
    %846 = vmatpush1.msra.mxu0 0.0
    %847 = vmatprep.subr.mxu0 0.0
    %848 = vmatpush1.msra.mxu0 0.0
    %849 = vmatprep.subr.mxu0 0.0
    %850 = vmatpush1.msra.mxu0 0.0
    %851 = vmatprep.subr.mxu0 0.0
    %852 = vmatpush1.msra.mxu0 0.0
    %853 = vmatprep.subr.mxu0 0.0
    %854 = vmatpush1.msra.mxu0 0.0
    %855 = vmatprep.subr.mxu0 0.0
    %856 = vmatpush1.msra.mxu0 0.0
    %857 = vmatprep.subr.mxu0 0.0
    %858 = vmatpush1.msra.mxu0 0.0
    %859 = vmatprep.subr.mxu0 0.0
    %860 = vmatpush1.msra.mxu0 0.0
    %861 = vmatprep.subr.mxu0 0.0
    %862 = vmatpush1.msra.mxu0 0.0
    %863 = vmatprep.subr.mxu0 0.0
    %864 = vmatpush1.msra.mxu0 0.0
    %865 = vmatprep.subr.mxu0 0.0
    %866 = vmatpush1.msra.mxu0 0.0
    %867 = vmatprep.subr.mxu0 0.0
    %868 = vmatpush1.msra.mxu0 0.0
    %869 = vmatprep.subr.mxu0 0.0
    %870 = vmatpush1.msra.mxu0 0.0
    %871 = vmatprep.subr.mxu0 0.0
    %872 = vmatpush1.msra.mxu0 0.0
    %873 = vmatprep.subr.mxu0 0.0
    %874 = vmatpush1.msra.mxu0 0.0
    %875 = vmatprep.subr.mxu0 0.0
    %876 = vmatpush1.msra.mxu0 0.0
    %877 = vmatprep.subr.mxu0 0.0
    %878 = vmatpush1.msra.mxu0 0.0
    %879 = vmatprep.subr.mxu0 0.0
    %880 = vmatpush1.msra.mxu0 0.0
    %881 = vmatprep.subr.mxu0 0.0
    %882 = vmatpush1.msra.mxu0 0.0
    %883 = vmatprep.subr.mxu0 0.0
    %884 = vmatpush1.msra.mxu0 0.0
    %885 = vmatprep.subr.mxu0 0.0
    %886 = vmatpush1.msra.mxu0 0.0
    %887 = vmatprep.subr.mxu0 0.0
    %888 = vmatpush1.msra.mxu0 0.0
    %889 = vmatprep.mubr.f32.mxu0 0.0
    %890 = vmatmul.mubr.f32.gmra.mrb[0].mxu0 %v823
    %v891 = vpop.f32.mrb[0].mxu0
    %v892 = vadd.f32 0.0, %v891
    %v893 = vpop.f32.mrb[0].mxu0
    %894 = vdwg.mxu0
    %v895 = vadd.f32 %v822, %v892
    %v896 = vadd.f32 %v895, %v294
    %v897 = vxor.u32 %v896, 2147483648
    %v898 = vmul.f32 %v897, 1.442695
    %v899 = vpow.pop %v898
    %v900 = vadd.f32 %v899, 1.0
    %v901 = vrcp.pop %v900
    %v902 = vmul.f32 1.0, %v901
    %v903 = vtanh.pop %v896
    %v904 = vmul.f32 %v902, %v810
    %906 = vrot.lane.b32.xlu0 %v903, 64
    %v907 = vpop.permute.xlu0 %906
    %v909 = vmul.f32 %v902, %v907
    %911 = vrot.lane.b32.xlu0 %v909, 32
    %v912 = vpop.permute.xlu0 %911
    %v914 = vadd.f32 %v904, %v912
    %v915 = vtanh.pop %v914
    %917 = vrot.lane.b32.xlu0 %v915, 64
    %v918 = vpop.permute.xlu0 %917
    %v920 = vmul.f32 %v902, %v918
    %922 = vrot.lane.b32.xlu0 %v920, 32
    %v923 = vpop.permute.xlu0 %922
    %925 = vst.msk [vmem:[#allocation2 + $0xa] sm:$0x3] %vm404, %v923
    %v926 = vld [vmem:[#allocation4 + $0xc] sm:$0x3]
    %v927 = vsel %vm300, %v923, 0
    %929 = vmatprep.subr.mxu0 0.0
    %930 = vmatpush1.msra.mxu0 %v295
    %931 = vmatprep.subr.mxu0 0.0
    %932 = vmatpush1.msra.mxu0 %v296
    %933 = vmatprep.subr.mxu0 0.0
    %934 = vmatpush1.msra.mxu0 %v297
    %935 = vmatprep.subr.mxu0 0.0
    %936 = vmatpush1.msra.mxu0 %v298
    %937 = vmatprep.subr.mxu0 0.0
    %938 = vmatpush1.msra.mxu0 0.0
    %939 = vmatprep.subr.mxu0 0.0
    %940 = vmatpush1.msra.mxu0 0.0
    %941 = vmatprep.subr.mxu0 0.0
    %942 = vmatpush1.msra.mxu0 0.0
    %943 = vmatprep.subr.mxu0 0.0
    %944 = vmatpush1.msra.mxu0 0.0
    %945 = vmatprep.subr.mxu0 0.0
    %946 = vmatpush1.msra.mxu0 0.0
    %947 = vmatprep.subr.mxu0 0.0
    %948 = vmatpush1.msra.mxu0 0.0
    %949 = vmatprep.subr.mxu0 0.0
    %950 = vmatpush1.msra.mxu0 0.0
    %951 = vmatprep.subr.mxu0 0.0
    %952 = vmatpush1.msra.mxu0 0.0
    %953 = vmatprep.subr.mxu0 0.0
    %954 = vmatpush1.msra.mxu0 0.0
    %955 = vmatprep.subr.mxu0 0.0
    %956 = vmatpush1.msra.mxu0 0.0
    %957 = vmatprep.subr.mxu0 0.0
    %958 = vmatpush1.msra.mxu0 0.0
    %959 = vmatprep.subr.mxu0 0.0
    %960 = vmatpush1.msra.mxu0 0.0
    %961 = vmatprep.subr.mxu0 0.0
    %962 = vmatpush1.msra.mxu0 0.0
    %963 = vmatprep.subr.mxu0 0.0
    %964 = vmatpush1.msra.mxu0 0.0
    %965 = vmatprep.subr.mxu0 0.0
    %966 = vmatpush1.msra.mxu0 0.0
    %967 = vmatprep.subr.mxu0 0.0
    %968 = vmatpush1.msra.mxu0 0.0
    %969 = vmatprep.subr.mxu0 0.0
    %970 = vmatpush1.msra.mxu0 0.0
    %971 = vmatprep.subr.mxu0 0.0
    %972 = vmatpush1.msra.mxu0 0.0
    %973 = vmatprep.subr.mxu0 0.0
    %974 = vmatpush1.msra.mxu0 0.0
    %975 = vmatprep.subr.mxu0 0.0
    %976 = vmatpush1.msra.mxu0 0.0
    %977 = vmatprep.subr.mxu0 0.0
    %978 = vmatpush1.msra.mxu0 0.0
    %979 = vmatprep.subr.mxu0 0.0
    %980 = vmatpush1.msra.mxu0 0.0
    %981 = vmatprep.subr.mxu0 0.0
    %982 = vmatpush1.msra.mxu0 0.0
    %983 = vmatprep.subr.mxu0 0.0
    %984 = vmatpush1.msra.mxu0 0.0
    %985 = vmatprep.subr.mxu0 0.0
    %986 = vmatpush1.msra.mxu0 0.0
    %987 = vmatprep.subr.mxu0 0.0
    %988 = vmatpush1.msra.mxu0 0.0
    %989 = vmatprep.subr.mxu0 0.0
    %990 = vmatpush1.msra.mxu0 0.0
    %991 = vmatprep.subr.mxu0 0.0
    %992 = vmatpush1.msra.mxu0 0.0
    %993 = vmatprep.mubr.f32.mxu0 0.0
    %994 = vmatmul.mubr.f32.gmra.mrb[0].mxu0 %v927
    %v995 = vpop.f32.mrb[0].mxu0
    %v996 = vadd.f32 0.0, %v995
    %v997 = vpop.f32.mrb[0].mxu0
    %998 = vdwg.mxu0
    %v999 = vadd.f32 %v926, %v996
    %v1000 = vadd.f32 %v999, %v294
    %v1001 = vxor.u32 %v1000, 2147483648
    %v1002 = vmul.f32 %v1001, 1.442695
    %v1003 = vpow.pop %v1002
    %v1004 = vadd.f32 %v1003, 1.0
    %v1005 = vrcp.pop %v1004
    %v1006 = vmul.f32 1.0, %v1005
    %v1007 = vtanh.pop %v1000
    %v1008 = vmul.f32 %v1006, %v914
    %1010 = vrot.lane.b32.xlu0 %v1007, 64
    %v1011 = vpop.permute.xlu0 %1010
    %v1013 = vmul.f32 %v1006, %v1011
    %1015 = vrot.lane.b32.xlu0 %v1013, 32
    %v1016 = vpop.permute.xlu0 %1015
    %v1018 = vadd.f32 %v1008, %v1016
    %v1019 = vtanh.pop %v1018
    %1021 = vrot.lane.b32.xlu0 %v1019, 64
    %v1022 = vpop.permute.xlu0 %1021
    %v1024 = vmul.f32 %v1006, %v1022
    %1026 = vrot.lane.b32.xlu0 %v1024, 32
    %v1027 = vpop.permute.xlu0 %1026
    %1029 = vst.msk [vmem:[#allocation2 + $0xc] sm:$0x3] %vm404, %v1027
    %v1030 = vld [vmem:[#allocation4 + $0xe] sm:$0x3]
    %v1031 = vsel %vm300, %v1027, 0
    %1033 = vmatprep.subr.mxu0 0.0
    %1034 = vmatpush1.msra.mxu0 %v295
    %1035 = vmatprep.subr.mxu0 0.0
    %1036 = vmatpush1.msra.mxu0 %v296
    %1037 = vmatprep.subr.mxu0 0.0
    %1038 = vmatpush1.msra.mxu0 %v297
    %1039 = vmatprep.subr.mxu0 0.0
    %1040 = vmatpush1.msra.mxu0 %v298
    %1041 = vmatprep.subr.mxu0 0.0
    %1042 = vmatpush1.msra.mxu0 0.0
    %1043 = vmatprep.subr.mxu0 0.0
    %1044 = vmatpush1.msra.mxu0 0.0
    %1045 = vmatprep.subr.mxu0 0.0
    %1046 = vmatpush1.msra.mxu0 0.0
    %1047 = vmatprep.subr.mxu0 0.0
    %1048 = vmatpush1.msra.mxu0 0.0
    %1049 = vmatprep.subr.mxu0 0.0
    %1050 = vmatpush1.msra.mxu0 0.0
    %1051 = vmatprep.subr.mxu0 0.0
    %1052 = vmatpush1.msra.mxu0 0.0
    %1053 = vmatprep.subr.mxu0 0.0
    %1054 = vmatpush1.msra.mxu0 0.0
    %1055 = vmatprep.subr.mxu0 0.0
    %1056 = vmatpush1.msra.mxu0 0.0
    %1057 = vmatprep.subr.mxu0 0.0
    %1058 = vmatpush1.msra.mxu0 0.0
    %1059 = vmatprep.subr.mxu0 0.0
    %1060 = vmatpush1.msra.mxu0 0.0
    %1061 = vmatprep.subr.mxu0 0.0
    %1062 = vmatpush1.msra.mxu0 0.0
    %1063 = vmatprep.subr.mxu0 0.0
    %1064 = vmatpush1.msra.mxu0 0.0
    %1065 = vmatprep.subr.mxu0 0.0
    %1066 = vmatpush1.msra.mxu0 0.0
    %1067 = vmatprep.subr.mxu0 0.0
    %1068 = vmatpush1.msra.mxu0 0.0
    %1069 = vmatprep.subr.mxu0 0.0
    %1070 = vmatpush1.msra.mxu0 0.0
    %1071 = vmatprep.subr.mxu0 0.0
    %1072 = vmatpush1.msra.mxu0 0.0
    %1073 = vmatprep.subr.mxu0 0.0
    %1074 = vmatpush1.msra.mxu0 0.0
    %1075 = vmatprep.subr.mxu0 0.0
    %1076 = vmatpush1.msra.mxu0 0.0
    %1077 = vmatprep.subr.mxu0 0.0
    %1078 = vmatpush1.msra.mxu0 0.0
    %1079 = vmatprep.subr.mxu0 0.0
    %1080 = vmatpush1.msra.mxu0 0.0
    %1081 = vmatprep.subr.mxu0 0.0
    %1082 = vmatpush1.msra.mxu0 0.0
    %1083 = vmatprep.subr.mxu0 0.0
    %1084 = vmatpush1.msra.mxu0 0.0
    %1085 = vmatprep.subr.mxu0 0.0
    %1086 = vmatpush1.msra.mxu0 0.0
    %1087 = vmatprep.subr.mxu0 0.0
    %1088 = vmatpush1.msra.mxu0 0.0
    %1089 = vmatprep.subr.mxu0 0.0
    %1090 = vmatpush1.msra.mxu0 0.0
    %1091 = vmatprep.subr.mxu0 0.0
    %1092 = vmatpush1.msra.mxu0 0.0
    %1093 = vmatprep.subr.mxu0 0.0
    %1094 = vmatpush1.msra.mxu0 0.0
    %1095 = vmatprep.subr.mxu0 0.0
    %1096 = vmatpush1.msra.mxu0 0.0
    %1097 = vmatprep.mubr.f32.mxu0 0.0
    %1098 = vmatmul.mubr.f32.gmra.mrb[0].mxu0 %v1031
    %v1099 = vpop.f32.mrb[0].mxu0
    %v1100 = vadd.f32 0.0, %v1099
    %v1101 = vpop.f32.mrb[0].mxu0
    %1102 = vdwg.mxu0
    %v1103 = vadd.f32 %v1030, %v1100
    %v1104 = vadd.f32 %v1103, %v294
    %v1105 = vxor.u32 %v1104, 2147483648
    %v1106 = vmul.f32 %v1105, 1.442695
    %v1107 = vpow.pop %v1106
    %v1108 = vadd.f32 %v1107, 1.0
    %v1109 = vrcp.pop %v1108
    %v1110 = vmul.f32 1.0, %v1109
    %v1111 = vtanh.pop %v1104
    %v1112 = vmul.f32 %v1110, %v1018
    %1114 = vrot.lane.b32.xlu0 %v1111, 64
    %v1115 = vpop.permute.xlu0 %1114
    %v1117 = vmul.f32 %v1110, %v1115
    %1119 = vrot.lane.b32.xlu0 %v1117, 32
    %v1120 = vpop.permute.xlu0 %1119
    %v1122 = vadd.f32 %v1112, %v1120
    %v1123 = vtanh.pop %v1122
    %1125 = vrot.lane.b32.xlu0 %v1123, 64
    %v1126 = vpop.permute.xlu0 %1125
    %v1128 = vmul.f32 %v1110, %v1126
    %1130 = vrot.lane.b32.xlu0 %v1128, 32
    %v1131 = vpop.permute.xlu0 %1130
    %1133 = vst.msk [vmem:[#allocation2 + $0xe] sm:$0x3] %vm404, %v1131
    %v1134 = vld [vmem:[#allocation2] sm:$0xff]
    %v1135 = vld [vmem:[#allocation2 + $0x8] sm:$0xff]
    %v1136 = vld [vmem:[%s6] sm:$0xff]
    %v1137 = vld [vmem:[%s6 + $0x8] sm:$0xff]
    %v1138 = vld [vmem:[%s6 + $0x10] sm:$0xff]
    %v1139 = vld [vmem:[%s6 + $0x18] sm:$0xff]
    %v1140 = vld [vmem:[#allocation10] sm:$0x1]
    %v1142 = vlaneseq
    %v1143 = vshrl.u32 %v1142, 7
    %v1144 = vsub.s32 0, %v1143
    %v1145 = vrot.slane %v1140, %v1144
    %v1148 = vsel %vm300, %v1134, 0
    %v1151 = vsel %vm300, %v1135, 0
    %1153 = vmatprep.subr.mxu0 0.0
    %1154 = vmatpush1.msra.mxu0 %v1136
    %1155 = vmatprep.subr.mxu0 0.0
    %1156 = vmatpush1.msra.mxu0 %v1137
    %1157 = vmatprep.subr.mxu0 0.0
    %1158 = vmatpush1.msra.mxu0 %v1138
    %1159 = vmatprep.subr.mxu0 0.0
    %1160 = vmatpush1.msra.mxu0 %v1139
    %1161 = vmatprep.subr.mxu0 0.0
    %1162 = vmatpush1.msra.mxu0 0.0
    %1163 = vmatprep.subr.mxu0 0.0
    %1164 = vmatpush1.msra.mxu0 0.0
    %1165 = vmatprep.subr.mxu0 0.0
    %1166 = vmatpush1.msra.mxu0 0.0
    %1167 = vmatprep.subr.mxu0 0.0
    %1168 = vmatpush1.msra.mxu0 0.0
    %1169 = vmatprep.subr.mxu0 0.0
    %1170 = vmatpush1.msra.mxu0 0.0
    %1171 = vmatprep.subr.mxu0 0.0
    %1172 = vmatpush1.msra.mxu0 0.0
    %1173 = vmatprep.subr.mxu0 0.0
    %1174 = vmatpush1.msra.mxu0 0.0
    %1175 = vmatprep.subr.mxu0 0.0
    %1176 = vmatpush1.msra.mxu0 0.0
    %1177 = vmatprep.subr.mxu0 0.0
    %1178 = vmatpush1.msra.mxu0 0.0
    %1179 = vmatprep.subr.mxu0 0.0
    %1180 = vmatpush1.msra.mxu0 0.0
    %1181 = vmatprep.subr.mxu0 0.0
    %1182 = vmatpush1.msra.mxu0 0.0
    %1183 = vmatprep.subr.mxu0 0.0
    %1184 = vmatpush1.msra.mxu0 0.0
    %1185 = vmatprep.subr.mxu0 0.0
    %1186 = vmatpush1.msra.mxu0 0.0
    %1187 = vmatprep.subr.mxu0 0.0
    %1188 = vmatpush1.msra.mxu0 0.0
    %1189 = vmatprep.subr.mxu0 0.0
    %1190 = vmatpush1.msra.mxu0 0.0
    %1191 = vmatprep.subr.mxu0 0.0
    %1192 = vmatpush1.msra.mxu0 0.0
    %1193 = vmatprep.subr.mxu0 0.0
    %1194 = vmatpush1.msra.mxu0 0.0
    %1195 = vmatprep.subr.mxu0 0.0
    %1196 = vmatpush1.msra.mxu0 0.0
    %1197 = vmatprep.subr.mxu0 0.0
    %1198 = vmatpush1.msra.mxu0 0.0
    %1199 = vmatprep.subr.mxu0 0.0
    %1200 = vmatpush1.msra.mxu0 0.0
    %1201 = vmatprep.subr.mxu0 0.0
    %1202 = vmatpush1.msra.mxu0 0.0
    %1203 = vmatprep.subr.mxu0 0.0
    %1204 = vmatpush1.msra.mxu0 0.0
    %1205 = vmatprep.subr.mxu0 0.0
    %1206 = vmatpush1.msra.mxu0 0.0
    %1207 = vmatprep.subr.mxu0 0.0
    %1208 = vmatpush1.msra.mxu0 0.0
    %1209 = vmatprep.subr.mxu0 0.0
    %1210 = vmatpush1.msra.mxu0 0.0
    %1211 = vmatprep.subr.mxu0 0.0
    %1212 = vmatpush1.msra.mxu0 0.0
    %1213 = vmatprep.subr.mxu0 0.0
    %1214 = vmatpush1.msra.mxu0 0.0
    %1215 = vmatprep.subr.mxu0 0.0
    %1216 = vmatpush1.msra.mxu0 0.0
    %1217 = vmatprep.mubr.f32.mxu0 0.0
    %1218 = vmatmul.mubr.f32.gmra.mrb[0].mxu0 %v1148
    %v1219 = vpop.f32.mrb[0].mxu0
    %v1220 = vadd.f32 %v1145, %v1219
    %v1221 = vpop.f32.mrb[0].mxu0
    %1222 = vmatprep.mubr.f32.mxu0 0.0
    %1223 = vmatmul.mubr.f32.gmra.mrb[0].mxu0 %v1151
    %v1224 = vpop.f32.mrb[0].mxu0
    %v1225 = vadd.f32 %v1145, %v1224
    %v1226 = vpop.f32.mrb[0].mxu0
    %1227 = vdwg.mxu0
    %1228 = vst [vmem:[#allocation4] sm:$0xff] %v1220
    %1229 = vst [vmem:[#allocation4 + $0x8] sm:$0xff] %v1225
    %v1230 = vld [vmem:[%s7] sm:$0xff]
    %v1231 = vld [vmem:[%s7 + $0x8] sm:$0xff]
    %v1232 = vld [vmem:[%s7 + $0x10] sm:$0xff]
    %v1233 = vld [vmem:[%s7 + $0x18] sm:$0xff]
    %v1234 = vld [vmem:[#allocation4] sm:$0x3]
    %1235 = vmatprep.subr.mxu0 0.0
    %1236 = vmatpush1.msra.mxu0 %v1230
    %1237 = vmatprep.subr.mxu0 0.0
    %1238 = vmatpush1.msra.mxu0 %v1231
    %1239 = vmatprep.subr.mxu0 0.0
    %1240 = vmatpush1.msra.mxu0 %v1232
    %1241 = vmatprep.subr.mxu0 0.0
    %1242 = vmatpush1.msra.mxu0 %v1233
    %1243 = vmatprep.subr.mxu0 0.0
    %1244 = vmatpush1.msra.mxu0 0.0
    %1245 = vmatprep.subr.mxu0 0.0
    %1246 = vmatpush1.msra.mxu0 0.0
    %1247 = vmatprep.subr.mxu0 0.0
    %1248 = vmatpush1.msra.mxu0 0.0
    %1249 = vmatprep.subr.mxu0 0.0
    %1250 = vmatpush1.msra.mxu0 0.0
    %1251 = vmatprep.subr.mxu0 0.0
    %1252 = vmatpush1.msra.mxu0 0.0
    %1253 = vmatprep.subr.mxu0 0.0
    %1254 = vmatpush1.msra.mxu0 0.0
    %1255 = vmatprep.subr.mxu0 0.0
    %1256 = vmatpush1.msra.mxu0 0.0
    %1257 = vmatprep.subr.mxu0 0.0
    %1258 = vmatpush1.msra.mxu0 0.0
    %1259 = vmatprep.subr.mxu0 0.0
    %1260 = vmatpush1.msra.mxu0 0.0
    %1261 = vmatprep.subr.mxu0 0.0
    %1262 = vmatpush1.msra.mxu0 0.0
    %1263 = vmatprep.subr.mxu0 0.0
    %1264 = vmatpush1.msra.mxu0 0.0
    %1265 = vmatprep.subr.mxu0 0.0
    %1266 = vmatpush1.msra.mxu0 0.0
    %1267 = vmatprep.subr.mxu0 0.0
    %1268 = vmatpush1.msra.mxu0 0.0
    %1269 = vmatprep.subr.mxu0 0.0
    %1270 = vmatpush1.msra.mxu0 0.0
    %1271 = vmatprep.subr.mxu0 0.0
    %1272 = vmatpush1.msra.mxu0 0.0
    %1273 = vmatprep.subr.mxu0 0.0
    %1274 = vmatpush1.msra.mxu0 0.0
    %1275 = vmatprep.subr.mxu0 0.0
    %1276 = vmatpush1.msra.mxu0 0.0
    %1277 = vmatprep.subr.mxu0 0.0
    %1278 = vmatpush1.msra.mxu0 0.0
    %1279 = vmatprep.subr.mxu0 0.0
    %1280 = vmatpush1.msra.mxu0 0.0
    %1281 = vmatprep.subr.mxu0 0.0
    %1282 = vmatpush1.msra.mxu0 0.0
    %1283 = vmatprep.subr.mxu0 0.0
    %1284 = vmatpush1.msra.mxu0 0.0
    %1285 = vmatprep.subr.mxu0 0.0
    %1286 = vmatpush1.msra.mxu0 0.0
    %1287 = vmatprep.subr.mxu0 0.0
    %1288 = vmatpush1.msra.mxu0 0.0
    %1289 = vmatprep.subr.mxu0 0.0
    %1290 = vmatpush1.msra.mxu0 0.0
    %1291 = vmatprep.subr.mxu0 0.0
    %1292 = vmatpush1.msra.mxu0 0.0
    %1293 = vmatprep.subr.mxu0 0.0
    %1294 = vmatpush1.msra.mxu0 0.0
    %1295 = vmatprep.subr.mxu0 0.0
    %1296 = vmatpush1.msra.mxu0 0.0
    %1297 = vmatprep.subr.mxu0 0.0
    %1298 = vmatpush1.msra.mxu0 0.0
    %1299 = vmatprep.mubr.f32.mxu0 0.0
    %1300 = vmatmul.mubr.f32.gmra.mrb[0].mxu0 %v302
    %v1301 = vpop.f32.mrb[0].mxu0
    %v1302 = vadd.f32 0.0, %v1301
    %v1303 = vpop.f32.mrb[0].mxu0
    %1304 = vdwg.mxu0
    %v1305 = vadd.f32 %v1234, %v1302
    %v1306 = vxor.u32 %v1305, 2147483648
    %v1307 = vmul.f32 %v1306, 1.442695
    %v1308 = vpow.pop %v1307
    %v1309 = vadd.f32 %v1308, 1.0
    %v1310 = vrcp.pop %v1309
    %v1311 = vmul.f32 1.0, %v1310
    %v1312 = vtanh.pop %v1305
    %v1313 = vmul.f32 %v1311, 0.0
    %1315 = vrot.lane.b32.xlu0 %v1312, 64
    %v1316 = vpop.permute.xlu0 %1315
    %v1318 = vmul.f32 %v1311, %v1316
    %1320 = vrot.lane.b32.xlu0 %v1318, 32
    %v1321 = vpop.permute.xlu0 %1320
    %v1323 = vadd.f32 %v1313, %v1321
    %v1324 = vtanh.pop %v1323
    %1326 = vrot.lane.b32.xlu0 %v1324, 64
    %v1327 = vpop.permute.xlu0 %1326
    %v1329 = vmul.f32 %v1311, %v1327
    %1331 = vrot.lane.b32.xlu0 %v1329, 32
    %v1332 = vpop.permute.xlu0 %1331
    %1334 = vst.msk [vmem:[#allocation3] sm:$0x3] %vm404, %v1332
    %v1335 = vld [vmem:[#allocation4 + $0x2] sm:$0x3]
    %v1336 = vsel %vm300, %v1332, 0
    %1338 = vmatprep.subr.mxu0 0.0
    %1339 = vmatpush1.msra.mxu0 %v1230
    %1340 = vmatprep.subr.mxu0 0.0
    %1341 = vmatpush1.msra.mxu0 %v1231
    %1342 = vmatprep.subr.mxu0 0.0
    %1343 = vmatpush1.msra.mxu0 %v1232
    %1344 = vmatprep.subr.mxu0 0.0
    %1345 = vmatpush1.msra.mxu0 %v1233
    %1346 = vmatprep.subr.mxu0 0.0
    %1347 = vmatpush1.msra.mxu0 0.0
    %1348 = vmatprep.subr.mxu0 0.0
    %1349 = vmatpush1.msra.mxu0 0.0
    %1350 = vmatprep.subr.mxu0 0.0
    %1351 = vmatpush1.msra.mxu0 0.0
    %1352 = vmatprep.subr.mxu0 0.0
    %1353 = vmatpush1.msra.mxu0 0.0
    %1354 = vmatprep.subr.mxu0 0.0
    %1355 = vmatpush1.msra.mxu0 0.0
    %1356 = vmatprep.subr.mxu0 0.0
    %1357 = vmatpush1.msra.mxu0 0.0
    %1358 = vmatprep.subr.mxu0 0.0
    %1359 = vmatpush1.msra.mxu0 0.0
    %1360 = vmatprep.subr.mxu0 0.0
    %1361 = vmatpush1.msra.mxu0 0.0
    %1362 = vmatprep.subr.mxu0 0.0
    %1363 = vmatpush1.msra.mxu0 0.0
    %1364 = vmatprep.subr.mxu0 0.0
    %1365 = vmatpush1.msra.mxu0 0.0
    %1366 = vmatprep.subr.mxu0 0.0
    %1367 = vmatpush1.msra.mxu0 0.0
    %1368 = vmatprep.subr.mxu0 0.0
    %1369 = vmatpush1.msra.mxu0 0.0
    %1370 = vmatprep.subr.mxu0 0.0
    %1371 = vmatpush1.msra.mxu0 0.0
    %1372 = vmatprep.subr.mxu0 0.0
    %1373 = vmatpush1.msra.mxu0 0.0
    %1374 = vmatprep.subr.mxu0 0.0
    %1375 = vmatpush1.msra.mxu0 0.0
    %1376 = vmatprep.subr.mxu0 0.0
    %1377 = vmatpush1.msra.mxu0 0.0
    %1378 = vmatprep.subr.mxu0 0.0
    %1379 = vmatpush1.msra.mxu0 0.0
    %1380 = vmatprep.subr.mxu0 0.0
    %1381 = vmatpush1.msra.mxu0 0.0
    %1382 = vmatprep.subr.mxu0 0.0
    %1383 = vmatpush1.msra.mxu0 0.0
    %1384 = vmatprep.subr.mxu0 0.0
    %1385 = vmatpush1.msra.mxu0 0.0
    %1386 = vmatprep.subr.mxu0 0.0
    %1387 = vmatpush1.msra.mxu0 0.0
    %1388 = vmatprep.subr.mxu0 0.0
    %1389 = vmatpush1.msra.mxu0 0.0
    %1390 = vmatprep.subr.mxu0 0.0
    %1391 = vmatpush1.msra.mxu0 0.0
    %1392 = vmatprep.subr.mxu0 0.0
    %1393 = vmatpush1.msra.mxu0 0.0
    %1394 = vmatprep.subr.mxu0 0.0
    %1395 = vmatpush1.msra.mxu0 0.0
    %1396 = vmatprep.subr.mxu0 0.0
    %1397 = vmatpush1.msra.mxu0 0.0
    %1398 = vmatprep.subr.mxu0 0.0
    %1399 = vmatpush1.msra.mxu0 0.0
    %1400 = vmatprep.subr.mxu0 0.0
    %1401 = vmatpush1.msra.mxu0 0.0
    %1402 = vmatprep.mubr.f32.mxu0 0.0
    %1403 = vmatmul.mubr.f32.gmra.mrb[0].mxu0 %v1336
    %v1404 = vpop.f32.mrb[0].mxu0
    %v1405 = vadd.f32 0.0, %v1404
    %v1406 = vpop.f32.mrb[0].mxu0
    %1407 = vdwg.mxu0
    %v1408 = vadd.f32 %v1335, %v1405
    %v1409 = vxor.u32 %v1408, 2147483648
    %v1410 = vmul.f32 %v1409, 1.442695
    %v1411 = vpow.pop %v1410
    %v1412 = vadd.f32 %v1411, 1.0
    %v1413 = vrcp.pop %v1412
    %v1414 = vmul.f32 1.0, %v1413
    %v1415 = vtanh.pop %v1408
    %v1416 = vmul.f32 %v1414, %v1323
    %1418 = vrot.lane.b32.xlu0 %v1415, 64
    %v1419 = vpop.permute.xlu0 %1418
    %v1421 = vmul.f32 %v1414, %v1419
    %1423 = vrot.lane.b32.xlu0 %v1421, 32
    %v1424 = vpop.permute.xlu0 %1423
    %v1426 = vadd.f32 %v1416, %v1424
    %v1427 = vtanh.pop %v1426
    %1429 = vrot.lane.b32.xlu0 %v1427, 64
    %v1430 = vpop.permute.xlu0 %1429
    %v1432 = vmul.f32 %v1414, %v1430
    %1434 = vrot.lane.b32.xlu0 %v1432, 32
    %v1435 = vpop.permute.xlu0 %1434
    %1437 = vst.msk [vmem:[#allocation3 + $0x2] sm:$0x3] %vm404, %v1435
    %v1438 = vld [vmem:[#allocation4 + $0x4] sm:$0x3]
    %v1439 = vsel %vm300, %v1435, 0
    %1441 = vmatprep.subr.mxu0 0.0
    %1442 = vmatpush1.msra.mxu0 %v1230
    %1443 = vmatprep.subr.mxu0 0.0
    %1444 = vmatpush1.msra.mxu0 %v1231
    %1445 = vmatprep.subr.mxu0 0.0
    %1446 = vmatpush1.msra.mxu0 %v1232
    %1447 = vmatprep.subr.mxu0 0.0
    %1448 = vmatpush1.msra.mxu0 %v1233
    %1449 = vmatprep.subr.mxu0 0.0
    %1450 = vmatpush1.msra.mxu0 0.0
    %1451 = vmatprep.subr.mxu0 0.0
    %1452 = vmatpush1.msra.mxu0 0.0
    %1453 = vmatprep.subr.mxu0 0.0
    %1454 = vmatpush1.msra.mxu0 0.0
    %1455 = vmatprep.subr.mxu0 0.0
    %1456 = vmatpush1.msra.mxu0 0.0
    %1457 = vmatprep.subr.mxu0 0.0
    %1458 = vmatpush1.msra.mxu0 0.0
    %1459 = vmatprep.subr.mxu0 0.0
    %1460 = vmatpush1.msra.mxu0 0.0
    %1461 = vmatprep.subr.mxu0 0.0
    %1462 = vmatpush1.msra.mxu0 0.0
    %1463 = vmatprep.subr.mxu0 0.0
    %1464 = vmatpush1.msra.mxu0 0.0
    %1465 = vmatprep.subr.mxu0 0.0
    %1466 = vmatpush1.msra.mxu0 0.0
    %1467 = vmatprep.subr.mxu0 0.0
    %1468 = vmatpush1.msra.mxu0 0.0
    %1469 = vmatprep.subr.mxu0 0.0
    %1470 = vmatpush1.msra.mxu0 0.0
    %1471 = vmatprep.subr.mxu0 0.0
    %1472 = vmatpush1.msra.mxu0 0.0
    %1473 = vmatprep.subr.mxu0 0.0
    %1474 = vmatpush1.msra.mxu0 0.0
    %1475 = vmatprep.subr.mxu0 0.0
    %1476 = vmatpush1.msra.mxu0 0.0
    %1477 = vmatprep.subr.mxu0 0.0
    %1478 = vmatpush1.msra.mxu0 0.0
    %1479 = vmatprep.subr.mxu0 0.0
    %1480 = vmatpush1.msra.mxu0 0.0
    %1481 = vmatprep.subr.mxu0 0.0
    %1482 = vmatpush1.msra.mxu0 0.0
    %1483 = vmatprep.subr.mxu0 0.0
    %1484 = vmatpush1.msra.mxu0 0.0
    %1485 = vmatprep.subr.mxu0 0.0
    %1486 = vmatpush1.msra.mxu0 0.0
    %1487 = vmatprep.subr.mxu0 0.0
    %1488 = vmatpush1.msra.mxu0 0.0
    %1489 = vmatprep.subr.mxu0 0.0
    %1490 = vmatpush1.msra.mxu0 0.0
    %1491 = vmatprep.subr.mxu0 0.0
    %1492 = vmatpush1.msra.mxu0 0.0
    %1493 = vmatprep.subr.mxu0 0.0
    %1494 = vmatpush1.msra.mxu0 0.0
    %1495 = vmatprep.subr.mxu0 0.0
    %1496 = vmatpush1.msra.mxu0 0.0
    %1497 = vmatprep.subr.mxu0 0.0
    %1498 = vmatpush1.msra.mxu0 0.0
    %1499 = vmatprep.subr.mxu0 0.0
    %1500 = vmatpush1.msra.mxu0 0.0
    %1501 = vmatprep.subr.mxu0 0.0
    %1502 = vmatpush1.msra.mxu0 0.0
    %1503 = vmatprep.subr.mxu0 0.0
    %1504 = vmatpush1.msra.mxu0 0.0
    %1505 = vmatprep.mubr.f32.mxu0 0.0
    %1506 = vmatmul.mubr.f32.gmra.mrb[0].mxu0 %v1439
    %v1507 = vpop.f32.mrb[0].mxu0
    %v1508 = vadd.f32 0.0, %v1507
    %v1509 = vpop.f32.mrb[0].mxu0
    %1510 = vdwg.mxu0
    %v1511 = vadd.f32 %v1438, %v1508
    %v1512 = vxor.u32 %v1511, 2147483648
    %v1513 = vmul.f32 %v1512, 1.442695
    %v1514 = vpow.pop %v1513
    %v1515 = vadd.f32 %v1514, 1.0
    %v1516 = vrcp.pop %v1515
    %v1517 = vmul.f32 1.0, %v1516
    %v1518 = vtanh.pop %v1511
    %v1519 = vmul.f32 %v1517, %v1426
    %1521 = vrot.lane.b32.xlu0 %v1518, 64
    %v1522 = vpop.permute.xlu0 %1521
    %v1524 = vmul.f32 %v1517, %v1522
    %1526 = vrot.lane.b32.xlu0 %v1524, 32
    %v1527 = vpop.permute.xlu0 %1526
    %v1529 = vadd.f32 %v1519, %v1527
    %v1530 = vtanh.pop %v1529
    %1532 = vrot.lane.b32.xlu0 %v1530, 64
    %v1533 = vpop.permute.xlu0 %1532
    %v1535 = vmul.f32 %v1517, %v1533
    %1537 = vrot.lane.b32.xlu0 %v1535, 32
    %v1538 = vpop.permute.xlu0 %1537
    %1540 = vst.msk [vmem:[#allocation3 + $0x4] sm:$0x3] %vm404, %v1538
    %v1541 = vld [vmem:[#allocation4 + $0x6] sm:$0x3]
    %v1542 = vsel %vm300, %v1538, 0
    %1544 = vmatprep.subr.mxu0 0.0
    %1545 = vmatpush1.msra.mxu0 %v1230
    %1546 = vmatprep.subr.mxu0 0.0
    %1547 = vmatpush1.msra.mxu0 %v1231
    %1548 = vmatprep.subr.mxu0 0.0
    %1549 = vmatpush1.msra.mxu0 %v1232
    %1550 = vmatprep.subr.mxu0 0.0
    %1551 = vmatpush1.msra.mxu0 %v1233
    %1552 = vmatprep.subr.mxu0 0.0
    %1553 = vmatpush1.msra.mxu0 0.0
    %1554 = vmatprep.subr.mxu0 0.0
    %1555 = vmatpush1.msra.mxu0 0.0
    %1556 = vmatprep.subr.mxu0 0.0
    %1557 = vmatpush1.msra.mxu0 0.0
    %1558 = vmatprep.subr.mxu0 0.0
    %1559 = vmatpush1.msra.mxu0 0.0
    %1560 = vmatprep.subr.mxu0 0.0
    %1561 = vmatpush1.msra.mxu0 0.0
    %1562 = vmatprep.subr.mxu0 0.0
    %1563 = vmatpush1.msra.mxu0 0.0
    %1564 = vmatprep.subr.mxu0 0.0
    %1565 = vmatpush1.msra.mxu0 0.0
    %1566 = vmatprep.subr.mxu0 0.0
    %1567 = vmatpush1.msra.mxu0 0.0
    %1568 = vmatprep.subr.mxu0 0.0
    %1569 = vmatpush1.msra.mxu0 0.0
    %1570 = vmatprep.subr.mxu0 0.0
    %1571 = vmatpush1.msra.mxu0 0.0
    %1572 = vmatprep.subr.mxu0 0.0
    %1573 = vmatpush1.msra.mxu0 0.0
    %1574 = vmatprep.subr.mxu0 0.0
    %1575 = vmatpush1.msra.mxu0 0.0
    %1576 = vmatprep.subr.mxu0 0.0
    %1577 = vmatpush1.msra.mxu0 0.0
    %1578 = vmatprep.subr.mxu0 0.0
    %1579 = vmatpush1.msra.mxu0 0.0
    %1580 = vmatprep.subr.mxu0 0.0
    %1581 = vmatpush1.msra.mxu0 0.0
    %1582 = vmatprep.subr.mxu0 0.0
    %1583 = vmatpush1.msra.mxu0 0.0
    %1584 = vmatprep.subr.mxu0 0.0
    %1585 = vmatpush1.msra.mxu0 0.0
    %1586 = vmatprep.subr.mxu0 0.0
    %1587 = vmatpush1.msra.mxu0 0.0
    %1588 = vmatprep.subr.mxu0 0.0
    %1589 = vmatpush1.msra.mxu0 0.0
    %1590 = vmatprep.subr.mxu0 0.0
    %1591 = vmatpush1.msra.mxu0 0.0
    %1592 = vmatprep.subr.mxu0 0.0
    %1593 = vmatpush1.msra.mxu0 0.0
    %1594 = vmatprep.subr.mxu0 0.0
    %1595 = vmatpush1.msra.mxu0 0.0
    %1596 = vmatprep.subr.mxu0 0.0
    %1597 = vmatpush1.msra.mxu0 0.0
    %1598 = vmatprep.subr.mxu0 0.0
    %1599 = vmatpush1.msra.mxu0 0.0
    %1600 = vmatprep.subr.mxu0 0.0
    %1601 = vmatpush1.msra.mxu0 0.0
    %1602 = vmatprep.subr.mxu0 0.0
    %1603 = vmatpush1.msra.mxu0 0.0
    %1604 = vmatprep.subr.mxu0 0.0
    %1605 = vmatpush1.msra.mxu0 0.0
    %1606 = vmatprep.subr.mxu0 0.0
    %1607 = vmatpush1.msra.mxu0 0.0
    %1608 = vmatprep.mubr.f32.mxu0 0.0
    %1609 = vmatmul.mubr.f32.gmra.mrb[0].mxu0 %v1542
    %v1610 = vpop.f32.mrb[0].mxu0
    %v1611 = vadd.f32 0.0, %v1610
    %v1612 = vpop.f32.mrb[0].mxu0
    %1613 = vdwg.mxu0
    %v1614 = vadd.f32 %v1541, %v1611
    %v1615 = vxor.u32 %v1614, 2147483648
    %v1616 = vmul.f32 %v1615, 1.442695
    %v1617 = vpow.pop %v1616
    %v1618 = vadd.f32 %v1617, 1.0
    %v1619 = vrcp.pop %v1618
    %v1620 = vmul.f32 1.0, %v1619
    %v1621 = vtanh.pop %v1614
    %v1622 = vmul.f32 %v1620, %v1529
    %1624 = vrot.lane.b32.xlu0 %v1621, 64
    %v1625 = vpop.permute.xlu0 %1624
    %v1627 = vmul.f32 %v1620, %v1625
    %1629 = vrot.lane.b32.xlu0 %v1627, 32
    %v1630 = vpop.permute.xlu0 %1629
    %v1632 = vadd.f32 %v1622, %v1630
    %v1633 = vtanh.pop %v1632
    %1635 = vrot.lane.b32.xlu0 %v1633, 64
    %v1636 = vpop.permute.xlu0 %1635
    %v1638 = vmul.f32 %v1620, %v1636
    %1640 = vrot.lane.b32.xlu0 %v1638, 32
    %v1641 = vpop.permute.xlu0 %1640
    %1643 = vst.msk [vmem:[#allocation3 + $0x6] sm:$0x3] %vm404, %v1641
    %v1644 = vld [vmem:[#allocation4 + $0x8] sm:$0x3]
    %v1645 = vsel %vm300, %v1641, 0
    %1647 = vmatprep.subr.mxu0 0.0
    %1648 = vmatpush1.msra.mxu0 %v1230
    %1649 = vmatprep.subr.mxu0 0.0
    %1650 = vmatpush1.msra.mxu0 %v1231
    %1651 = vmatprep.subr.mxu0 0.0
    %1652 = vmatpush1.msra.mxu0 %v1232
    %1653 = vmatprep.subr.mxu0 0.0
    %1654 = vmatpush1.msra.mxu0 %v1233
    %1655 = vmatprep.subr.mxu0 0.0
    %1656 = vmatpush1.msra.mxu0 0.0
    %1657 = vmatprep.subr.mxu0 0.0
    %1658 = vmatpush1.msra.mxu0 0.0
    %1659 = vmatprep.subr.mxu0 0.0
    %1660 = vmatpush1.msra.mxu0 0.0
    %1661 = vmatprep.subr.mxu0 0.0
    %1662 = vmatpush1.msra.mxu0 0.0
    %1663 = vmatprep.subr.mxu0 0.0
    %1664 = vmatpush1.msra.mxu0 0.0
    %1665 = vmatprep.subr.mxu0 0.0
    %1666 = vmatpush1.msra.mxu0 0.0
    %1667 = vmatprep.subr.mxu0 0.0
    %1668 = vmatpush1.msra.mxu0 0.0
    %1669 = vmatprep.subr.mxu0 0.0
    %1670 = vmatpush1.msra.mxu0 0.0
    %1671 = vmatprep.subr.mxu0 0.0
    %1672 = vmatpush1.msra.mxu0 0.0
    %1673 = vmatprep.subr.mxu0 0.0
    %1674 = vmatpush1.msra.mxu0 0.0
    %1675 = vmatprep.subr.mxu0 0.0
    %1676 = vmatpush1.msra.mxu0 0.0
    %1677 = vmatprep.subr.mxu0 0.0
    %1678 = vmatpush1.msra.mxu0 0.0
    %1679 = vmatprep.subr.mxu0 0.0
    %1680 = vmatpush1.msra.mxu0 0.0
    %1681 = vmatprep.subr.mxu0 0.0
    %1682 = vmatpush1.msra.mxu0 0.0
    %1683 = vmatprep.subr.mxu0 0.0
    %1684 = vmatpush1.msra.mxu0 0.0
    %1685 = vmatprep.subr.mxu0 0.0
    %1686 = vmatpush1.msra.mxu0 0.0
    %1687 = vmatprep.subr.mxu0 0.0
    %1688 = vmatpush1.msra.mxu0 0.0
    %1689 = vmatprep.subr.mxu0 0.0
    %1690 = vmatpush1.msra.mxu0 0.0
    %1691 = vmatprep.subr.mxu0 0.0
    %1692 = vmatpush1.msra.mxu0 0.0
    %1693 = vmatprep.subr.mxu0 0.0
    %1694 = vmatpush1.msra.mxu0 0.0
    %1695 = vmatprep.subr.mxu0 0.0
    %1696 = vmatpush1.msra.mxu0 0.0
    %1697 = vmatprep.subr.mxu0 0.0
    %1698 = vmatpush1.msra.mxu0 0.0
    %1699 = vmatprep.subr.mxu0 0.0
    %1700 = vmatpush1.msra.mxu0 0.0
    %1701 = vmatprep.subr.mxu0 0.0
    %1702 = vmatpush1.msra.mxu0 0.0
    %1703 = vmatprep.subr.mxu0 0.0
    %1704 = vmatpush1.msra.mxu0 0.0
    %1705 = vmatprep.subr.mxu0 0.0
    %1706 = vmatpush1.msra.mxu0 0.0
    %1707 = vmatprep.subr.mxu0 0.0
    %1708 = vmatpush1.msra.mxu0 0.0
    %1709 = vmatprep.subr.mxu0 0.0
    %1710 = vmatpush1.msra.mxu0 0.0
    %1711 = vmatprep.mubr.f32.mxu0 0.0
    %1712 = vmatmul.mubr.f32.gmra.mrb[0].mxu0 %v1645
    %v1713 = vpop.f32.mrb[0].mxu0
    %v1714 = vadd.f32 0.0, %v1713
    %v1715 = vpop.f32.mrb[0].mxu0
    %1716 = vdwg.mxu0
    %v1717 = vadd.f32 %v1644, %v1714
    %v1718 = vxor.u32 %v1717, 2147483648
    %v1719 = vmul.f32 %v1718, 1.442695
    %v1720 = vpow.pop %v1719
    %v1721 = vadd.f32 %v1720, 1.0
    %v1722 = vrcp.pop %v1721
    %v1723 = vmul.f32 1.0, %v1722
    %v1724 = vtanh.pop %v1717
    %v1725 = vmul.f32 %v1723, %v1632
    %1727 = vrot.lane.b32.xlu0 %v1724, 64
    %v1728 = vpop.permute.xlu0 %1727
    %v1730 = vmul.f32 %v1723, %v1728
    %1732 = vrot.lane.b32.xlu0 %v1730, 32
    %v1733 = vpop.permute.xlu0 %1732
    %v1735 = vadd.f32 %v1725, %v1733
    %v1736 = vtanh.pop %v1735
    %1738 = vrot.lane.b32.xlu0 %v1736, 64
    %v1739 = vpop.permute.xlu0 %1738
    %v1741 = vmul.f32 %v1723, %v1739
    %1743 = vrot.lane.b32.xlu0 %v1741, 32
    %v1744 = vpop.permute.xlu0 %1743
    %1746 = vst.msk [vmem:[#allocation3 + $0x8] sm:$0x3] %vm404, %v1744
    %v1747 = vld [vmem:[#allocation4 + $0xa] sm:$0x3]
    %v1748 = vsel %vm300, %v1744, 0
    %1750 = vmatprep.subr.mxu0 0.0
    %1751 = vmatpush1.msra.mxu0 %v1230
    %1752 = vmatprep.subr.mxu0 0.0
    %1753 = vmatpush1.msra.mxu0 %v1231
    %1754 = vmatprep.subr.mxu0 0.0
    %1755 = vmatpush1.msra.mxu0 %v1232
    %1756 = vmatprep.subr.mxu0 0.0
    %1757 = vmatpush1.msra.mxu0 %v1233
    %1758 = vmatprep.subr.mxu0 0.0
    %1759 = vmatpush1.msra.mxu0 0.0
    %1760 = vmatprep.subr.mxu0 0.0
    %1761 = vmatpush1.msra.mxu0 0.0
    %1762 = vmatprep.subr.mxu0 0.0
    %1763 = vmatpush1.msra.mxu0 0.0
    %1764 = vmatprep.subr.mxu0 0.0
    %1765 = vmatpush1.msra.mxu0 0.0
    %1766 = vmatprep.subr.mxu0 0.0
    %1767 = vmatpush1.msra.mxu0 0.0
    %1768 = vmatprep.subr.mxu0 0.0
    %1769 = vmatpush1.msra.mxu0 0.0
    %1770 = vmatprep.subr.mxu0 0.0
    %1771 = vmatpush1.msra.mxu0 0.0
    %1772 = vmatprep.subr.mxu0 0.0
    %1773 = vmatpush1.msra.mxu0 0.0
    %1774 = vmatprep.subr.mxu0 0.0
    %1775 = vmatpush1.msra.mxu0 0.0
    %1776 = vmatprep.subr.mxu0 0.0
    %1777 = vmatpush1.msra.mxu0 0.0
    %1778 = vmatprep.subr.mxu0 0.0
    %1779 = vmatpush1.msra.mxu0 0.0
    %1780 = vmatprep.subr.mxu0 0.0
    %1781 = vmatpush1.msra.mxu0 0.0
    %1782 = vmatprep.subr.mxu0 0.0
    %1783 = vmatpush1.msra.mxu0 0.0
    %1784 = vmatprep.subr.mxu0 0.0
    %1785 = vmatpush1.msra.mxu0 0.0
    %1786 = vmatprep.subr.mxu0 0.0
    %1787 = vmatpush1.msra.mxu0 0.0
    %1788 = vmatprep.subr.mxu0 0.0
    %1789 = vmatpush1.msra.mxu0 0.0
    %1790 = vmatprep.subr.mxu0 0.0
    %1791 = vmatpush1.msra.mxu0 0.0
    %1792 = vmatprep.subr.mxu0 0.0
    %1793 = vmatpush1.msra.mxu0 0.0
    %1794 = vmatprep.subr.mxu0 0.0
    %1795 = vmatpush1.msra.mxu0 0.0
    %1796 = vmatprep.subr.mxu0 0.0
    %1797 = vmatpush1.msra.mxu0 0.0
    %1798 = vmatprep.subr.mxu0 0.0
    %1799 = vmatpush1.msra.mxu0 0.0
    %1800 = vmatprep.subr.mxu0 0.0
    %1801 = vmatpush1.msra.mxu0 0.0
    %1802 = vmatprep.subr.mxu0 0.0
    %1803 = vmatpush1.msra.mxu0 0.0
    %1804 = vmatprep.subr.mxu0 0.0
    %1805 = vmatpush1.msra.mxu0 0.0
    %1806 = vmatprep.subr.mxu0 0.0
    %1807 = vmatpush1.msra.mxu0 0.0
    %1808 = vmatprep.subr.mxu0 0.0
    %1809 = vmatpush1.msra.mxu0 0.0
    %1810 = vmatprep.subr.mxu0 0.0
    %1811 = vmatpush1.msra.mxu0 0.0
    %1812 = vmatprep.subr.mxu0 0.0
    %1813 = vmatpush1.msra.mxu0 0.0
    %1814 = vmatprep.mubr.f32.mxu0 0.0
    %1815 = vmatmul.mubr.f32.gmra.mrb[0].mxu0 %v1748
    %v1816 = vpop.f32.mrb[0].mxu0
    %v1817 = vadd.f32 0.0, %v1816
    %v1818 = vpop.f32.mrb[0].mxu0
    %1819 = vdwg.mxu0
    %v1820 = vadd.f32 %v1747, %v1817
    %v1821 = vxor.u32 %v1820, 2147483648
    %v1822 = vmul.f32 %v1821, 1.442695
    %v1823 = vpow.pop %v1822
    %v1824 = vadd.f32 %v1823, 1.0
    %v1825 = vrcp.pop %v1824
    %v1826 = vmul.f32 1.0, %v1825
    %v1827 = vtanh.pop %v1820
    %v1828 = vmul.f32 %v1826, %v1735
    %1830 = vrot.lane.b32.xlu0 %v1827, 64
    %v1831 = vpop.permute.xlu0 %1830
    %v1833 = vmul.f32 %v1826, %v1831
    %1835 = vrot.lane.b32.xlu0 %v1833, 32
    %v1836 = vpop.permute.xlu0 %1835
    %v1838 = vadd.f32 %v1828, %v1836
    %v1839 = vtanh.pop %v1838
    %1841 = vrot.lane.b32.xlu0 %v1839, 64
    %v1842 = vpop.permute.xlu0 %1841
    %v1844 = vmul.f32 %v1826, %v1842
    %1846 = vrot.lane.b32.xlu0 %v1844, 32
    %v1847 = vpop.permute.xlu0 %1846
    %1849 = vst.msk [vmem:[#allocation3 + $0xa] sm:$0x3] %vm404, %v1847
    %v1850 = vld [vmem:[#allocation4 + $0xc] sm:$0x3]
    %v1851 = vsel %vm300, %v1847, 0
    %1853 = vmatprep.subr.mxu0 0.0
    %1854 = vmatpush1.msra.mxu0 %v1230
    %1855 = vmatprep.subr.mxu0 0.0
    %1856 = vmatpush1.msra.mxu0 %v1231
    %1857 = vmatprep.subr.mxu0 0.0
    %1858 = vmatpush1.msra.mxu0 %v1232
    %1859 = vmatprep.subr.mxu0 0.0
    %1860 = vmatpush1.msra.mxu0 %v1233
    %1861 = vmatprep.subr.mxu0 0.0
    %1862 = vmatpush1.msra.mxu0 0.0
    %1863 = vmatprep.subr.mxu0 0.0
    %1864 = vmatpush1.msra.mxu0 0.0
    %1865 = vmatprep.subr.mxu0 0.0
    %1866 = vmatpush1.msra.mxu0 0.0
    %1867 = vmatprep.subr.mxu0 0.0
    %1868 = vmatpush1.msra.mxu0 0.0
    %1869 = vmatprep.subr.mxu0 0.0
    %1870 = vmatpush1.msra.mxu0 0.0
    %1871 = vmatprep.subr.mxu0 0.0
    %1872 = vmatpush1.msra.mxu0 0.0
    %1873 = vmatprep.subr.mxu0 0.0
    %1874 = vmatpush1.msra.mxu0 0.0
    %1875 = vmatprep.subr.mxu0 0.0
    %1876 = vmatpush1.msra.mxu0 0.0
    %1877 = vmatprep.subr.mxu0 0.0
    %1878 = vmatpush1.msra.mxu0 0.0
    %1879 = vmatprep.subr.mxu0 0.0
    %1880 = vmatpush1.msra.mxu0 0.0
    %1881 = vmatprep.subr.mxu0 0.0
    %1882 = vmatpush1.msra.mxu0 0.0
    %1883 = vmatprep.subr.mxu0 0.0
    %1884 = vmatpush1.msra.mxu0 0.0
    %1885 = vmatprep.subr.mxu0 0.0
    %1886 = vmatpush1.msra.mxu0 0.0
    %1887 = vmatprep.subr.mxu0 0.0
    %1888 = vmatpush1.msra.mxu0 0.0
    %1889 = vmatprep.subr.mxu0 0.0
    %1890 = vmatpush1.msra.mxu0 0.0
    %1891 = vmatprep.subr.mxu0 0.0
    %1892 = vmatpush1.msra.mxu0 0.0
    %1893 = vmatprep.subr.mxu0 0.0
    %1894 = vmatpush1.msra.mxu0 0.0
    %1895 = vmatprep.subr.mxu0 0.0
    %1896 = vmatpush1.msra.mxu0 0.0
    %1897 = vmatprep.subr.mxu0 0.0
    %1898 = vmatpush1.msra.mxu0 0.0
    %1899 = vmatprep.subr.mxu0 0.0
    %1900 = vmatpush1.msra.mxu0 0.0
    %1901 = vmatprep.subr.mxu0 0.0
    %1902 = vmatpush1.msra.mxu0 0.0
    %1903 = vmatprep.subr.mxu0 0.0
    %1904 = vmatpush1.msra.mxu0 0.0
    %1905 = vmatprep.subr.mxu0 0.0
    %1906 = vmatpush1.msra.mxu0 0.0
    %1907 = vmatprep.subr.mxu0 0.0
    %1908 = vmatpush1.msra.mxu0 0.0
    %1909 = vmatprep.subr.mxu0 0.0
    %1910 = vmatpush1.msra.mxu0 0.0
    %1911 = vmatprep.subr.mxu0 0.0
    %1912 = vmatpush1.msra.mxu0 0.0
    %1913 = vmatprep.subr.mxu0 0.0
    %1914 = vmatpush1.msra.mxu0 0.0
    %1915 = vmatprep.subr.mxu0 0.0
    %1916 = vmatpush1.msra.mxu0 0.0
    %1917 = vmatprep.mubr.f32.mxu0 0.0
    %1918 = vmatmul.mubr.f32.gmra.mrb[0].mxu0 %v1851
    %v1919 = vpop.f32.mrb[0].mxu0
    %v1920 = vadd.f32 0.0, %v1919
    %v1921 = vpop.f32.mrb[0].mxu0
    %1922 = vdwg.mxu0
    %v1923 = vadd.f32 %v1850, %v1920
    %v1924 = vxor.u32 %v1923, 2147483648
    %v1925 = vmul.f32 %v1924, 1.442695
    %v1926 = vpow.pop %v1925
    %v1927 = vadd.f32 %v1926, 1.0
    %v1928 = vrcp.pop %v1927
    %v1929 = vmul.f32 1.0, %v1928
    %v1930 = vtanh.pop %v1923
    %v1931 = vmul.f32 %v1929, %v1838
    %1933 = vrot.lane.b32.xlu0 %v1930, 64
    %v1934 = vpop.permute.xlu0 %1933
    %v1936 = vmul.f32 %v1929, %v1934
    %1938 = vrot.lane.b32.xlu0 %v1936, 32
    %v1939 = vpop.permute.xlu0 %1938
    %v1941 = vadd.f32 %v1931, %v1939
    %v1942 = vtanh.pop %v1941
    %1944 = vrot.lane.b32.xlu0 %v1942, 64
    %v1945 = vpop.permute.xlu0 %1944
    %v1947 = vmul.f32 %v1929, %v1945
    %1949 = vrot.lane.b32.xlu0 %v1947, 32
    %v1950 = vpop.permute.xlu0 %1949
    %1952 = vst.msk [vmem:[#allocation3 + $0xc] sm:$0x3] %vm404, %v1950
    %v1953 = vld [vmem:[#allocation4 + $0xe] sm:$0x3]
    %v1954 = vsel %vm300, %v1950, 0
    %1956 = vmatprep.subr.mxu0 0.0
    %1957 = vmatpush1.msra.mxu0 %v1230
    %1958 = vmatprep.subr.mxu0 0.0
    %1959 = vmatpush1.msra.mxu0 %v1231
    %1960 = vmatprep.subr.mxu0 0.0
    %1961 = vmatpush1.msra.mxu0 %v1232
    %1962 = vmatprep.subr.mxu0 0.0
    %1963 = vmatpush1.msra.mxu0 %v1233
    %1964 = vmatprep.subr.mxu0 0.0
    %1965 = vmatpush1.msra.mxu0 0.0
    %1966 = vmatprep.subr.mxu0 0.0
    %1967 = vmatpush1.msra.mxu0 0.0
    %1968 = vmatprep.subr.mxu0 0.0
    %1969 = vmatpush1.msra.mxu0 0.0
    %1970 = vmatprep.subr.mxu0 0.0
    %1971 = vmatpush1.msra.mxu0 0.0
    %1972 = vmatprep.subr.mxu0 0.0
    %1973 = vmatpush1.msra.mxu0 0.0
    %1974 = vmatprep.subr.mxu0 0.0
    %1975 = vmatpush1.msra.mxu0 0.0
    %1976 = vmatprep.subr.mxu0 0.0
    %1977 = vmatpush1.msra.mxu0 0.0
    %1978 = vmatprep.subr.mxu0 0.0
    %1979 = vmatpush1.msra.mxu0 0.0
    %1980 = vmatprep.subr.mxu0 0.0
    %1981 = vmatpush1.msra.mxu0 0.0
    %1982 = vmatprep.subr.mxu0 0.0
    %1983 = vmatpush1.msra.mxu0 0.0
    %1984 = vmatprep.subr.mxu0 0.0
    %1985 = vmatpush1.msra.mxu0 0.0
    %1986 = vmatprep.subr.mxu0 0.0
    %1987 = vmatpush1.msra.mxu0 0.0
    %1988 = vmatprep.subr.mxu0 0.0
    %1989 = vmatpush1.msra.mxu0 0.0
    %1990 = vmatprep.subr.mxu0 0.0
    %1991 = vmatpush1.msra.mxu0 0.0
    %1992 = vmatprep.subr.mxu0 0.0
    %1993 = vmatpush1.msra.mxu0 0.0
    %1994 = vmatprep.subr.mxu0 0.0
    %1995 = vmatpush1.msra.mxu0 0.0
    %1996 = vmatprep.subr.mxu0 0.0
    %1997 = vmatpush1.msra.mxu0 0.0
    %1998 = vmatprep.subr.mxu0 0.0
    %1999 = vmatpush1.msra.mxu0 0.0
    %2000 = vmatprep.subr.mxu0 0.0
    %2001 = vmatpush1.msra.mxu0 0.0
    %2002 = vmatprep.subr.mxu0 0.0
    %2003 = vmatpush1.msra.mxu0 0.0
    %2004 = vmatprep.subr.mxu0 0.0
    %2005 = vmatpush1.msra.mxu0 0.0
    %2006 = vmatprep.subr.mxu0 0.0
    %2007 = vmatpush1.msra.mxu0 0.0
    %2008 = vmatprep.subr.mxu0 0.0
    %2009 = vmatpush1.msra.mxu0 0.0
    %2010 = vmatprep.subr.mxu0 0.0
    %2011 = vmatpush1.msra.mxu0 0.0
    %2012 = vmatprep.subr.mxu0 0.0
    %2013 = vmatpush1.msra.mxu0 0.0
    %2014 = vmatprep.subr.mxu0 0.0
    %2015 = vmatpush1.msra.mxu0 0.0
    %2016 = vmatprep.subr.mxu0 0.0
    %2017 = vmatpush1.msra.mxu0 0.0
    %2018 = vmatprep.subr.mxu0 0.0
    %2019 = vmatpush1.msra.mxu0 0.0
    %2020 = vmatprep.mubr.f32.mxu0 0.0
    %2021 = vmatmul.mubr.f32.gmra.mrb[0].mxu0 %v1954
    %v2022 = vpop.f32.mrb[0].mxu0
    %v2023 = vadd.f32 0.0, %v2022
    %v2024 = vpop.f32.mrb[0].mxu0
    %2025 = vdwg.mxu0
    %v2026 = vadd.f32 %v1953, %v2023
    %v2027 = vxor.u32 %v2026, 2147483648
    %v2028 = vmul.f32 %v2027, 1.442695
    %v2029 = vpow.pop %v2028
    %v2030 = vadd.f32 %v2029, 1.0
    %v2031 = vrcp.pop %v2030
    %v2032 = vmul.f32 1.0, %v2031
    %v2033 = vtanh.pop %v2026
    %v2034 = vmul.f32 %v2032, %v1941
    %2036 = vrot.lane.b32.xlu0 %v2033, 64
    %v2037 = vpop.permute.xlu0 %2036
    %v2039 = vmul.f32 %v2032, %v2037
    %2041 = vrot.lane.b32.xlu0 %v2039, 32
    %v2042 = vpop.permute.xlu0 %2041
    %v2044 = vadd.f32 %v2034, %v2042
    %v2045 = vtanh.pop %v2044
    %2047 = vrot.lane.b32.xlu0 %v2045, 64
    %v2048 = vpop.permute.xlu0 %2047
    %v2050 = vmul.f32 %v2032, %v2048
    %2052 = vrot.lane.b32.xlu0 %v2050, 32
    %v2053 = vpop.permute.xlu0 %2052
    %2055 = vst.msk [vmem:[#allocation3 + $0xe] sm:$0x3] %vm404, %v2053
    %v2056 = vld [vmem:[#allocation3] sm:$0xff]
    %v2057 = vld [vmem:[#allocation3 + $0x8] sm:$0xff]
    %v2058 = vld [vmem:[%s9] sm:$0xff]
    %v2059 = vld [vmem:[%s9 + $0x8] sm:$0xff]
    %v2060 = vld [vmem:[%s9 + $0x10] sm:$0xff]
    %v2061 = vld [vmem:[%s9 + $0x18] sm:$0xff]
    %v2062 = vld [vmem:[#allocation12] sm:$0x1]
    %v2064 = vlaneseq
    %v2065 = vshrl.u32 %v2064, 7
    %v2066 = vsub.s32 0, %v2065
    %v2067 = vrot.slane %v2062, %v2066
    %v2070 = vsel %vm300, %v2056, 0
    %v2073 = vsel %vm300, %v2057, 0
    %2075 = vmatprep.subr.mxu0 0.0
    %2076 = vmatpush1.msra.mxu0 %v2058
    %2077 = vmatprep.subr.mxu0 0.0
    %2078 = vmatpush1.msra.mxu0 %v2059
    %2079 = vmatprep.subr.mxu0 0.0
    %2080 = vmatpush1.msra.mxu0 %v2060
    %2081 = vmatprep.subr.mxu0 0.0
    %2082 = vmatpush1.msra.mxu0 %v2061
    %2083 = vmatprep.subr.mxu0 0.0
    %2084 = vmatpush1.msra.mxu0 0.0
    %2085 = vmatprep.subr.mxu0 0.0
    %2086 = vmatpush1.msra.mxu0 0.0
    %2087 = vmatprep.subr.mxu0 0.0
    %2088 = vmatpush1.msra.mxu0 0.0
    %2089 = vmatprep.subr.mxu0 0.0
    %2090 = vmatpush1.msra.mxu0 0.0
    %2091 = vmatprep.subr.mxu0 0.0
    %2092 = vmatpush1.msra.mxu0 0.0
    %2093 = vmatprep.subr.mxu0 0.0
    %2094 = vmatpush1.msra.mxu0 0.0
    %2095 = vmatprep.subr.mxu0 0.0
    %2096 = vmatpush1.msra.mxu0 0.0
    %2097 = vmatprep.subr.mxu0 0.0
    %2098 = vmatpush1.msra.mxu0 0.0
    %2099 = vmatprep.subr.mxu0 0.0
    %2100 = vmatpush1.msra.mxu0 0.0
    %2101 = vmatprep.subr.mxu0 0.0
    %2102 = vmatpush1.msra.mxu0 0.0
    %2103 = vmatprep.subr.mxu0 0.0
    %2104 = vmatpush1.msra.mxu0 0.0
    %2105 = vmatprep.subr.mxu0 0.0
    %2106 = vmatpush1.msra.mxu0 0.0
    %2107 = vmatprep.subr.mxu0 0.0
    %2108 = vmatpush1.msra.mxu0 0.0
    %2109 = vmatprep.subr.mxu0 0.0
    %2110 = vmatpush1.msra.mxu0 0.0
    %2111 = vmatprep.subr.mxu0 0.0
    %2112 = vmatpush1.msra.mxu0 0.0
    %2113 = vmatprep.subr.mxu0 0.0
    %2114 = vmatpush1.msra.mxu0 0.0
    %2115 = vmatprep.subr.mxu0 0.0
    %2116 = vmatpush1.msra.mxu0 0.0
    %2117 = vmatprep.subr.mxu0 0.0
    %2118 = vmatpush1.msra.mxu0 0.0
    %2119 = vmatprep.subr.mxu0 0.0
    %2120 = vmatpush1.msra.mxu0 0.0
    %2121 = vmatprep.subr.mxu0 0.0
    %2122 = vmatpush1.msra.mxu0 0.0
    %2123 = vmatprep.subr.mxu0 0.0
    %2124 = vmatpush1.msra.mxu0 0.0
    %2125 = vmatprep.subr.mxu0 0.0
    %2126 = vmatpush1.msra.mxu0 0.0
    %2127 = vmatprep.subr.mxu0 0.0
    %2128 = vmatpush1.msra.mxu0 0.0
    %2129 = vmatprep.subr.mxu0 0.0
    %2130 = vmatpush1.msra.mxu0 0.0
    %2131 = vmatprep.subr.mxu0 0.0
    %2132 = vmatpush1.msra.mxu0 0.0
    %2133 = vmatprep.subr.mxu0 0.0
    %2134 = vmatpush1.msra.mxu0 0.0
    %2135 = vmatprep.subr.mxu0 0.0
    %2136 = vmatpush1.msra.mxu0 0.0
    %2137 = vmatprep.subr.mxu0 0.0
    %2138 = vmatpush1.msra.mxu0 0.0
    %2139 = vmatprep.mubr.f32.mxu0 0.0
    %2140 = vmatmul.mubr.f32.gmra.mrb[0].mxu0 %v2070
    %v2141 = vpop.f32.mrb[0].mxu0
    %v2142 = vadd.f32 %v2067, %v2141
    %v2143 = vpop.f32.mrb[0].mxu0
    %2144 = vmatprep.mubr.f32.mxu0 0.0
    %2145 = vmatmul.mubr.f32.gmra.mrb[0].mxu0 %v2073
    %v2146 = vpop.f32.mrb[0].mxu0
    %v2147 = vadd.f32 %v2067, %v2146
    %v2148 = vpop.f32.mrb[0].mxu0
    %2149 = vdwg.mxu0
    %v2150 = vmax.f32 %v2142, 0.0
    %v2151 = vmax.f32 %v2147, 0.0
    %2152 = vst.msk [vmem:[#allocation5] sm:$0xff] %vm194, %v2150
    %2153 = vst.msk [vmem:[#allocation5 + $0x8] sm:$0xff] %vm194, %v2151
    %v2154 = vld [vmem:[#allocation5] sm:$0x3]
    %v2155 = vld [vmem:[#allocation5 + $0x2] sm:$0x3]
    %v2156 = vld [vmem:[#allocation5 + $0x4] sm:$0x3]
    %v2157 = vld [vmem:[#allocation5 + $0x6] sm:$0x3]
    %v2158 = vld [vmem:[#allocation5 + $0x8] sm:$0x3]
    %v2159 = vld [vmem:[#allocation5 + $0xa] sm:$0x3]
    %v2160 = vld [vmem:[#allocation5 + $0xc] sm:$0x3]
    %v2161 = vld [vmem:[#allocation5 + $0xe] sm:$0x3]
    %2163 = vrot.lane.b32.xlu0 %v2155, 4
    %v2164 = vpop.permute.xlu0 %2163
    %2167 = vrot.lane.b32.xlu0 %v2156, 8
    %v2168 = vpop.permute.xlu0 %2167
    %2171 = vrot.lane.b32.xlu0 %v2157, 12
    %v2172 = vpop.permute.xlu0 %2171
    %2175 = vrot.lane.b32.xlu0 %v2158, 16
    %v2176 = vpop.permute.xlu0 %2175
    %2179 = vrot.lane.b32.xlu0 %v2159, 20
    %v2180 = vpop.permute.xlu0 %2179
    %2183 = vrot.lane.b32.xlu0 %v2160, 24
    %v2184 = vpop.permute.xlu0 %2183
    %2187 = vrot.lane.b32.xlu0 %v2161, 28
    %v2188 = vpop.permute.xlu0 %2187
    %v2190 = vsel %vm194, %v2154, %v2164
    %vm2191 = vcmask 64512
    %v2192 = vsel %vm2191, %v2190, %v2168
    %vm2193 = vcmask 97280
    %v2194 = vsel %vm2193, %v2192, %v2172
    %vm2195 = vcmask 130048
    %v2196 = vsel %vm2195, %v2194, %v2176
    %vm2197 = vcmask 162816
    %v2198 = vsel %vm2197, %v2196, %v2180
    %vm2199 = vcmask 195584
    %v2200 = vsel %vm2199, %v2198, %v2184
    %vm2201 = vcmask 228352
    %v2202 = vsel %vm2201, %v2200, %v2188
    %v2203 = vld [vmem:[%s11] sm:$0xff]
    %v2204 = vld [vmem:[%s11 + $0x8] sm:$0xff]
    %v2205 = vld [vmem:[%s11 + $0x10] sm:$0xff]
    %v2206 = vld [vmem:[%s11 + $0x18] sm:$0xff]
    %v2207 = vld [vmem:[#allocation13] sm:$0x1]
    %v2209 = vlaneseq
    %v2210 = vshrl.u32 %v2209, 7
    %v2211 = vsub.s32 0, %v2210
    %v2212 = vrot.slane %v2207, %v2211
    %v2214 = vmul.f32 %v286, %v2212
    %v2216 = vsel %vm300, %v2202, 0
    %2218 = vmatprep.subr.mxu0 0.0
    %2219 = vmatpush1.msra.mxu0 %v2203
    %2220 = vmatprep.subr.mxu0 0.0
    %2221 = vmatpush1.msra.mxu0 %v2204
    %2222 = vmatprep.subr.mxu0 0.0
    %2223 = vmatpush1.msra.mxu0 %v2205
    %2224 = vmatprep.subr.mxu0 0.0
    %2225 = vmatpush1.msra.mxu0 %v2206
    %2226 = vmatprep.subr.mxu0 0.0
    %2227 = vmatpush1.msra.mxu0 0.0
    %2228 = vmatprep.subr.mxu0 0.0
    %2229 = vmatpush1.msra.mxu0 0.0
    %2230 = vmatprep.subr.mxu0 0.0
    %2231 = vmatpush1.msra.mxu0 0.0
    %2232 = vmatprep.subr.mxu0 0.0
    %2233 = vmatpush1.msra.mxu0 0.0
    %2234 = vmatprep.subr.mxu0 0.0
    %2235 = vmatpush1.msra.mxu0 0.0
    %2236 = vmatprep.subr.mxu0 0.0
    %2237 = vmatpush1.msra.mxu0 0.0
    %2238 = vmatprep.subr.mxu0 0.0
    %2239 = vmatpush1.msra.mxu0 0.0
    %2240 = vmatprep.subr.mxu0 0.0
    %2241 = vmatpush1.msra.mxu0 0.0
    %2242 = vmatprep.subr.mxu0 0.0
    %2243 = vmatpush1.msra.mxu0 0.0
    %2244 = vmatprep.subr.mxu0 0.0
    %2245 = vmatpush1.msra.mxu0 0.0
    %2246 = vmatprep.subr.mxu0 0.0
    %2247 = vmatpush1.msra.mxu0 0.0
    %2248 = vmatprep.subr.mxu0 0.0
    %2249 = vmatpush1.msra.mxu0 0.0
    %2250 = vmatprep.subr.mxu0 0.0
    %2251 = vmatpush1.msra.mxu0 0.0
    %2252 = vmatprep.subr.mxu0 0.0
    %2253 = vmatpush1.msra.mxu0 0.0
    %2254 = vmatprep.subr.mxu0 0.0
    %2255 = vmatpush1.msra.mxu0 0.0
    %2256 = vmatprep.subr.mxu0 0.0
    %2257 = vmatpush1.msra.mxu0 0.0
    %2258 = vmatprep.subr.mxu0 0.0
    %2259 = vmatpush1.msra.mxu0 0.0
    %2260 = vmatprep.subr.mxu0 0.0
    %2261 = vmatpush1.msra.mxu0 0.0
    %2262 = vmatprep.subr.mxu0 0.0
    %2263 = vmatpush1.msra.mxu0 0.0
    %2264 = vmatprep.subr.mxu0 0.0
    %2265 = vmatpush1.msra.mxu0 0.0
    %2266 = vmatprep.subr.mxu0 0.0
    %2267 = vmatpush1.msra.mxu0 0.0
    %2268 = vmatprep.subr.mxu0 0.0
    %2269 = vmatpush1.msra.mxu0 0.0
    %2270 = vmatprep.subr.mxu0 0.0
    %2271 = vmatpush1.msra.mxu0 0.0
    %2272 = vmatprep.subr.mxu0 0.0
    %2273 = vmatpush1.msra.mxu0 0.0
    %2274 = vmatprep.subr.mxu0 0.0
    %2275 = vmatpush1.msra.mxu0 0.0
    %2276 = vmatprep.subr.mxu0 0.0
    %2277 = vmatpush1.msra.mxu0 0.0
    %2278 = vmatprep.subr.mxu0 0.0
    %2279 = vmatpush1.msra.mxu0 0.0
    %2280 = vmatprep.subr.mxu0 0.0
    %2281 = vmatpush1.msra.mxu0 0.0
    %2282 = vmatprep.mubr.f32.mxu0 0.0
    %2283 = vmatmul.mubr.f32.gmra.mrb[0].mxu0 %v2216
    %v2284 = vpop.f32.mrb[0].mxu0
    %v2285 = vadd.f32 %v2214, %v2284
    %v2286 = vpop.f32.mrb[0].mxu0
    %2287 = vdwg.mxu0
    %v2288 = vld [vmem:[#allocation15] sm:$0x1]
    %v2290 = vlaneseq
    %v2291 = vshrl.u32 %v2290, 7
    %v2292 = vsub.s32 0, %v2291
    %v2293 = vrot.slane %v2288, %v2292
    %v2295 = vadd.f32 %v2285, %v2293
    %vm2296 = vcmask 25600
    %2297 = vst.msk [vmem:[#allocation6] sm:$0x3] %vm2296, %v2295
    %2299 = vrot.lane.b32.xlu0 %v2295, 124
    %v2300 = vpop.permute.xlu0 %2299
    %2302 = vst.msk [vmem:[#allocation6 + $0x2] sm:$0x3] %vm2296, %v2300
    %2303 = vrot.lane.b32.xlu0 %v2295, 120
    %v2304 = vpop.permute.xlu0 %2303
    %2306 = vst.msk [vmem:[#allocation6 + $0x4] sm:$0x3] %vm2296, %v2304
    %2307 = vrot.lane.b32.xlu0 %v2295, 116
    %v2308 = vpop.permute.xlu0 %2307
    %2310 = vst.msk [vmem:[#allocation6 + $0x6] sm:$0x3] %vm2296, %v2308
    %2311 = vrot.lane.b32.xlu0 %v2295, 112
    %v2312 = vpop.permute.xlu0 %2311
    %2314 = vst.msk [vmem:[#allocation6 + $0x8] sm:$0x3] %vm2296, %v2312
    %2315 = vrot.lane.b32.xlu0 %v2295, 108
    %v2316 = vpop.permute.xlu0 %2315
    %2318 = vst.msk [vmem:[#allocation6 + $0xa] sm:$0x3] %vm2296, %v2316
    %2319 = vrot.lane.b32.xlu0 %v2295, 104
    %v2320 = vpop.permute.xlu0 %2319
    %2322 = vst.msk [vmem:[#allocation6 + $0xc] sm:$0x3] %vm2296, %v2320
    %2323 = vrot.lane.b32.xlu0 %v2295, 100
    %v2324 = vpop.permute.xlu0 %2323
    %2326 = vst.msk [vmem:[#allocation6 + $0xe] sm:$0x3] %vm2296, %v2324
    %v2327 = vld [vmem:[%s15] sm:$0xf]
    %v2328 = vld [vmem:[#allocation6] sm:$0xff]
    %v2329 = vld [vmem:[#allocation6 + $0x8] sm:$0xff]
    %v2330 = vld [vmem:[%s16] sm:$0xf]
    %v2332 = vsel %vm194, %v2328, 0
    %v2335 = vsel %vm194, %v2329, 0
    %v2338 = vsel %vm201, %v2330, 0
    %2340 = vmatprep.subr.mxu0 0.0
    %2341 = vmatpush1.msra.mxu0 %v2338
    %2342 = vmatprep.subr.mxu0 0.0
    %2343 = vmatpush1.msra.mxu0 0.0
    %2344 = vmatprep.subr.mxu0 0.0
    %2345 = vmatpush1.msra.mxu0 0.0
    %2346 = vmatprep.subr.mxu0 0.0
    %2347 = vmatpush1.msra.mxu0 0.0
    %2348 = vmatprep.subr.mxu0 0.0
    %2349 = vmatpush1.msra.mxu0 0.0
    %2350 = vmatprep.subr.mxu0 0.0
    %2351 = vmatpush1.msra.mxu0 0.0
    %2352 = vmatprep.subr.mxu0 0.0
    %2353 = vmatpush1.msra.mxu0 0.0
    %2354 = vmatprep.subr.mxu0 0.0
    %2355 = vmatpush1.msra.mxu0 0.0
    %2356 = vmatprep.subr.mxu0 0.0
    %2357 = vmatpush1.msra.mxu0 0.0
    %2358 = vmatprep.subr.mxu0 0.0
    %2359 = vmatpush1.msra.mxu0 0.0
    %2360 = vmatprep.subr.mxu0 0.0
    %2361 = vmatpush1.msra.mxu0 0.0
    %2362 = vmatprep.subr.mxu0 0.0
    %2363 = vmatpush1.msra.mxu0 0.0
    %2364 = vmatprep.subr.mxu0 0.0
    %2365 = vmatpush1.msra.mxu0 0.0
    %2366 = vmatprep.subr.mxu0 0.0
    %2367 = vmatpush1.msra.mxu0 0.0
    %2368 = vmatprep.subr.mxu0 0.0
    %2369 = vmatpush1.msra.mxu0 0.0
    %2370 = vmatprep.subr.mxu0 0.0
    %2371 = vmatpush1.msra.mxu0 0.0
    %2372 = vmatprep.subr.mxu0 0.0
    %2373 = vmatpush1.msra.mxu0 0.0
    %2374 = vmatprep.subr.mxu0 0.0
    %2375 = vmatpush1.msra.mxu0 0.0
    %2376 = vmatprep.subr.mxu0 0.0
    %2377 = vmatpush1.msra.mxu0 0.0
    %2378 = vmatprep.subr.mxu0 0.0
    %2379 = vmatpush1.msra.mxu0 0.0
    %2380 = vmatprep.subr.mxu0 0.0
    %2381 = vmatpush1.msra.mxu0 0.0
    %2382 = vmatprep.subr.mxu0 0.0
    %2383 = vmatpush1.msra.mxu0 0.0
    %2384 = vmatprep.subr.mxu0 0.0
    %2385 = vmatpush1.msra.mxu0 0.0
    %2386 = vmatprep.subr.mxu0 0.0
    %2387 = vmatpush1.msra.mxu0 0.0
    %2388 = vmatprep.subr.mxu0 0.0
    %2389 = vmatpush1.msra.mxu0 0.0
    %2390 = vmatprep.subr.mxu0 0.0
    %2391 = vmatpush1.msra.mxu0 0.0
    %2392 = vmatprep.subr.mxu0 0.0
    %2393 = vmatpush1.msra.mxu0 0.0
    %2394 = vmatprep.subr.mxu0 0.0
    %2395 = vmatpush1.msra.mxu0 0.0
    %2396 = vmatprep.subr.mxu0 0.0
    %2397 = vmatpush1.msra.mxu0 0.0
    %2398 = vmatprep.subr.mxu0 0.0
    %2399 = vmatpush1.msra.mxu0 0.0
    %2400 = vmatprep.subr.mxu0 0.0
    %2401 = vmatpush1.msra.mxu0 0.0
    %2402 = vmatprep.subr.mxu0 0.0
    %2403 = vmatpush1.msra.mxu0 0.0
    %2404 = vmatprep.mubr.f32.mxu0 0.0
    %2405 = vmatmul.mubr.f32.gmra.mrb[0].mxu0 %v2332
    %v2406 = vpop.f32.mrb[0].mxu0
    %v2407 = vadd.f32 0.0, %v2406
    %v2408 = vpop.f32.mrb[0].mxu0
    %2409 = vmatprep.mubr.f32.mxu0 0.0
    %2410 = vmatmul.mubr.f32.gmra.mrb[0].mxu0 %v2335
    %v2411 = vpop.f32.mrb[0].mxu0
    %v2412 = vadd.f32 0.0, %v2411
    %v2413 = vpop.f32.mrb[0].mxu0
    %2414 = vdwg.mxu0
    %v2416 = vsel %vm201, %v2327, 0
    %2418 = vmatprep.subr.mxu0 0.0
    %2419 = vmatpush1.msra.mxu0 %v2416
    %2420 = vmatprep.subr.mxu0 0.0
    %2421 = vmatpush1.msra.mxu0 0.0
    %2422 = vmatprep.subr.mxu0 0.0
    %2423 = vmatpush1.msra.mxu0 0.0
    %2424 = vmatprep.subr.mxu0 0.0
    %2425 = vmatpush1.msra.mxu0 0.0
    %2426 = vmatprep.subr.mxu0 0.0
    %2427 = vmatpush1.msra.mxu0 0.0
    %2428 = vmatprep.subr.mxu0 0.0
    %2429 = vmatpush1.msra.mxu0 0.0
    %2430 = vmatprep.subr.mxu0 0.0
    %2431 = vmatpush1.msra.mxu0 0.0
    %2432 = vmatprep.subr.mxu0 0.0
    %2433 = vmatpush1.msra.mxu0 0.0
    %2434 = vmatprep.subr.mxu0 0.0
    %2435 = vmatpush1.msra.mxu0 0.0
    %2436 = vmatprep.subr.mxu0 0.0
    %2437 = vmatpush1.msra.mxu0 0.0
    %2438 = vmatprep.subr.mxu0 0.0
    %2439 = vmatpush1.msra.mxu0 0.0
    %2440 = vmatprep.subr.mxu0 0.0
    %2441 = vmatpush1.msra.mxu0 0.0
    %2442 = vmatprep.subr.mxu0 0.0
    %2443 = vmatpush1.msra.mxu0 0.0
    %2444 = vmatprep.subr.mxu0 0.0
    %2445 = vmatpush1.msra.mxu0 0.0
    %2446 = vmatprep.subr.mxu0 0.0
    %2447 = vmatpush1.msra.mxu0 0.0
    %2448 = vmatprep.subr.mxu0 0.0
    %2449 = vmatpush1.msra.mxu0 0.0
    %2450 = vmatprep.subr.mxu0 0.0
    %2451 = vmatpush1.msra.mxu0 0.0
    %2452 = vmatprep.subr.mxu0 0.0
    %2453 = vmatpush1.msra.mxu0 0.0
    %2454 = vmatprep.subr.mxu0 0.0
    %2455 = vmatpush1.msra.mxu0 0.0
    %2456 = vmatprep.subr.mxu0 0.0
    %2457 = vmatpush1.msra.mxu0 0.0
    %2458 = vmatprep.subr.mxu0 0.0
    %2459 = vmatpush1.msra.mxu0 0.0
    %2460 = vmatprep.subr.mxu0 0.0
    %2461 = vmatpush1.msra.mxu0 0.0
    %2462 = vmatprep.subr.mxu0 0.0
    %2463 = vmatpush1.msra.mxu0 0.0
    %2464 = vmatprep.subr.mxu0 0.0
    %2465 = vmatpush1.msra.mxu0 0.0
    %2466 = vmatprep.subr.mxu0 0.0
    %2467 = vmatpush1.msra.mxu0 0.0
    %2468 = vmatprep.subr.mxu0 0.0
    %2469 = vmatpush1.msra.mxu0 0.0
    %2470 = vmatprep.subr.mxu0 0.0
    %2471 = vmatpush1.msra.mxu0 0.0
    %2472 = vmatprep.subr.mxu0 0.0
    %2473 = vmatpush1.msra.mxu0 0.0
    %2474 = vmatprep.subr.mxu0 0.0
    %2475 = vmatpush1.msra.mxu0 0.0
    %2476 = vmatprep.subr.mxu0 0.0
    %2477 = vmatpush1.msra.mxu0 0.0
    %2478 = vmatprep.subr.mxu0 0.0
    %2479 = vmatpush1.msra.mxu0 0.0
    %2480 = vmatprep.subr.mxu0 0.0
    %2481 = vmatpush1.msra.mxu0 0.0
    %2482 = vmatprep.mubr.f32.mxu0 0.0
    %2483 = vmatmul.mubr.f32.gmra.mrb[0].mxu0 %v196
    %v2484 = vpop.f32.mrb[0].mxu0
    %v2485 = vadd.f32 %v2407, %v2484
    %v2486 = vpop.f32.mrb[0].mxu0
    %2487 = vmatprep.mubr.f32.mxu0 0.0
    %2488 = vmatmul.mubr.f32.gmra.mrb[0].mxu0 %v199
    %v2489 = vpop.f32.mrb[0].mxu0
    %v2490 = vadd.f32 %v2412, %v2489
    %v2491 = vpop.f32.mrb[0].mxu0
    %2492 = vdwg.mxu0
    %v2493 = vld [vmem:[#allocation16] sm:$0x1]
    %v2495 = vlaneseq
    %v2496 = vshrl.u32 %v2495, 7
    %v2497 = vsub.s32 0, %v2496
    %v2498 = vrot.slane %v2493, %v2497
    %v2500 = vadd.f32 %v2485, %v2498
    %v2501 = vadd.f32 %v2490, %v2498
    %2502 = vst [vmem:[#allocation4] sm:$0xff] %v2500
    %2503 = vst [vmem:[#allocation4 + $0x8] sm:$0xff] %v2501
    %v2504 = vld [vmem:[%s14] sm:$0x1]
    %v2506 = vlaneseq
    %v2507 = vshrl.u32 %v2506, 7
    %v2508 = vsub.s32 0, %v2507
    %v2509 = vrot.slane %v2504, %v2508
    %v2511 = vmul.f32 %v286, %v2509
    %v2512 = vld [vmem:[%s17] sm:$0xff]
    %v2513 = vld [vmem:[%s17 + $0x8] sm:$0xff]
    %v2514 = vld [vmem:[%s17 + $0x10] sm:$0xff]
    %v2515 = vld [vmem:[%s17 + $0x18] sm:$0xff]
    %v2516 = vld [vmem:[#allocation4] sm:$0x3]
    %2517 = vmatprep.subr.mxu0 0.0
    %2518 = vmatpush1.msra.mxu0 %v2512
    %2519 = vmatprep.subr.mxu0 0.0
    %2520 = vmatpush1.msra.mxu0 %v2513
    %2521 = vmatprep.subr.mxu0 0.0
    %2522 = vmatpush1.msra.mxu0 %v2514
    %2523 = vmatprep.subr.mxu0 0.0
    %2524 = vmatpush1.msra.mxu0 %v2515
    %2525 = vmatprep.subr.mxu0 0.0
    %2526 = vmatpush1.msra.mxu0 0.0
    %2527 = vmatprep.subr.mxu0 0.0
    %2528 = vmatpush1.msra.mxu0 0.0
    %2529 = vmatprep.subr.mxu0 0.0
    %2530 = vmatpush1.msra.mxu0 0.0
    %2531 = vmatprep.subr.mxu0 0.0
    %2532 = vmatpush1.msra.mxu0 0.0
    %2533 = vmatprep.subr.mxu0 0.0
    %2534 = vmatpush1.msra.mxu0 0.0
    %2535 = vmatprep.subr.mxu0 0.0
    %2536 = vmatpush1.msra.mxu0 0.0
    %2537 = vmatprep.subr.mxu0 0.0
    %2538 = vmatpush1.msra.mxu0 0.0
    %2539 = vmatprep.subr.mxu0 0.0
    %2540 = vmatpush1.msra.mxu0 0.0
    %2541 = vmatprep.subr.mxu0 0.0
    %2542 = vmatpush1.msra.mxu0 0.0
    %2543 = vmatprep.subr.mxu0 0.0
    %2544 = vmatpush1.msra.mxu0 0.0
    %2545 = vmatprep.subr.mxu0 0.0
    %2546 = vmatpush1.msra.mxu0 0.0
    %2547 = vmatprep.subr.mxu0 0.0
    %2548 = vmatpush1.msra.mxu0 0.0
    %2549 = vmatprep.subr.mxu0 0.0
    %2550 = vmatpush1.msra.mxu0 0.0
    %2551 = vmatprep.subr.mxu0 0.0
    %2552 = vmatpush1.msra.mxu0 0.0
    %2553 = vmatprep.subr.mxu0 0.0
    %2554 = vmatpush1.msra.mxu0 0.0
    %2555 = vmatprep.subr.mxu0 0.0
    %2556 = vmatpush1.msra.mxu0 0.0
    %2557 = vmatprep.subr.mxu0 0.0
    %2558 = vmatpush1.msra.mxu0 0.0
    %2559 = vmatprep.subr.mxu0 0.0
    %2560 = vmatpush1.msra.mxu0 0.0
    %2561 = vmatprep.subr.mxu0 0.0
    %2562 = vmatpush1.msra.mxu0 0.0
    %2563 = vmatprep.subr.mxu0 0.0
    %2564 = vmatpush1.msra.mxu0 0.0
    %2565 = vmatprep.subr.mxu0 0.0
    %2566 = vmatpush1.msra.mxu0 0.0
    %2567 = vmatprep.subr.mxu0 0.0
    %2568 = vmatpush1.msra.mxu0 0.0
    %2569 = vmatprep.subr.mxu0 0.0
    %2570 = vmatpush1.msra.mxu0 0.0
    %2571 = vmatprep.subr.mxu0 0.0
    %2572 = vmatpush1.msra.mxu0 0.0
    %2573 = vmatprep.subr.mxu0 0.0
    %2574 = vmatpush1.msra.mxu0 0.0
    %2575 = vmatprep.subr.mxu0 0.0
    %2576 = vmatpush1.msra.mxu0 0.0
    %2577 = vmatprep.subr.mxu0 0.0
    %2578 = vmatpush1.msra.mxu0 0.0
    %2579 = vmatprep.subr.mxu0 0.0
    %2580 = vmatpush1.msra.mxu0 0.0
    %2581 = vmatprep.mubr.f32.mxu0 0.0
    %2582 = vmatmul.mubr.f32.gmra.mrb[0].mxu0 %v302
    %v2583 = vpop.f32.mrb[0].mxu0
    %v2584 = vadd.f32 0.0, %v2583
    %v2585 = vpop.f32.mrb[0].mxu0
    %2586 = vdwg.mxu0
    %v2587 = vadd.f32 %v2516, %v2584
    %v2588 = vadd.f32 %v2587, %v2511
    %v2589 = vxor.u32 %v2588, 2147483648
    %v2590 = vmul.f32 %v2589, 1.442695
    %v2591 = vpow.pop %v2590
    %v2592 = vadd.f32 %v2591, 1.0
    %v2593 = vrcp.pop %v2592
    %v2594 = vmul.f32 1.0, %v2593
    %v2595 = vtanh.pop %v2588
    %v2596 = vmul.f32 %v2594, 0.0
    %2598 = vrot.lane.b32.xlu0 %v2595, 64
    %v2599 = vpop.permute.xlu0 %2598
    %v2601 = vmul.f32 %v2594, %v2599
    %2603 = vrot.lane.b32.xlu0 %v2601, 32
    %v2604 = vpop.permute.xlu0 %2603
    %v2606 = vadd.f32 %v2596, %v2604
    %v2607 = vtanh.pop %v2606
    %2609 = vrot.lane.b32.xlu0 %v2607, 64
    %v2610 = vpop.permute.xlu0 %2609
    %v2612 = vmul.f32 %v2594, %v2610
    %2614 = vrot.lane.b32.xlu0 %v2612, 32
    %v2615 = vpop.permute.xlu0 %2614
    %2617 = vst.msk [vmem:[#allocation2] sm:$0x3] %vm404, %v2615
    %v2618 = vld [vmem:[#allocation4 + $0x2] sm:$0x3]
    %v2619 = vsel %vm300, %v2615, 0
    %2621 = vmatprep.subr.mxu0 0.0
    %2622 = vmatpush1.msra.mxu0 %v2512
    %2623 = vmatprep.subr.mxu0 0.0
    %2624 = vmatpush1.msra.mxu0 %v2513
    %2625 = vmatprep.subr.mxu0 0.0
    %2626 = vmatpush1.msra.mxu0 %v2514
    %2627 = vmatprep.subr.mxu0 0.0
    %2628 = vmatpush1.msra.mxu0 %v2515
    %2629 = vmatprep.subr.mxu0 0.0
    %2630 = vmatpush1.msra.mxu0 0.0
    %2631 = vmatprep.subr.mxu0 0.0
    %2632 = vmatpush1.msra.mxu0 0.0
    %2633 = vmatprep.subr.mxu0 0.0
    %2634 = vmatpush1.msra.mxu0 0.0
    %2635 = vmatprep.subr.mxu0 0.0
    %2636 = vmatpush1.msra.mxu0 0.0
    %2637 = vmatprep.subr.mxu0 0.0
    %2638 = vmatpush1.msra.mxu0 0.0
    %2639 = vmatprep.subr.mxu0 0.0
    %2640 = vmatpush1.msra.mxu0 0.0
    %2641 = vmatprep.subr.mxu0 0.0
    %2642 = vmatpush1.msra.mxu0 0.0
    %2643 = vmatprep.subr.mxu0 0.0
    %2644 = vmatpush1.msra.mxu0 0.0
    %2645 = vmatprep.subr.mxu0 0.0
    %2646 = vmatpush1.msra.mxu0 0.0
    %2647 = vmatprep.subr.mxu0 0.0
    %2648 = vmatpush1.msra.mxu0 0.0
    %2649 = vmatprep.subr.mxu0 0.0
    %2650 = vmatpush1.msra.mxu0 0.0
    %2651 = vmatprep.subr.mxu0 0.0
    %2652 = vmatpush1.msra.mxu0 0.0
    %2653 = vmatprep.subr.mxu0 0.0
    %2654 = vmatpush1.msra.mxu0 0.0
    %2655 = vmatprep.subr.mxu0 0.0
    %2656 = vmatpush1.msra.mxu0 0.0
    %2657 = vmatprep.subr.mxu0 0.0
    %2658 = vmatpush1.msra.mxu0 0.0
    %2659 = vmatprep.subr.mxu0 0.0
    %2660 = vmatpush1.msra.mxu0 0.0
    %2661 = vmatprep.subr.mxu0 0.0
    %2662 = vmatpush1.msra.mxu0 0.0
    %2663 = vmatprep.subr.mxu0 0.0
    %2664 = vmatpush1.msra.mxu0 0.0
    %2665 = vmatprep.subr.mxu0 0.0
    %2666 = vmatpush1.msra.mxu0 0.0
    %2667 = vmatprep.subr.mxu0 0.0
    %2668 = vmatpush1.msra.mxu0 0.0
    %2669 = vmatprep.subr.mxu0 0.0
    %2670 = vmatpush1.msra.mxu0 0.0
    %2671 = vmatprep.subr.mxu0 0.0
    %2672 = vmatpush1.msra.mxu0 0.0
    %2673 = vmatprep.subr.mxu0 0.0
    %2674 = vmatpush1.msra.mxu0 0.0
    %2675 = vmatprep.subr.mxu0 0.0
    %2676 = vmatpush1.msra.mxu0 0.0
    %2677 = vmatprep.subr.mxu0 0.0
    %2678 = vmatpush1.msra.mxu0 0.0
    %2679 = vmatprep.subr.mxu0 0.0
    %2680 = vmatpush1.msra.mxu0 0.0
    %2681 = vmatprep.subr.mxu0 0.0
    %2682 = vmatpush1.msra.mxu0 0.0
    %2683 = vmatprep.subr.mxu0 0.0
    %2684 = vmatpush1.msra.mxu0 0.0
    %2685 = vmatprep.mubr.f32.mxu0 0.0
    %2686 = vmatmul.mubr.f32.gmra.mrb[0].mxu0 %v2619
    %v2687 = vpop.f32.mrb[0].mxu0
    %v2688 = vadd.f32 0.0, %v2687
    %v2689 = vpop.f32.mrb[0].mxu0
    %2690 = vdwg.mxu0
    %v2691 = vadd.f32 %v2618, %v2688
    %v2692 = vadd.f32 %v2691, %v2511
    %v2693 = vxor.u32 %v2692, 2147483648
    %v2694 = vmul.f32 %v2693, 1.442695
    %v2695 = vpow.pop %v2694
    %v2696 = vadd.f32 %v2695, 1.0
    %v2697 = vrcp.pop %v2696
    %v2698 = vmul.f32 1.0, %v2697
    %v2699 = vtanh.pop %v2692
    %v2700 = vmul.f32 %v2698, %v2606
    %2702 = vrot.lane.b32.xlu0 %v2699, 64
    %v2703 = vpop.permute.xlu0 %2702
    %v2705 = vmul.f32 %v2698, %v2703
    %2707 = vrot.lane.b32.xlu0 %v2705, 32
    %v2708 = vpop.permute.xlu0 %2707
    %v2710 = vadd.f32 %v2700, %v2708
    %v2711 = vtanh.pop %v2710
    %2713 = vrot.lane.b32.xlu0 %v2711, 64
    %v2714 = vpop.permute.xlu0 %2713
    %v2716 = vmul.f32 %v2698, %v2714
    %2718 = vrot.lane.b32.xlu0 %v2716, 32
    %v2719 = vpop.permute.xlu0 %2718
    %2721 = vst.msk [vmem:[#allocation2 + $0x2] sm:$0x3] %vm404, %v2719
    %v2722 = vld [vmem:[#allocation4 + $0x4] sm:$0x3]
    %v2723 = vsel %vm300, %v2719, 0
    %2725 = vmatprep.subr.mxu0 0.0
    %2726 = vmatpush1.msra.mxu0 %v2512
    %2727 = vmatprep.subr.mxu0 0.0
    %2728 = vmatpush1.msra.mxu0 %v2513
    %2729 = vmatprep.subr.mxu0 0.0
    %2730 = vmatpush1.msra.mxu0 %v2514
    %2731 = vmatprep.subr.mxu0 0.0
    %2732 = vmatpush1.msra.mxu0 %v2515
    %2733 = vmatprep.subr.mxu0 0.0
    %2734 = vmatpush1.msra.mxu0 0.0
    %2735 = vmatprep.subr.mxu0 0.0
    %2736 = vmatpush1.msra.mxu0 0.0
    %2737 = vmatprep.subr.mxu0 0.0
    %2738 = vmatpush1.msra.mxu0 0.0
    %2739 = vmatprep.subr.mxu0 0.0
    %2740 = vmatpush1.msra.mxu0 0.0
    %2741 = vmatprep.subr.mxu0 0.0
    %2742 = vmatpush1.msra.mxu0 0.0
    %2743 = vmatprep.subr.mxu0 0.0
    %2744 = vmatpush1.msra.mxu0 0.0
    %2745 = vmatprep.subr.mxu0 0.0
    %2746 = vmatpush1.msra.mxu0 0.0
    %2747 = vmatprep.subr.mxu0 0.0
    %2748 = vmatpush1.msra.mxu0 0.0
    %2749 = vmatprep.subr.mxu0 0.0
    %2750 = vmatpush1.msra.mxu0 0.0
    %2751 = vmatprep.subr.mxu0 0.0
    %2752 = vmatpush1.msra.mxu0 0.0
    %2753 = vmatprep.subr.mxu0 0.0
    %2754 = vmatpush1.msra.mxu0 0.0
    %2755 = vmatprep.subr.mxu0 0.0
    %2756 = vmatpush1.msra.mxu0 0.0
    %2757 = vmatprep.subr.mxu0 0.0
    %2758 = vmatpush1.msra.mxu0 0.0
    %2759 = vmatprep.subr.mxu0 0.0
    %2760 = vmatpush1.msra.mxu0 0.0
    %2761 = vmatprep.subr.mxu0 0.0
    %2762 = vmatpush1.msra.mxu0 0.0
    %2763 = vmatprep.subr.mxu0 0.0
    %2764 = vmatpush1.msra.mxu0 0.0
    %2765 = vmatprep.subr.mxu0 0.0
    %2766 = vmatpush1.msra.mxu0 0.0
    %2767 = vmatprep.subr.mxu0 0.0
    %2768 = vmatpush1.msra.mxu0 0.0
    %2769 = vmatprep.subr.mxu0 0.0
    %2770 = vmatpush1.msra.mxu0 0.0
    %2771 = vmatprep.subr.mxu0 0.0
    %2772 = vmatpush1.msra.mxu0 0.0
    %2773 = vmatprep.subr.mxu0 0.0
    %2774 = vmatpush1.msra.mxu0 0.0
    %2775 = vmatprep.subr.mxu0 0.0
    %2776 = vmatpush1.msra.mxu0 0.0
    %2777 = vmatprep.subr.mxu0 0.0
    %2778 = vmatpush1.msra.mxu0 0.0
    %2779 = vmatprep.subr.mxu0 0.0
    %2780 = vmatpush1.msra.mxu0 0.0
    %2781 = vmatprep.subr.mxu0 0.0
    %2782 = vmatpush1.msra.mxu0 0.0
    %2783 = vmatprep.subr.mxu0 0.0
    %2784 = vmatpush1.msra.mxu0 0.0
    %2785 = vmatprep.subr.mxu0 0.0
    %2786 = vmatpush1.msra.mxu0 0.0
    %2787 = vmatprep.subr.mxu0 0.0
    %2788 = vmatpush1.msra.mxu0 0.0
    %2789 = vmatprep.mubr.f32.mxu0 0.0
    %2790 = vmatmul.mubr.f32.gmra.mrb[0].mxu0 %v2723
    %v2791 = vpop.f32.mrb[0].mxu0
    %v2792 = vadd.f32 0.0, %v2791
    %v2793 = vpop.f32.mrb[0].mxu0
    %2794 = vdwg.mxu0
    %v2795 = vadd.f32 %v2722, %v2792
    %v2796 = vadd.f32 %v2795, %v2511
    %v2797 = vxor.u32 %v2796, 2147483648
    %v2798 = vmul.f32 %v2797, 1.442695
    %v2799 = vpow.pop %v2798
    %v2800 = vadd.f32 %v2799, 1.0
    %v2801 = vrcp.pop %v2800
    %v2802 = vmul.f32 1.0, %v2801
    %v2803 = vtanh.pop %v2796
    %v2804 = vmul.f32 %v2802, %v2710
    %2806 = vrot.lane.b32.xlu0 %v2803, 64
    %v2807 = vpop.permute.xlu0 %2806
    %v2809 = vmul.f32 %v2802, %v2807
    %2811 = vrot.lane.b32.xlu0 %v2809, 32
    %v2812 = vpop.permute.xlu0 %2811
    %v2814 = vadd.f32 %v2804, %v2812
    %v2815 = vtanh.pop %v2814
    %2817 = vrot.lane.b32.xlu0 %v2815, 64
    %v2818 = vpop.permute.xlu0 %2817
    %v2820 = vmul.f32 %v2802, %v2818
    %2822 = vrot.lane.b32.xlu0 %v2820, 32
    %v2823 = vpop.permute.xlu0 %2822
    %2825 = vst.msk [vmem:[#allocation2 + $0x4] sm:$0x3] %vm404, %v2823
    %v2826 = vld [vmem:[#allocation4 + $0x6] sm:$0x3]
    %v2827 = vsel %vm300, %v2823, 0
    %2829 = vmatprep.subr.mxu0 0.0
    %2830 = vmatpush1.msra.mxu0 %v2512
    %2831 = vmatprep.subr.mxu0 0.0
    %2832 = vmatpush1.msra.mxu0 %v2513
    %2833 = vmatprep.subr.mxu0 0.0
    %2834 = vmatpush1.msra.mxu0 %v2514
    %2835 = vmatprep.subr.mxu0 0.0
    %2836 = vmatpush1.msra.mxu0 %v2515
    %2837 = vmatprep.subr.mxu0 0.0
    %2838 = vmatpush1.msra.mxu0 0.0
    %2839 = vmatprep.subr.mxu0 0.0
    %2840 = vmatpush1.msra.mxu0 0.0
    %2841 = vmatprep.subr.mxu0 0.0
    %2842 = vmatpush1.msra.mxu0 0.0
    %2843 = vmatprep.subr.mxu0 0.0
    %2844 = vmatpush1.msra.mxu0 0.0
    %2845 = vmatprep.subr.mxu0 0.0
    %2846 = vmatpush1.msra.mxu0 0.0
    %2847 = vmatprep.subr.mxu0 0.0
    %2848 = vmatpush1.msra.mxu0 0.0
    %2849 = vmatprep.subr.mxu0 0.0
    %2850 = vmatpush1.msra.mxu0 0.0
    %2851 = vmatprep.subr.mxu0 0.0
    %2852 = vmatpush1.msra.mxu0 0.0
    %2853 = vmatprep.subr.mxu0 0.0
    %2854 = vmatpush1.msra.mxu0 0.0
    %2855 = vmatprep.subr.mxu0 0.0
    %2856 = vmatpush1.msra.mxu0 0.0
    %2857 = vmatprep.subr.mxu0 0.0
    %2858 = vmatpush1.msra.mxu0 0.0
    %2859 = vmatprep.subr.mxu0 0.0
    %2860 = vmatpush1.msra.mxu0 0.0
    %2861 = vmatprep.subr.mxu0 0.0
    %2862 = vmatpush1.msra.mxu0 0.0
    %2863 = vmatprep.subr.mxu0 0.0
    %2864 = vmatpush1.msra.mxu0 0.0
    %2865 = vmatprep.subr.mxu0 0.0
    %2866 = vmatpush1.msra.mxu0 0.0
    %2867 = vmatprep.subr.mxu0 0.0
    %2868 = vmatpush1.msra.mxu0 0.0
    %2869 = vmatprep.subr.mxu0 0.0
    %2870 = vmatpush1.msra.mxu0 0.0
    %2871 = vmatprep.subr.mxu0 0.0
    %2872 = vmatpush1.msra.mxu0 0.0
    %2873 = vmatprep.subr.mxu0 0.0
    %2874 = vmatpush1.msra.mxu0 0.0
    %2875 = vmatprep.subr.mxu0 0.0
    %2876 = vmatpush1.msra.mxu0 0.0
    %2877 = vmatprep.subr.mxu0 0.0
    %2878 = vmatpush1.msra.mxu0 0.0
    %2879 = vmatprep.subr.mxu0 0.0
    %2880 = vmatpush1.msra.mxu0 0.0
    %2881 = vmatprep.subr.mxu0 0.0
    %2882 = vmatpush1.msra.mxu0 0.0
    %2883 = vmatprep.subr.mxu0 0.0
    %2884 = vmatpush1.msra.mxu0 0.0
    %2885 = vmatprep.subr.mxu0 0.0
    %2886 = vmatpush1.msra.mxu0 0.0
    %2887 = vmatprep.subr.mxu0 0.0
    %2888 = vmatpush1.msra.mxu0 0.0
    %2889 = vmatprep.subr.mxu0 0.0
    %2890 = vmatpush1.msra.mxu0 0.0
    %2891 = vmatprep.subr.mxu0 0.0
    %2892 = vmatpush1.msra.mxu0 0.0
    %2893 = vmatprep.mubr.f32.mxu0 0.0
    %2894 = vmatmul.mubr.f32.gmra.mrb[0].mxu0 %v2827
    %v2895 = vpop.f32.mrb[0].mxu0
    %v2896 = vadd.f32 0.0, %v2895
    %v2897 = vpop.f32.mrb[0].mxu0
    %2898 = vdwg.mxu0
    %v2899 = vadd.f32 %v2826, %v2896
    %v2900 = vadd.f32 %v2899, %v2511
    %v2901 = vxor.u32 %v2900, 2147483648
    %v2902 = vmul.f32 %v2901, 1.442695
    %v2903 = vpow.pop %v2902
    %v2904 = vadd.f32 %v2903, 1.0
    %v2905 = vrcp.pop %v2904
    %v2906 = vmul.f32 1.0, %v2905
    %v2907 = vtanh.pop %v2900
    %v2908 = vmul.f32 %v2906, %v2814
    %2910 = vrot.lane.b32.xlu0 %v2907, 64
    %v2911 = vpop.permute.xlu0 %2910
    %v2913 = vmul.f32 %v2906, %v2911
    %2915 = vrot.lane.b32.xlu0 %v2913, 32
    %v2916 = vpop.permute.xlu0 %2915
    %v2918 = vadd.f32 %v2908, %v2916
    %v2919 = vtanh.pop %v2918
    %2921 = vrot.lane.b32.xlu0 %v2919, 64
    %v2922 = vpop.permute.xlu0 %2921
    %v2924 = vmul.f32 %v2906, %v2922
    %2926 = vrot.lane.b32.xlu0 %v2924, 32
    %v2927 = vpop.permute.xlu0 %2926
    %2929 = vst.msk [vmem:[#allocation2 + $0x6] sm:$0x3] %vm404, %v2927
    %v2930 = vld [vmem:[#allocation4 + $0x8] sm:$0x3]
    %v2931 = vsel %vm300, %v2927, 0
    %2933 = vmatprep.subr.mxu0 0.0
    %2934 = vmatpush1.msra.mxu0 %v2512
    %2935 = vmatprep.subr.mxu0 0.0
    %2936 = vmatpush1.msra.mxu0 %v2513
    %2937 = vmatprep.subr.mxu0 0.0
    %2938 = vmatpush1.msra.mxu0 %v2514
    %2939 = vmatprep.subr.mxu0 0.0
    %2940 = vmatpush1.msra.mxu0 %v2515
    %2941 = vmatprep.subr.mxu0 0.0
    %2942 = vmatpush1.msra.mxu0 0.0
    %2943 = vmatprep.subr.mxu0 0.0
    %2944 = vmatpush1.msra.mxu0 0.0
    %2945 = vmatprep.subr.mxu0 0.0
    %2946 = vmatpush1.msra.mxu0 0.0
    %2947 = vmatprep.subr.mxu0 0.0
    %2948 = vmatpush1.msra.mxu0 0.0
    %2949 = vmatprep.subr.mxu0 0.0
    %2950 = vmatpush1.msra.mxu0 0.0
    %2951 = vmatprep.subr.mxu0 0.0
    %2952 = vmatpush1.msra.mxu0 0.0
    %2953 = vmatprep.subr.mxu0 0.0
    %2954 = vmatpush1.msra.mxu0 0.0
    %2955 = vmatprep.subr.mxu0 0.0
    %2956 = vmatpush1.msra.mxu0 0.0
    %2957 = vmatprep.subr.mxu0 0.0
    %2958 = vmatpush1.msra.mxu0 0.0
    %2959 = vmatprep.subr.mxu0 0.0
    %2960 = vmatpush1.msra.mxu0 0.0
    %2961 = vmatprep.subr.mxu0 0.0
    %2962 = vmatpush1.msra.mxu0 0.0
    %2963 = vmatprep.subr.mxu0 0.0
    %2964 = vmatpush1.msra.mxu0 0.0
    %2965 = vmatprep.subr.mxu0 0.0
    %2966 = vmatpush1.msra.mxu0 0.0
    %2967 = vmatprep.subr.mxu0 0.0
    %2968 = vmatpush1.msra.mxu0 0.0
    %2969 = vmatprep.subr.mxu0 0.0
    %2970 = vmatpush1.msra.mxu0 0.0
    %2971 = vmatprep.subr.mxu0 0.0
    %2972 = vmatpush1.msra.mxu0 0.0
    %2973 = vmatprep.subr.mxu0 0.0
    %2974 = vmatpush1.msra.mxu0 0.0
    %2975 = vmatprep.subr.mxu0 0.0
    %2976 = vmatpush1.msra.mxu0 0.0
    %2977 = vmatprep.subr.mxu0 0.0
    %2978 = vmatpush1.msra.mxu0 0.0
    %2979 = vmatprep.subr.mxu0 0.0
    %2980 = vmatpush1.msra.mxu0 0.0
    %2981 = vmatprep.subr.mxu0 0.0
    %2982 = vmatpush1.msra.mxu0 0.0
    %2983 = vmatprep.subr.mxu0 0.0
    %2984 = vmatpush1.msra.mxu0 0.0
    %2985 = vmatprep.subr.mxu0 0.0
    %2986 = vmatpush1.msra.mxu0 0.0
    %2987 = vmatprep.subr.mxu0 0.0
    %2988 = vmatpush1.msra.mxu0 0.0
    %2989 = vmatprep.subr.mxu0 0.0
    %2990 = vmatpush1.msra.mxu0 0.0
    %2991 = vmatprep.subr.mxu0 0.0
    %2992 = vmatpush1.msra.mxu0 0.0
    %2993 = vmatprep.subr.mxu0 0.0
    %2994 = vmatpush1.msra.mxu0 0.0
    %2995 = vmatprep.subr.mxu0 0.0
    %2996 = vmatpush1.msra.mxu0 0.0
    %2997 = vmatprep.mubr.f32.mxu0 0.0
    %2998 = vmatmul.mubr.f32.gmra.mrb[0].mxu0 %v2931
    %v2999 = vpop.f32.mrb[0].mxu0
    %v3000 = vadd.f32 0.0, %v2999
    %v3001 = vpop.f32.mrb[0].mxu0
    %3002 = vdwg.mxu0
    %v3003 = vadd.f32 %v2930, %v3000
    %v3004 = vadd.f32 %v3003, %v2511
    %v3005 = vxor.u32 %v3004, 2147483648
    %v3006 = vmul.f32 %v3005, 1.442695
    %v3007 = vpow.pop %v3006
    %v3008 = vadd.f32 %v3007, 1.0
    %v3009 = vrcp.pop %v3008
    %v3010 = vmul.f32 1.0, %v3009
    %v3011 = vtanh.pop %v3004
    %v3012 = vmul.f32 %v3010, %v2918
    %3014 = vrot.lane.b32.xlu0 %v3011, 64
    %v3015 = vpop.permute.xlu0 %3014
    %v3017 = vmul.f32 %v3010, %v3015
    %3019 = vrot.lane.b32.xlu0 %v3017, 32
    %v3020 = vpop.permute.xlu0 %3019
    %v3022 = vadd.f32 %v3012, %v3020
    %v3023 = vtanh.pop %v3022
    %3025 = vrot.lane.b32.xlu0 %v3023, 64
    %v3026 = vpop.permute.xlu0 %3025
    %v3028 = vmul.f32 %v3010, %v3026
    %3030 = vrot.lane.b32.xlu0 %v3028, 32
    %v3031 = vpop.permute.xlu0 %3030
    %3033 = vst.msk [vmem:[#allocation2 + $0x8] sm:$0x3] %vm404, %v3031
    %v3034 = vld [vmem:[#allocation4 + $0xa] sm:$0x3]
    %v3035 = vsel %vm300, %v3031, 0
    %3037 = vmatprep.subr.mxu0 0.0
    %3038 = vmatpush1.msra.mxu0 %v2512
    %3039 = vmatprep.subr.mxu0 0.0
    %3040 = vmatpush1.msra.mxu0 %v2513
    %3041 = vmatprep.subr.mxu0 0.0
    %3042 = vmatpush1.msra.mxu0 %v2514
    %3043 = vmatprep.subr.mxu0 0.0
    %3044 = vmatpush1.msra.mxu0 %v2515
    %3045 = vmatprep.subr.mxu0 0.0
    %3046 = vmatpush1.msra.mxu0 0.0
    %3047 = vmatprep.subr.mxu0 0.0
    %3048 = vmatpush1.msra.mxu0 0.0
    %3049 = vmatprep.subr.mxu0 0.0
    %3050 = vmatpush1.msra.mxu0 0.0
    %3051 = vmatprep.subr.mxu0 0.0
    %3052 = vmatpush1.msra.mxu0 0.0
    %3053 = vmatprep.subr.mxu0 0.0
    %3054 = vmatpush1.msra.mxu0 0.0
    %3055 = vmatprep.subr.mxu0 0.0
    %3056 = vmatpush1.msra.mxu0 0.0
    %3057 = vmatprep.subr.mxu0 0.0
    %3058 = vmatpush1.msra.mxu0 0.0
    %3059 = vmatprep.subr.mxu0 0.0
    %3060 = vmatpush1.msra.mxu0 0.0
    %3061 = vmatprep.subr.mxu0 0.0
    %3062 = vmatpush1.msra.mxu0 0.0
    %3063 = vmatprep.subr.mxu0 0.0
    %3064 = vmatpush1.msra.mxu0 0.0
    %3065 = vmatprep.subr.mxu0 0.0
    %3066 = vmatpush1.msra.mxu0 0.0
    %3067 = vmatprep.subr.mxu0 0.0
    %3068 = vmatpush1.msra.mxu0 0.0
    %3069 = vmatprep.subr.mxu0 0.0
    %3070 = vmatpush1.msra.mxu0 0.0
    %3071 = vmatprep.subr.mxu0 0.0
    %3072 = vmatpush1.msra.mxu0 0.0
    %3073 = vmatprep.subr.mxu0 0.0
    %3074 = vmatpush1.msra.mxu0 0.0
    %3075 = vmatprep.subr.mxu0 0.0
    %3076 = vmatpush1.msra.mxu0 0.0
    %3077 = vmatprep.subr.mxu0 0.0
    %3078 = vmatpush1.msra.mxu0 0.0
    %3079 = vmatprep.subr.mxu0 0.0
    %3080 = vmatpush1.msra.mxu0 0.0
    %3081 = vmatprep.subr.mxu0 0.0
    %3082 = vmatpush1.msra.mxu0 0.0
    %3083 = vmatprep.subr.mxu0 0.0
    %3084 = vmatpush1.msra.mxu0 0.0
    %3085 = vmatprep.subr.mxu0 0.0
    %3086 = vmatpush1.msra.mxu0 0.0
    %3087 = vmatprep.subr.mxu0 0.0
    %3088 = vmatpush1.msra.mxu0 0.0
    %3089 = vmatprep.subr.mxu0 0.0
    %3090 = vmatpush1.msra.mxu0 0.0
    %3091 = vmatprep.subr.mxu0 0.0
    %3092 = vmatpush1.msra.mxu0 0.0
    %3093 = vmatprep.subr.mxu0 0.0
    %3094 = vmatpush1.msra.mxu0 0.0
    %3095 = vmatprep.subr.mxu0 0.0
    %3096 = vmatpush1.msra.mxu0 0.0
    %3097 = vmatprep.subr.mxu0 0.0
    %3098 = vmatpush1.msra.mxu0 0.0
    %3099 = vmatprep.subr.mxu0 0.0
    %3100 = vmatpush1.msra.mxu0 0.0
    %3101 = vmatprep.mubr.f32.mxu0 0.0
    %3102 = vmatmul.mubr.f32.gmra.mrb[0].mxu0 %v3035
    %v3103 = vpop.f32.mrb[0].mxu0
    %v3104 = vadd.f32 0.0, %v3103
    %v3105 = vpop.f32.mrb[0].mxu0
    %3106 = vdwg.mxu0
    %v3107 = vadd.f32 %v3034, %v3104
    %v3108 = vadd.f32 %v3107, %v2511
    %v3109 = vxor.u32 %v3108, 2147483648
    %v3110 = vmul.f32 %v3109, 1.442695
    %v3111 = vpow.pop %v3110
    %v3112 = vadd.f32 %v3111, 1.0
    %v3113 = vrcp.pop %v3112
    %v3114 = vmul.f32 1.0, %v3113
    %v3115 = vtanh.pop %v3108
    %v3116 = vmul.f32 %v3114, %v3022
    %3118 = vrot.lane.b32.xlu0 %v3115, 64
    %v3119 = vpop.permute.xlu0 %3118
    %v3121 = vmul.f32 %v3114, %v3119
    %3123 = vrot.lane.b32.xlu0 %v3121, 32
    %v3124 = vpop.permute.xlu0 %3123
    %v3126 = vadd.f32 %v3116, %v3124
    %v3127 = vtanh.pop %v3126
    %3129 = vrot.lane.b32.xlu0 %v3127, 64
    %v3130 = vpop.permute.xlu0 %3129
    %v3132 = vmul.f32 %v3114, %v3130
    %3134 = vrot.lane.b32.xlu0 %v3132, 32
    %v3135 = vpop.permute.xlu0 %3134
    %3137 = vst.msk [vmem:[#allocation2 + $0xa] sm:$0x3] %vm404, %v3135
    %v3138 = vld [vmem:[#allocation4 + $0xc] sm:$0x3]
    %v3139 = vsel %vm300, %v3135, 0
    %3141 = vmatprep.subr.mxu0 0.0
    %3142 = vmatpush1.msra.mxu0 %v2512
    %3143 = vmatprep.subr.mxu0 0.0
    %3144 = vmatpush1.msra.mxu0 %v2513
    %3145 = vmatprep.subr.mxu0 0.0
    %3146 = vmatpush1.msra.mxu0 %v2514
    %3147 = vmatprep.subr.mxu0 0.0
    %3148 = vmatpush1.msra.mxu0 %v2515
    %3149 = vmatprep.subr.mxu0 0.0
    %3150 = vmatpush1.msra.mxu0 0.0
    %3151 = vmatprep.subr.mxu0 0.0
    %3152 = vmatpush1.msra.mxu0 0.0
    %3153 = vmatprep.subr.mxu0 0.0
    %3154 = vmatpush1.msra.mxu0 0.0
    %3155 = vmatprep.subr.mxu0 0.0
    %3156 = vmatpush1.msra.mxu0 0.0
    %3157 = vmatprep.subr.mxu0 0.0
    %3158 = vmatpush1.msra.mxu0 0.0
    %3159 = vmatprep.subr.mxu0 0.0
    %3160 = vmatpush1.msra.mxu0 0.0
    %3161 = vmatprep.subr.mxu0 0.0
    %3162 = vmatpush1.msra.mxu0 0.0
    %3163 = vmatprep.subr.mxu0 0.0
    %3164 = vmatpush1.msra.mxu0 0.0
    %3165 = vmatprep.subr.mxu0 0.0
    %3166 = vmatpush1.msra.mxu0 0.0
    %3167 = vmatprep.subr.mxu0 0.0
    %3168 = vmatpush1.msra.mxu0 0.0
    %3169 = vmatprep.subr.mxu0 0.0
    %3170 = vmatpush1.msra.mxu0 0.0
    %3171 = vmatprep.subr.mxu0 0.0
    %3172 = vmatpush1.msra.mxu0 0.0
    %3173 = vmatprep.subr.mxu0 0.0
    %3174 = vmatpush1.msra.mxu0 0.0
    %3175 = vmatprep.subr.mxu0 0.0
    %3176 = vmatpush1.msra.mxu0 0.0
    %3177 = vmatprep.subr.mxu0 0.0
    %3178 = vmatpush1.msra.mxu0 0.0
    %3179 = vmatprep.subr.mxu0 0.0
    %3180 = vmatpush1.msra.mxu0 0.0
    %3181 = vmatprep.subr.mxu0 0.0
    %3182 = vmatpush1.msra.mxu0 0.0
    %3183 = vmatprep.subr.mxu0 0.0
    %3184 = vmatpush1.msra.mxu0 0.0
    %3185 = vmatprep.subr.mxu0 0.0
    %3186 = vmatpush1.msra.mxu0 0.0
    %3187 = vmatprep.subr.mxu0 0.0
    %3188 = vmatpush1.msra.mxu0 0.0
    %3189 = vmatprep.subr.mxu0 0.0
    %3190 = vmatpush1.msra.mxu0 0.0
    %3191 = vmatprep.subr.mxu0 0.0
    %3192 = vmatpush1.msra.mxu0 0.0
    %3193 = vmatprep.subr.mxu0 0.0
    %3194 = vmatpush1.msra.mxu0 0.0
    %3195 = vmatprep.subr.mxu0 0.0
    %3196 = vmatpush1.msra.mxu0 0.0
    %3197 = vmatprep.subr.mxu0 0.0
    %3198 = vmatpush1.msra.mxu0 0.0
    %3199 = vmatprep.subr.mxu0 0.0
    %3200 = vmatpush1.msra.mxu0 0.0
    %3201 = vmatprep.subr.mxu0 0.0
    %3202 = vmatpush1.msra.mxu0 0.0
    %3203 = vmatprep.subr.mxu0 0.0
    %3204 = vmatpush1.msra.mxu0 0.0
    %3205 = vmatprep.mubr.f32.mxu0 0.0
    %3206 = vmatmul.mubr.f32.gmra.mrb[0].mxu0 %v3139
    %v3207 = vpop.f32.mrb[0].mxu0
    %v3208 = vadd.f32 0.0, %v3207
    %v3209 = vpop.f32.mrb[0].mxu0
    %3210 = vdwg.mxu0
    %v3211 = vadd.f32 %v3138, %v3208
    %v3212 = vadd.f32 %v3211, %v2511
    %v3213 = vxor.u32 %v3212, 2147483648
    %v3214 = vmul.f32 %v3213, 1.442695
    %v3215 = vpow.pop %v3214
    %v3216 = vadd.f32 %v3215, 1.0
    %v3217 = vrcp.pop %v3216
    %v3218 = vmul.f32 1.0, %v3217
    %v3219 = vtanh.pop %v3212
    %v3220 = vmul.f32 %v3218, %v3126
    %3222 = vrot.lane.b32.xlu0 %v3219, 64
    %v3223 = vpop.permute.xlu0 %3222
    %v3225 = vmul.f32 %v3218, %v3223
    %3227 = vrot.lane.b32.xlu0 %v3225, 32
    %v3228 = vpop.permute.xlu0 %3227
    %v3230 = vadd.f32 %v3220, %v3228
    %v3231 = vtanh.pop %v3230
    %3233 = vrot.lane.b32.xlu0 %v3231, 64
    %v3234 = vpop.permute.xlu0 %3233
    %v3236 = vmul.f32 %v3218, %v3234
    %3238 = vrot.lane.b32.xlu0 %v3236, 32
    %v3239 = vpop.permute.xlu0 %3238
    %3241 = vst.msk [vmem:[#allocation2 + $0xc] sm:$0x3] %vm404, %v3239
    %v3242 = vld [vmem:[#allocation4 + $0xe] sm:$0x3]
    %v3243 = vsel %vm300, %v3239, 0
    %3245 = vmatprep.subr.mxu0 0.0
    %3246 = vmatpush1.msra.mxu0 %v2512
    %3247 = vmatprep.subr.mxu0 0.0
    %3248 = vmatpush1.msra.mxu0 %v2513
    %3249 = vmatprep.subr.mxu0 0.0
    %3250 = vmatpush1.msra.mxu0 %v2514
    %3251 = vmatprep.subr.mxu0 0.0
    %3252 = vmatpush1.msra.mxu0 %v2515
    %3253 = vmatprep.subr.mxu0 0.0
    %3254 = vmatpush1.msra.mxu0 0.0
    %3255 = vmatprep.subr.mxu0 0.0
    %3256 = vmatpush1.msra.mxu0 0.0
    %3257 = vmatprep.subr.mxu0 0.0
    %3258 = vmatpush1.msra.mxu0 0.0
    %3259 = vmatprep.subr.mxu0 0.0
    %3260 = vmatpush1.msra.mxu0 0.0
    %3261 = vmatprep.subr.mxu0 0.0
    %3262 = vmatpush1.msra.mxu0 0.0
    %3263 = vmatprep.subr.mxu0 0.0
    %3264 = vmatpush1.msra.mxu0 0.0
    %3265 = vmatprep.subr.mxu0 0.0
    %3266 = vmatpush1.msra.mxu0 0.0
    %3267 = vmatprep.subr.mxu0 0.0
    %3268 = vmatpush1.msra.mxu0 0.0
    %3269 = vmatprep.subr.mxu0 0.0
    %3270 = vmatpush1.msra.mxu0 0.0
    %3271 = vmatprep.subr.mxu0 0.0
    %3272 = vmatpush1.msra.mxu0 0.0
    %3273 = vmatprep.subr.mxu0 0.0
    %3274 = vmatpush1.msra.mxu0 0.0
    %3275 = vmatprep.subr.mxu0 0.0
    %3276 = vmatpush1.msra.mxu0 0.0
    %3277 = vmatprep.subr.mxu0 0.0
    %3278 = vmatpush1.msra.mxu0 0.0
    %3279 = vmatprep.subr.mxu0 0.0
    %3280 = vmatpush1.msra.mxu0 0.0
    %3281 = vmatprep.subr.mxu0 0.0
    %3282 = vmatpush1.msra.mxu0 0.0
    %3283 = vmatprep.subr.mxu0 0.0
    %3284 = vmatpush1.msra.mxu0 0.0
    %3285 = vmatprep.subr.mxu0 0.0
    %3286 = vmatpush1.msra.mxu0 0.0
    %3287 = vmatprep.subr.mxu0 0.0
    %3288 = vmatpush1.msra.mxu0 0.0
    %3289 = vmatprep.subr.mxu0 0.0
    %3290 = vmatpush1.msra.mxu0 0.0
    %3291 = vmatprep.subr.mxu0 0.0
    %3292 = vmatpush1.msra.mxu0 0.0
    %3293 = vmatprep.subr.mxu0 0.0
    %3294 = vmatpush1.msra.mxu0 0.0
    %3295 = vmatprep.subr.mxu0 0.0
    %3296 = vmatpush1.msra.mxu0 0.0
    %3297 = vmatprep.subr.mxu0 0.0
    %3298 = vmatpush1.msra.mxu0 0.0
    %3299 = vmatprep.subr.mxu0 0.0
    %3300 = vmatpush1.msra.mxu0 0.0
    %3301 = vmatprep.subr.mxu0 0.0
    %3302 = vmatpush1.msra.mxu0 0.0
    %3303 = vmatprep.subr.mxu0 0.0
    %3304 = vmatpush1.msra.mxu0 0.0
    %3305 = vmatprep.subr.mxu0 0.0
    %3306 = vmatpush1.msra.mxu0 0.0
    %3307 = vmatprep.subr.mxu0 0.0
    %3308 = vmatpush1.msra.mxu0 0.0
    %3309 = vmatprep.mubr.f32.mxu0 0.0
    %3310 = vmatmul.mubr.f32.gmra.mrb[0].mxu0 %v3243
    %v3311 = vpop.f32.mrb[0].mxu0
    %v3312 = vadd.f32 0.0, %v3311
    %v3313 = vpop.f32.mrb[0].mxu0
    %3314 = vdwg.mxu0
    %v3315 = vadd.f32 %v3242, %v3312
    %v3316 = vadd.f32 %v3315, %v2511
    %v3317 = vxor.u32 %v3316, 2147483648
    %v3318 = vmul.f32 %v3317, 1.442695
    %v3319 = vpow.pop %v3318
    %v3320 = vadd.f32 %v3319, 1.0
    %v3321 = vrcp.pop %v3320
    %v3322 = vmul.f32 1.0, %v3321
    %v3323 = vtanh.pop %v3316
    %v3324 = vmul.f32 %v3322, %v3230
    %3326 = vrot.lane.b32.xlu0 %v3323, 64
    %v3327 = vpop.permute.xlu0 %3326
    %v3329 = vmul.f32 %v3322, %v3327
    %3331 = vrot.lane.b32.xlu0 %v3329, 32
    %v3332 = vpop.permute.xlu0 %3331
    %v3334 = vadd.f32 %v3324, %v3332
    %v3335 = vtanh.pop %v3334
    %3337 = vrot.lane.b32.xlu0 %v3335, 64
    %v3338 = vpop.permute.xlu0 %3337
    %v3340 = vmul.f32 %v3322, %v3338
    %3342 = vrot.lane.b32.xlu0 %v3340, 32
    %v3343 = vpop.permute.xlu0 %3342
    %3345 = vst.msk [vmem:[#allocation2 + $0xe] sm:$0x3] %vm404, %v3343
    %v3346 = vld [vmem:[#allocation2] sm:$0xff]
    %v3347 = vld [vmem:[#allocation2 + $0x8] sm:$0xff]
    %v3348 = vld [vmem:[%s19] sm:$0xff]
    %v3349 = vld [vmem:[%s19 + $0x8] sm:$0xff]
    %v3350 = vld [vmem:[%s19 + $0x10] sm:$0xff]
    %v3351 = vld [vmem:[%s19 + $0x18] sm:$0xff]
    %v3352 = vld [vmem:[#allocation19] sm:$0x1]
    %v3354 = vlaneseq
    %v3355 = vshrl.u32 %v3354, 7
    %v3356 = vsub.s32 0, %v3355
    %v3357 = vrot.slane %v3352, %v3356
    %v3360 = vsel %vm300, %v3346, 0
    %v3363 = vsel %vm300, %v3347, 0
    %3365 = vmatprep.subr.mxu0 0.0
    %3366 = vmatpush1.msra.mxu0 %v3348
    %3367 = vmatprep.subr.mxu0 0.0
    %3368 = vmatpush1.msra.mxu0 %v3349
    %3369 = vmatprep.subr.mxu0 0.0
    %3370 = vmatpush1.msra.mxu0 %v3350
    %3371 = vmatprep.subr.mxu0 0.0
    %3372 = vmatpush1.msra.mxu0 %v3351
    %3373 = vmatprep.subr.mxu0 0.0
    %3374 = vmatpush1.msra.mxu0 0.0
    %3375 = vmatprep.subr.mxu0 0.0
    %3376 = vmatpush1.msra.mxu0 0.0
    %3377 = vmatprep.subr.mxu0 0.0
    %3378 = vmatpush1.msra.mxu0 0.0
    %3379 = vmatprep.subr.mxu0 0.0
    %3380 = vmatpush1.msra.mxu0 0.0
    %3381 = vmatprep.subr.mxu0 0.0
    %3382 = vmatpush1.msra.mxu0 0.0
    %3383 = vmatprep.subr.mxu0 0.0
    %3384 = vmatpush1.msra.mxu0 0.0
    %3385 = vmatprep.subr.mxu0 0.0
    %3386 = vmatpush1.msra.mxu0 0.0
    %3387 = vmatprep.subr.mxu0 0.0
    %3388 = vmatpush1.msra.mxu0 0.0
    %3389 = vmatprep.subr.mxu0 0.0
    %3390 = vmatpush1.msra.mxu0 0.0
    %3391 = vmatprep.subr.mxu0 0.0
    %3392 = vmatpush1.msra.mxu0 0.0
    %3393 = vmatprep.subr.mxu0 0.0
    %3394 = vmatpush1.msra.mxu0 0.0
    %3395 = vmatprep.subr.mxu0 0.0
    %3396 = vmatpush1.msra.mxu0 0.0
    %3397 = vmatprep.subr.mxu0 0.0
    %3398 = vmatpush1.msra.mxu0 0.0
    %3399 = vmatprep.subr.mxu0 0.0
    %3400 = vmatpush1.msra.mxu0 0.0
    %3401 = vmatprep.subr.mxu0 0.0
    %3402 = vmatpush1.msra.mxu0 0.0
    %3403 = vmatprep.subr.mxu0 0.0
    %3404 = vmatpush1.msra.mxu0 0.0
    %3405 = vmatprep.subr.mxu0 0.0
    %3406 = vmatpush1.msra.mxu0 0.0
    %3407 = vmatprep.subr.mxu0 0.0
    %3408 = vmatpush1.msra.mxu0 0.0
    %3409 = vmatprep.subr.mxu0 0.0
    %3410 = vmatpush1.msra.mxu0 0.0
    %3411 = vmatprep.subr.mxu0 0.0
    %3412 = vmatpush1.msra.mxu0 0.0
    %3413 = vmatprep.subr.mxu0 0.0
    %3414 = vmatpush1.msra.mxu0 0.0
    %3415 = vmatprep.subr.mxu0 0.0
    %3416 = vmatpush1.msra.mxu0 0.0
    %3417 = vmatprep.subr.mxu0 0.0
    %3418 = vmatpush1.msra.mxu0 0.0
    %3419 = vmatprep.subr.mxu0 0.0
    %3420 = vmatpush1.msra.mxu0 0.0
    %3421 = vmatprep.subr.mxu0 0.0
    %3422 = vmatpush1.msra.mxu0 0.0
    %3423 = vmatprep.subr.mxu0 0.0
    %3424 = vmatpush1.msra.mxu0 0.0
    %3425 = vmatprep.subr.mxu0 0.0
    %3426 = vmatpush1.msra.mxu0 0.0
    %3427 = vmatprep.subr.mxu0 0.0
    %3428 = vmatpush1.msra.mxu0 0.0
    %3429 = vmatprep.mubr.f32.mxu0 0.0
    %3430 = vmatmul.mubr.f32.gmra.mrb[0].mxu0 %v3360
    %v3431 = vpop.f32.mrb[0].mxu0
    %v3432 = vadd.f32 %v3357, %v3431
    %v3433 = vpop.f32.mrb[0].mxu0
    %3434 = vmatprep.mubr.f32.mxu0 0.0
    %3435 = vmatmul.mubr.f32.gmra.mrb[0].mxu0 %v3363
    %v3436 = vpop.f32.mrb[0].mxu0
    %v3437 = vadd.f32 %v3357, %v3436
    %v3438 = vpop.f32.mrb[0].mxu0
    %3439 = vdwg.mxu0
    %3440 = vst [vmem:[#allocation4] sm:$0xff] %v3432
    %3441 = vst [vmem:[#allocation4 + $0x8] sm:$0xff] %v3437
    %v3442 = vld [vmem:[#allocation18] sm:$0xff]
    %v3443 = vld [vmem:[#allocation18 + $0x8] sm:$0xff]
    %v3444 = vld [vmem:[#allocation18 + $0x10] sm:$0xff]
    %v3445 = vld [vmem:[#allocation18 + $0x18] sm:$0xff]
    %v3446 = vld [vmem:[#allocation4] sm:$0x3]
    %3447 = vmatprep.subr.mxu0 0.0
    %3448 = vmatpush1.msra.mxu0 %v3442
    %3449 = vmatprep.subr.mxu0 0.0
    %3450 = vmatpush1.msra.mxu0 %v3443
    %3451 = vmatprep.subr.mxu0 0.0
    %3452 = vmatpush1.msra.mxu0 %v3444
    %3453 = vmatprep.subr.mxu0 0.0
    %3454 = vmatpush1.msra.mxu0 %v3445
    %3455 = vmatprep.subr.mxu0 0.0
    %3456 = vmatpush1.msra.mxu0 0.0
    %3457 = vmatprep.subr.mxu0 0.0
    %3458 = vmatpush1.msra.mxu0 0.0
    %3459 = vmatprep.subr.mxu0 0.0
    %3460 = vmatpush1.msra.mxu0 0.0
    %3461 = vmatprep.subr.mxu0 0.0
    %3462 = vmatpush1.msra.mxu0 0.0
    %3463 = vmatprep.subr.mxu0 0.0
    %3464 = vmatpush1.msra.mxu0 0.0
    %3465 = vmatprep.subr.mxu0 0.0
    %3466 = vmatpush1.msra.mxu0 0.0
    %3467 = vmatprep.subr.mxu0 0.0
    %3468 = vmatpush1.msra.mxu0 0.0
    %3469 = vmatprep.subr.mxu0 0.0
    %3470 = vmatpush1.msra.mxu0 0.0
    %3471 = vmatprep.subr.mxu0 0.0
    %3472 = vmatpush1.msra.mxu0 0.0
    %3473 = vmatprep.subr.mxu0 0.0
    %3474 = vmatpush1.msra.mxu0 0.0
    %3475 = vmatprep.subr.mxu0 0.0
    %3476 = vmatpush1.msra.mxu0 0.0
    %3477 = vmatprep.subr.mxu0 0.0
    %3478 = vmatpush1.msra.mxu0 0.0
    %3479 = vmatprep.subr.mxu0 0.0
    %3480 = vmatpush1.msra.mxu0 0.0
    %3481 = vmatprep.subr.mxu0 0.0
    %3482 = vmatpush1.msra.mxu0 0.0
    %3483 = vmatprep.subr.mxu0 0.0
    %3484 = vmatpush1.msra.mxu0 0.0
    %3485 = vmatprep.subr.mxu0 0.0
    %3486 = vmatpush1.msra.mxu0 0.0
    %3487 = vmatprep.subr.mxu0 0.0
    %3488 = vmatpush1.msra.mxu0 0.0
    %3489 = vmatprep.subr.mxu0 0.0
    %3490 = vmatpush1.msra.mxu0 0.0
    %3491 = vmatprep.subr.mxu0 0.0
    %3492 = vmatpush1.msra.mxu0 0.0
    %3493 = vmatprep.subr.mxu0 0.0
    %3494 = vmatpush1.msra.mxu0 0.0
    %3495 = vmatprep.subr.mxu0 0.0
    %3496 = vmatpush1.msra.mxu0 0.0
    %3497 = vmatprep.subr.mxu0 0.0
    %3498 = vmatpush1.msra.mxu0 0.0
    %3499 = vmatprep.subr.mxu0 0.0
    %3500 = vmatpush1.msra.mxu0 0.0
    %3501 = vmatprep.subr.mxu0 0.0
    %3502 = vmatpush1.msra.mxu0 0.0
    %3503 = vmatprep.subr.mxu0 0.0
    %3504 = vmatpush1.msra.mxu0 0.0
    %3505 = vmatprep.subr.mxu0 0.0
    %3506 = vmatpush1.msra.mxu0 0.0
    %3507 = vmatprep.subr.mxu0 0.0
    %3508 = vmatpush1.msra.mxu0 0.0
    %3509 = vmatprep.subr.mxu0 0.0
    %3510 = vmatpush1.msra.mxu0 0.0
    %3511 = vmatprep.mubr.f32.mxu0 0.0
    %3512 = vmatmul.mubr.f32.gmra.mrb[0].mxu0 %v302
    %v3513 = vpop.f32.mrb[0].mxu0
    %v3514 = vadd.f32 0.0, %v3513
    %v3515 = vpop.f32.mrb[0].mxu0
    %3516 = vdwg.mxu0
    %v3517 = vadd.f32 %v3446, %v3514
    %v3518 = vxor.u32 %v3517, 2147483648
    %v3519 = vmul.f32 %v3518, 1.442695
    %v3520 = vpow.pop %v3519
    %v3521 = vadd.f32 %v3520, 1.0
    %v3522 = vrcp.pop %v3521
    %v3523 = vmul.f32 1.0, %v3522
    %v3524 = vtanh.pop %v3517
    %v3525 = vmul.f32 %v3523, 0.0
    %3527 = vrot.lane.b32.xlu0 %v3524, 64
    %v3528 = vpop.permute.xlu0 %3527
    %v3530 = vmul.f32 %v3523, %v3528
    %3532 = vrot.lane.b32.xlu0 %v3530, 32
    %v3533 = vpop.permute.xlu0 %3532
    %v3535 = vadd.f32 %v3525, %v3533
    %v3536 = vtanh.pop %v3535
    %3538 = vrot.lane.b32.xlu0 %v3536, 64
    %v3539 = vpop.permute.xlu0 %3538
    %v3541 = vmul.f32 %v3523, %v3539
    %3543 = vrot.lane.b32.xlu0 %v3541, 32
    %v3544 = vpop.permute.xlu0 %3543
    %3546 = vst.msk [vmem:[#allocation3] sm:$0x3] %vm404, %v3544
    %v3547 = vld [vmem:[#allocation4 + $0x2] sm:$0x3]
    %v3548 = vsel %vm300, %v3544, 0
    %3550 = vmatprep.subr.mxu0 0.0
    %3551 = vmatpush1.msra.mxu0 %v3442
    %3552 = vmatprep.subr.mxu0 0.0
    %3553 = vmatpush1.msra.mxu0 %v3443
    %3554 = vmatprep.subr.mxu0 0.0
    %3555 = vmatpush1.msra.mxu0 %v3444
    %3556 = vmatprep.subr.mxu0 0.0
    %3557 = vmatpush1.msra.mxu0 %v3445
    %3558 = vmatprep.subr.mxu0 0.0
    %3559 = vmatpush1.msra.mxu0 0.0
    %3560 = vmatprep.subr.mxu0 0.0
    %3561 = vmatpush1.msra.mxu0 0.0
    %3562 = vmatprep.subr.mxu0 0.0
    %3563 = vmatpush1.msra.mxu0 0.0
    %3564 = vmatprep.subr.mxu0 0.0
    %3565 = vmatpush1.msra.mxu0 0.0
    %3566 = vmatprep.subr.mxu0 0.0
    %3567 = vmatpush1.msra.mxu0 0.0
    %3568 = vmatprep.subr.mxu0 0.0
    %3569 = vmatpush1.msra.mxu0 0.0
    %3570 = vmatprep.subr.mxu0 0.0
    %3571 = vmatpush1.msra.mxu0 0.0
    %3572 = vmatprep.subr.mxu0 0.0
    %3573 = vmatpush1.msra.mxu0 0.0
    %3574 = vmatprep.subr.mxu0 0.0
    %3575 = vmatpush1.msra.mxu0 0.0
    %3576 = vmatprep.subr.mxu0 0.0
    %3577 = vmatpush1.msra.mxu0 0.0
    %3578 = vmatprep.subr.mxu0 0.0
    %3579 = vmatpush1.msra.mxu0 0.0
    %3580 = vmatprep.subr.mxu0 0.0
    %3581 = vmatpush1.msra.mxu0 0.0
    %3582 = vmatprep.subr.mxu0 0.0
    %3583 = vmatpush1.msra.mxu0 0.0
    %3584 = vmatprep.subr.mxu0 0.0
    %3585 = vmatpush1.msra.mxu0 0.0
    %3586 = vmatprep.subr.mxu0 0.0
    %3587 = vmatpush1.msra.mxu0 0.0
    %3588 = vmatprep.subr.mxu0 0.0
    %3589 = vmatpush1.msra.mxu0 0.0
    %3590 = vmatprep.subr.mxu0 0.0
    %3591 = vmatpush1.msra.mxu0 0.0
    %3592 = vmatprep.subr.mxu0 0.0
    %3593 = vmatpush1.msra.mxu0 0.0
    %3594 = vmatprep.subr.mxu0 0.0
    %3595 = vmatpush1.msra.mxu0 0.0
    %3596 = vmatprep.subr.mxu0 0.0
    %3597 = vmatpush1.msra.mxu0 0.0
    %3598 = vmatprep.subr.mxu0 0.0
    %3599 = vmatpush1.msra.mxu0 0.0
    %3600 = vmatprep.subr.mxu0 0.0
    %3601 = vmatpush1.msra.mxu0 0.0
    %3602 = vmatprep.subr.mxu0 0.0
    %3603 = vmatpush1.msra.mxu0 0.0
    %3604 = vmatprep.subr.mxu0 0.0
    %3605 = vmatpush1.msra.mxu0 0.0
    %3606 = vmatprep.subr.mxu0 0.0
    %3607 = vmatpush1.msra.mxu0 0.0
    %3608 = vmatprep.subr.mxu0 0.0
    %3609 = vmatpush1.msra.mxu0 0.0
    %3610 = vmatprep.subr.mxu0 0.0
    %3611 = vmatpush1.msra.mxu0 0.0
    %3612 = vmatprep.subr.mxu0 0.0
    %3613 = vmatpush1.msra.mxu0 0.0
    %3614 = vmatprep.mubr.f32.mxu0 0.0
    %3615 = vmatmul.mubr.f32.gmra.mrb[0].mxu0 %v3548
    %v3616 = vpop.f32.mrb[0].mxu0
    %v3617 = vadd.f32 0.0, %v3616
    %v3618 = vpop.f32.mrb[0].mxu0
    %3619 = vdwg.mxu0
    %v3620 = vadd.f32 %v3547, %v3617
    %v3621 = vxor.u32 %v3620, 2147483648
    %v3622 = vmul.f32 %v3621, 1.442695
    %v3623 = vpow.pop %v3622
    %v3624 = vadd.f32 %v3623, 1.0
    %v3625 = vrcp.pop %v3624
    %v3626 = vmul.f32 1.0, %v3625
    %v3627 = vtanh.pop %v3620
    %v3628 = vmul.f32 %v3626, %v3535
    %3630 = vrot.lane.b32.xlu0 %v3627, 64
    %v3631 = vpop.permute.xlu0 %3630
    %v3633 = vmul.f32 %v3626, %v3631
    %3635 = vrot.lane.b32.xlu0 %v3633, 32
    %v3636 = vpop.permute.xlu0 %3635
    %v3638 = vadd.f32 %v3628, %v3636
    %v3639 = vtanh.pop %v3638
    %3641 = vrot.lane.b32.xlu0 %v3639, 64
    %v3642 = vpop.permute.xlu0 %3641
    %v3644 = vmul.f32 %v3626, %v3642
    %3646 = vrot.lane.b32.xlu0 %v3644, 32
    %v3647 = vpop.permute.xlu0 %3646
    %3649 = vst.msk [vmem:[#allocation3 + $0x2] sm:$0x3] %vm404, %v3647
    %v3650 = vld [vmem:[#allocation4 + $0x4] sm:$0x3]
    %v3651 = vsel %vm300, %v3647, 0
    %3653 = vmatprep.subr.mxu0 0.0
    %3654 = vmatpush1.msra.mxu0 %v3442
    %3655 = vmatprep.subr.mxu0 0.0
    %3656 = vmatpush1.msra.mxu0 %v3443
    %3657 = vmatprep.subr.mxu0 0.0
    %3658 = vmatpush1.msra.mxu0 %v3444
    %3659 = vmatprep.subr.mxu0 0.0
    %3660 = vmatpush1.msra.mxu0 %v3445
    %3661 = vmatprep.subr.mxu0 0.0
    %3662 = vmatpush1.msra.mxu0 0.0
    %3663 = vmatprep.subr.mxu0 0.0
    %3664 = vmatpush1.msra.mxu0 0.0
    %3665 = vmatprep.subr.mxu0 0.0
    %3666 = vmatpush1.msra.mxu0 0.0
    %3667 = vmatprep.subr.mxu0 0.0
    %3668 = vmatpush1.msra.mxu0 0.0
    %3669 = vmatprep.subr.mxu0 0.0
    %3670 = vmatpush1.msra.mxu0 0.0
    %3671 = vmatprep.subr.mxu0 0.0
    %3672 = vmatpush1.msra.mxu0 0.0
    %3673 = vmatprep.subr.mxu0 0.0
    %3674 = vmatpush1.msra.mxu0 0.0
    %3675 = vmatprep.subr.mxu0 0.0
    %3676 = vmatpush1.msra.mxu0 0.0
    %3677 = vmatprep.subr.mxu0 0.0
    %3678 = vmatpush1.msra.mxu0 0.0
    %3679 = vmatprep.subr.mxu0 0.0
    %3680 = vmatpush1.msra.mxu0 0.0
    %3681 = vmatprep.subr.mxu0 0.0
    %3682 = vmatpush1.msra.mxu0 0.0
    %3683 = vmatprep.subr.mxu0 0.0
    %3684 = vmatpush1.msra.mxu0 0.0
    %3685 = vmatprep.subr.mxu0 0.0
    %3686 = vmatpush1.msra.mxu0 0.0
    %3687 = vmatprep.subr.mxu0 0.0
    %3688 = vmatpush1.msra.mxu0 0.0
    %3689 = vmatprep.subr.mxu0 0.0
    %3690 = vmatpush1.msra.mxu0 0.0
    %3691 = vmatprep.subr.mxu0 0.0
    %3692 = vmatpush1.msra.mxu0 0.0
    %3693 = vmatprep.subr.mxu0 0.0
    %3694 = vmatpush1.msra.mxu0 0.0
    %3695 = vmatprep.subr.mxu0 0.0
    %3696 = vmatpush1.msra.mxu0 0.0
    %3697 = vmatprep.subr.mxu0 0.0
    %3698 = vmatpush1.msra.mxu0 0.0
    %3699 = vmatprep.subr.mxu0 0.0
    %3700 = vmatpush1.msra.mxu0 0.0
    %3701 = vmatprep.subr.mxu0 0.0
    %3702 = vmatpush1.msra.mxu0 0.0
    %3703 = vmatprep.subr.mxu0 0.0
    %3704 = vmatpush1.msra.mxu0 0.0
    %3705 = vmatprep.subr.mxu0 0.0
    %3706 = vmatpush1.msra.mxu0 0.0
    %3707 = vmatprep.subr.mxu0 0.0
    %3708 = vmatpush1.msra.mxu0 0.0
    %3709 = vmatprep.subr.mxu0 0.0
    %3710 = vmatpush1.msra.mxu0 0.0
    %3711 = vmatprep.subr.mxu0 0.0
    %3712 = vmatpush1.msra.mxu0 0.0
    %3713 = vmatprep.subr.mxu0 0.0
    %3714 = vmatpush1.msra.mxu0 0.0
    %3715 = vmatprep.subr.mxu0 0.0
    %3716 = vmatpush1.msra.mxu0 0.0
    %3717 = vmatprep.mubr.f32.mxu0 0.0
    %3718 = vmatmul.mubr.f32.gmra.mrb[0].mxu0 %v3651
    %v3719 = vpop.f32.mrb[0].mxu0
    %v3720 = vadd.f32 0.0, %v3719
    %v3721 = vpop.f32.mrb[0].mxu0
    %3722 = vdwg.mxu0
    %v3723 = vadd.f32 %v3650, %v3720
    %v3724 = vxor.u32 %v3723, 2147483648
    %v3725 = vmul.f32 %v3724, 1.442695
    %v3726 = vpow.pop %v3725
    %v3727 = vadd.f32 %v3726, 1.0
    %v3728 = vrcp.pop %v3727
    %v3729 = vmul.f32 1.0, %v3728
    %v3730 = vtanh.pop %v3723
    %v3731 = vmul.f32 %v3729, %v3638
    %3733 = vrot.lane.b32.xlu0 %v3730, 64
    %v3734 = vpop.permute.xlu0 %3733
    %v3736 = vmul.f32 %v3729, %v3734
    %3738 = vrot.lane.b32.xlu0 %v3736, 32
    %v3739 = vpop.permute.xlu0 %3738
    %v3741 = vadd.f32 %v3731, %v3739
    %v3742 = vtanh.pop %v3741
    %3744 = vrot.lane.b32.xlu0 %v3742, 64
    %v3745 = vpop.permute.xlu0 %3744
    %v3747 = vmul.f32 %v3729, %v3745
    %3749 = vrot.lane.b32.xlu0 %v3747, 32
    %v3750 = vpop.permute.xlu0 %3749
    %3752 = vst.msk [vmem:[#allocation3 + $0x4] sm:$0x3] %vm404, %v3750
    %v3753 = vld [vmem:[#allocation4 + $0x6] sm:$0x3]
    %v3754 = vsel %vm300, %v3750, 0
    %3756 = vmatprep.subr.mxu0 0.0
    %3757 = vmatpush1.msra.mxu0 %v3442
    %3758 = vmatprep.subr.mxu0 0.0
    %3759 = vmatpush1.msra.mxu0 %v3443
    %3760 = vmatprep.subr.mxu0 0.0
    %3761 = vmatpush1.msra.mxu0 %v3444
    %3762 = vmatprep.subr.mxu0 0.0
    %3763 = vmatpush1.msra.mxu0 %v3445
    %3764 = vmatprep.subr.mxu0 0.0
    %3765 = vmatpush1.msra.mxu0 0.0
    %3766 = vmatprep.subr.mxu0 0.0
    %3767 = vmatpush1.msra.mxu0 0.0
    %3768 = vmatprep.subr.mxu0 0.0
    %3769 = vmatpush1.msra.mxu0 0.0
    %3770 = vmatprep.subr.mxu0 0.0
    %3771 = vmatpush1.msra.mxu0 0.0
    %3772 = vmatprep.subr.mxu0 0.0
    %3773 = vmatpush1.msra.mxu0 0.0
    %3774 = vmatprep.subr.mxu0 0.0
    %3775 = vmatpush1.msra.mxu0 0.0
    %3776 = vmatprep.subr.mxu0 0.0
    %3777 = vmatpush1.msra.mxu0 0.0
    %3778 = vmatprep.subr.mxu0 0.0
    %3779 = vmatpush1.msra.mxu0 0.0
    %3780 = vmatprep.subr.mxu0 0.0
    %3781 = vmatpush1.msra.mxu0 0.0
    %3782 = vmatprep.subr.mxu0 0.0
    %3783 = vmatpush1.msra.mxu0 0.0
    %3784 = vmatprep.subr.mxu0 0.0
    %3785 = vmatpush1.msra.mxu0 0.0
    %3786 = vmatprep.subr.mxu0 0.0
    %3787 = vmatpush1.msra.mxu0 0.0
    %3788 = vmatprep.subr.mxu0 0.0
    %3789 = vmatpush1.msra.mxu0 0.0
    %3790 = vmatprep.subr.mxu0 0.0
    %3791 = vmatpush1.msra.mxu0 0.0
    %3792 = vmatprep.subr.mxu0 0.0
    %3793 = vmatpush1.msra.mxu0 0.0
    %3794 = vmatprep.subr.mxu0 0.0
    %3795 = vmatpush1.msra.mxu0 0.0
    %3796 = vmatprep.subr.mxu0 0.0
    %3797 = vmatpush1.msra.mxu0 0.0
    %3798 = vmatprep.subr.mxu0 0.0
    %3799 = vmatpush1.msra.mxu0 0.0
    %3800 = vmatprep.subr.mxu0 0.0
    %3801 = vmatpush1.msra.mxu0 0.0
    %3802 = vmatprep.subr.mxu0 0.0
    %3803 = vmatpush1.msra.mxu0 0.0
    %3804 = vmatprep.subr.mxu0 0.0
    %3805 = vmatpush1.msra.mxu0 0.0
    %3806 = vmatprep.subr.mxu0 0.0
    %3807 = vmatpush1.msra.mxu0 0.0
    %3808 = vmatprep.subr.mxu0 0.0
    %3809 = vmatpush1.msra.mxu0 0.0
    %3810 = vmatprep.subr.mxu0 0.0
    %3811 = vmatpush1.msra.mxu0 0.0
    %3812 = vmatprep.subr.mxu0 0.0
    %3813 = vmatpush1.msra.mxu0 0.0
    %3814 = vmatprep.subr.mxu0 0.0
    %3815 = vmatpush1.msra.mxu0 0.0
    %3816 = vmatprep.subr.mxu0 0.0
    %3817 = vmatpush1.msra.mxu0 0.0
    %3818 = vmatprep.subr.mxu0 0.0
    %3819 = vmatpush1.msra.mxu0 0.0
    %3820 = vmatprep.mubr.f32.mxu0 0.0
    %3821 = vmatmul.mubr.f32.gmra.mrb[0].mxu0 %v3754
    %v3822 = vpop.f32.mrb[0].mxu0
    %v3823 = vadd.f32 0.0, %v3822
    %v3824 = vpop.f32.mrb[0].mxu0
    %3825 = vdwg.mxu0
    %v3826 = vadd.f32 %v3753, %v3823
    %v3827 = vxor.u32 %v3826, 2147483648
    %v3828 = vmul.f32 %v3827, 1.442695
    %v3829 = vpow.pop %v3828
    %v3830 = vadd.f32 %v3829, 1.0
    %v3831 = vrcp.pop %v3830
    %v3832 = vmul.f32 1.0, %v3831
    %v3833 = vtanh.pop %v3826
    %v3834 = vmul.f32 %v3832, %v3741
    %3836 = vrot.lane.b32.xlu0 %v3833, 64
    %v3837 = vpop.permute.xlu0 %3836
    %v3839 = vmul.f32 %v3832, %v3837
    %3841 = vrot.lane.b32.xlu0 %v3839, 32
    %v3842 = vpop.permute.xlu0 %3841
    %v3844 = vadd.f32 %v3834, %v3842
    %v3845 = vtanh.pop %v3844
    %3847 = vrot.lane.b32.xlu0 %v3845, 64
    %v3848 = vpop.permute.xlu0 %3847
    %v3850 = vmul.f32 %v3832, %v3848
    %3852 = vrot.lane.b32.xlu0 %v3850, 32
    %v3853 = vpop.permute.xlu0 %3852
    %3855 = vst.msk [vmem:[#allocation3 + $0x6] sm:$0x3] %vm404, %v3853
    %v3856 = vld [vmem:[#allocation4 + $0x8] sm:$0x3]
    %v3857 = vsel %vm300, %v3853, 0
    %3859 = vmatprep.subr.mxu0 0.0
    %3860 = vmatpush1.msra.mxu0 %v3442
    %3861 = vmatprep.subr.mxu0 0.0
    %3862 = vmatpush1.msra.mxu0 %v3443
    %3863 = vmatprep.subr.mxu0 0.0
    %3864 = vmatpush1.msra.mxu0 %v3444
    %3865 = vmatprep.subr.mxu0 0.0
    %3866 = vmatpush1.msra.mxu0 %v3445
    %3867 = vmatprep.subr.mxu0 0.0
    %3868 = vmatpush1.msra.mxu0 0.0
    %3869 = vmatprep.subr.mxu0 0.0
    %3870 = vmatpush1.msra.mxu0 0.0
    %3871 = vmatprep.subr.mxu0 0.0
    %3872 = vmatpush1.msra.mxu0 0.0
    %3873 = vmatprep.subr.mxu0 0.0
    %3874 = vmatpush1.msra.mxu0 0.0
    %3875 = vmatprep.subr.mxu0 0.0
    %3876 = vmatpush1.msra.mxu0 0.0
    %3877 = vmatprep.subr.mxu0 0.0
    %3878 = vmatpush1.msra.mxu0 0.0
    %3879 = vmatprep.subr.mxu0 0.0
    %3880 = vmatpush1.msra.mxu0 0.0
    %3881 = vmatprep.subr.mxu0 0.0
    %3882 = vmatpush1.msra.mxu0 0.0
    %3883 = vmatprep.subr.mxu0 0.0
    %3884 = vmatpush1.msra.mxu0 0.0
    %3885 = vmatprep.subr.mxu0 0.0
    %3886 = vmatpush1.msra.mxu0 0.0
    %3887 = vmatprep.subr.mxu0 0.0
    %3888 = vmatpush1.msra.mxu0 0.0
    %3889 = vmatprep.subr.mxu0 0.0
    %3890 = vmatpush1.msra.mxu0 0.0
    %3891 = vmatprep.subr.mxu0 0.0
    %3892 = vmatpush1.msra.mxu0 0.0
    %3893 = vmatprep.subr.mxu0 0.0
    %3894 = vmatpush1.msra.mxu0 0.0
    %3895 = vmatprep.subr.mxu0 0.0
    %3896 = vmatpush1.msra.mxu0 0.0
    %3897 = vmatprep.subr.mxu0 0.0
    %3898 = vmatpush1.msra.mxu0 0.0
    %3899 = vmatprep.subr.mxu0 0.0
    %3900 = vmatpush1.msra.mxu0 0.0
    %3901 = vmatprep.subr.mxu0 0.0
    %3902 = vmatpush1.msra.mxu0 0.0
    %3903 = vmatprep.subr.mxu0 0.0
    %3904 = vmatpush1.msra.mxu0 0.0
    %3905 = vmatprep.subr.mxu0 0.0
    %3906 = vmatpush1.msra.mxu0 0.0
    %3907 = vmatprep.subr.mxu0 0.0
    %3908 = vmatpush1.msra.mxu0 0.0
    %3909 = vmatprep.subr.mxu0 0.0
    %3910 = vmatpush1.msra.mxu0 0.0
    %3911 = vmatprep.subr.mxu0 0.0
    %3912 = vmatpush1.msra.mxu0 0.0
    %3913 = vmatprep.subr.mxu0 0.0
    %3914 = vmatpush1.msra.mxu0 0.0
    %3915 = vmatprep.subr.mxu0 0.0
    %3916 = vmatpush1.msra.mxu0 0.0
    %3917 = vmatprep.subr.mxu0 0.0
    %3918 = vmatpush1.msra.mxu0 0.0
    %3919 = vmatprep.subr.mxu0 0.0
    %3920 = vmatpush1.msra.mxu0 0.0
    %3921 = vmatprep.subr.mxu0 0.0
    %3922 = vmatpush1.msra.mxu0 0.0
    %3923 = vmatprep.mubr.f32.mxu0 0.0
    %3924 = vmatmul.mubr.f32.gmra.mrb[0].mxu0 %v3857
    %v3925 = vpop.f32.mrb[0].mxu0
    %v3926 = vadd.f32 0.0, %v3925
    %v3927 = vpop.f32.mrb[0].mxu0
    %3928 = vdwg.mxu0
    %v3929 = vadd.f32 %v3856, %v3926
    %v3930 = vxor.u32 %v3929, 2147483648
    %v3931 = vmul.f32 %v3930, 1.442695
    %v3932 = vpow.pop %v3931
    %v3933 = vadd.f32 %v3932, 1.0
    %v3934 = vrcp.pop %v3933
    %v3935 = vmul.f32 1.0, %v3934
    %v3936 = vtanh.pop %v3929
    %v3937 = vmul.f32 %v3935, %v3844
    %3939 = vrot.lane.b32.xlu0 %v3936, 64
    %v3940 = vpop.permute.xlu0 %3939
    %v3942 = vmul.f32 %v3935, %v3940
    %3944 = vrot.lane.b32.xlu0 %v3942, 32
    %v3945 = vpop.permute.xlu0 %3944
    %v3947 = vadd.f32 %v3937, %v3945
    %v3948 = vtanh.pop %v3947
    %3950 = vrot.lane.b32.xlu0 %v3948, 64
    %v3951 = vpop.permute.xlu0 %3950
    %v3953 = vmul.f32 %v3935, %v3951
    %3955 = vrot.lane.b32.xlu0 %v3953, 32
    %v3956 = vpop.permute.xlu0 %3955
    %3958 = vst.msk [vmem:[#allocation3 + $0x8] sm:$0x3] %vm404, %v3956
    %v3959 = vld [vmem:[#allocation4 + $0xa] sm:$0x3]
    %v3960 = vsel %vm300, %v3956, 0
    %3962 = vmatprep.subr.mxu0 0.0
    %3963 = vmatpush1.msra.mxu0 %v3442
    %3964 = vmatprep.subr.mxu0 0.0
    %3965 = vmatpush1.msra.mxu0 %v3443
    %3966 = vmatprep.subr.mxu0 0.0
    %3967 = vmatpush1.msra.mxu0 %v3444
    %3968 = vmatprep.subr.mxu0 0.0
    %3969 = vmatpush1.msra.mxu0 %v3445
    %3970 = vmatprep.subr.mxu0 0.0
    %3971 = vmatpush1.msra.mxu0 0.0
    %3972 = vmatprep.subr.mxu0 0.0
    %3973 = vmatpush1.msra.mxu0 0.0
    %3974 = vmatprep.subr.mxu0 0.0
    %3975 = vmatpush1.msra.mxu0 0.0
    %3976 = vmatprep.subr.mxu0 0.0
    %3977 = vmatpush1.msra.mxu0 0.0
    %3978 = vmatprep.subr.mxu0 0.0
    %3979 = vmatpush1.msra.mxu0 0.0
    %3980 = vmatprep.subr.mxu0 0.0
    %3981 = vmatpush1.msra.mxu0 0.0
    %3982 = vmatprep.subr.mxu0 0.0
    %3983 = vmatpush1.msra.mxu0 0.0
    %3984 = vmatprep.subr.mxu0 0.0
    %3985 = vmatpush1.msra.mxu0 0.0
    %3986 = vmatprep.subr.mxu0 0.0
    %3987 = vmatpush1.msra.mxu0 0.0
    %3988 = vmatprep.subr.mxu0 0.0
    %3989 = vmatpush1.msra.mxu0 0.0
    %3990 = vmatprep.subr.mxu0 0.0
    %3991 = vmatpush1.msra.mxu0 0.0
    %3992 = vmatprep.subr.mxu0 0.0
    %3993 = vmatpush1.msra.mxu0 0.0
    %3994 = vmatprep.subr.mxu0 0.0
    %3995 = vmatpush1.msra.mxu0 0.0
    %3996 = vmatprep.subr.mxu0 0.0
    %3997 = vmatpush1.msra.mxu0 0.0
    %3998 = vmatprep.subr.mxu0 0.0
    %3999 = vmatpush1.msra.mxu0 0.0
    %4000 = vmatprep.subr.mxu0 0.0
    %4001 = vmatpush1.msra.mxu0 0.0
    %4002 = vmatprep.subr.mxu0 0.0
    %4003 = vmatpush1.msra.mxu0 0.0
    %4004 = vmatprep.subr.mxu0 0.0
    %4005 = vmatpush1.msra.mxu0 0.0
    %4006 = vmatprep.subr.mxu0 0.0
    %4007 = vmatpush1.msra.mxu0 0.0
    %4008 = vmatprep.subr.mxu0 0.0
    %4009 = vmatpush1.msra.mxu0 0.0
    %4010 = vmatprep.subr.mxu0 0.0
    %4011 = vmatpush1.msra.mxu0 0.0
    %4012 = vmatprep.subr.mxu0 0.0
    %4013 = vmatpush1.msra.mxu0 0.0
    %4014 = vmatprep.subr.mxu0 0.0
    %4015 = vmatpush1.msra.mxu0 0.0
    %4016 = vmatprep.subr.mxu0 0.0
    %4017 = vmatpush1.msra.mxu0 0.0
    %4018 = vmatprep.subr.mxu0 0.0
    %4019 = vmatpush1.msra.mxu0 0.0
    %4020 = vmatprep.subr.mxu0 0.0
    %4021 = vmatpush1.msra.mxu0 0.0
    %4022 = vmatprep.subr.mxu0 0.0
    %4023 = vmatpush1.msra.mxu0 0.0
    %4024 = vmatprep.subr.mxu0 0.0
    %4025 = vmatpush1.msra.mxu0 0.0
    %4026 = vmatprep.mubr.f32.mxu0 0.0
    %4027 = vmatmul.mubr.f32.gmra.mrb[0].mxu0 %v3960
    %v4028 = vpop.f32.mrb[0].mxu0
    %v4029 = vadd.f32 0.0, %v4028
    %v4030 = vpop.f32.mrb[0].mxu0
    %4031 = vdwg.mxu0
    %v4032 = vadd.f32 %v3959, %v4029
    %v4033 = vxor.u32 %v4032, 2147483648
    %v4034 = vmul.f32 %v4033, 1.442695
    %v4035 = vpow.pop %v4034
    %v4036 = vadd.f32 %v4035, 1.0
    %v4037 = vrcp.pop %v4036
    %v4038 = vmul.f32 1.0, %v4037
    %v4039 = vtanh.pop %v4032
    %v4040 = vmul.f32 %v4038, %v3947
    %4042 = vrot.lane.b32.xlu0 %v4039, 64
    %v4043 = vpop.permute.xlu0 %4042
    %v4045 = vmul.f32 %v4038, %v4043
    %4047 = vrot.lane.b32.xlu0 %v4045, 32
    %v4048 = vpop.permute.xlu0 %4047
    %v4050 = vadd.f32 %v4040, %v4048
    %v4051 = vtanh.pop %v4050
    %4053 = vrot.lane.b32.xlu0 %v4051, 64
    %v4054 = vpop.permute.xlu0 %4053
    %v4056 = vmul.f32 %v4038, %v4054
    %4058 = vrot.lane.b32.xlu0 %v4056, 32
    %v4059 = vpop.permute.xlu0 %4058
    %4061 = vst.msk [vmem:[#allocation3 + $0xa] sm:$0x3] %vm404, %v4059
    %v4062 = vld [vmem:[#allocation4 + $0xc] sm:$0x3]
    %v4063 = vsel %vm300, %v4059, 0
    %4065 = vmatprep.subr.mxu0 0.0
    %4066 = vmatpush1.msra.mxu0 %v3442
    %4067 = vmatprep.subr.mxu0 0.0
    %4068 = vmatpush1.msra.mxu0 %v3443
    %4069 = vmatprep.subr.mxu0 0.0
    %4070 = vmatpush1.msra.mxu0 %v3444
    %4071 = vmatprep.subr.mxu0 0.0
    %4072 = vmatpush1.msra.mxu0 %v3445
    %4073 = vmatprep.subr.mxu0 0.0
    %4074 = vmatpush1.msra.mxu0 0.0
    %4075 = vmatprep.subr.mxu0 0.0
    %4076 = vmatpush1.msra.mxu0 0.0
    %4077 = vmatprep.subr.mxu0 0.0
    %4078 = vmatpush1.msra.mxu0 0.0
    %4079 = vmatprep.subr.mxu0 0.0
    %4080 = vmatpush1.msra.mxu0 0.0
    %4081 = vmatprep.subr.mxu0 0.0
    %4082 = vmatpush1.msra.mxu0 0.0
    %4083 = vmatprep.subr.mxu0 0.0
    %4084 = vmatpush1.msra.mxu0 0.0
    %4085 = vmatprep.subr.mxu0 0.0
    %4086 = vmatpush1.msra.mxu0 0.0
    %4087 = vmatprep.subr.mxu0 0.0
    %4088 = vmatpush1.msra.mxu0 0.0
    %4089 = vmatprep.subr.mxu0 0.0
    %4090 = vmatpush1.msra.mxu0 0.0
    %4091 = vmatprep.subr.mxu0 0.0
    %4092 = vmatpush1.msra.mxu0 0.0
    %4093 = vmatprep.subr.mxu0 0.0
    %4094 = vmatpush1.msra.mxu0 0.0
    %4095 = vmatprep.subr.mxu0 0.0
    %4096 = vmatpush1.msra.mxu0 0.0
    %4097 = vmatprep.subr.mxu0 0.0
    %4098 = vmatpush1.msra.mxu0 0.0
    %4099 = vmatprep.subr.mxu0 0.0
    %4100 = vmatpush1.msra.mxu0 0.0
    %4101 = vmatprep.subr.mxu0 0.0
    %4102 = vmatpush1.msra.mxu0 0.0
    %4103 = vmatprep.subr.mxu0 0.0
    %4104 = vmatpush1.msra.mxu0 0.0
    %4105 = vmatprep.subr.mxu0 0.0
    %4106 = vmatpush1.msra.mxu0 0.0
    %4107 = vmatprep.subr.mxu0 0.0
    %4108 = vmatpush1.msra.mxu0 0.0
    %4109 = vmatprep.subr.mxu0 0.0
    %4110 = vmatpush1.msra.mxu0 0.0
    %4111 = vmatprep.subr.mxu0 0.0
    %4112 = vmatpush1.msra.mxu0 0.0
    %4113 = vmatprep.subr.mxu0 0.0
    %4114 = vmatpush1.msra.mxu0 0.0
    %4115 = vmatprep.subr.mxu0 0.0
    %4116 = vmatpush1.msra.mxu0 0.0
    %4117 = vmatprep.subr.mxu0 0.0
    %4118 = vmatpush1.msra.mxu0 0.0
    %4119 = vmatprep.subr.mxu0 0.0
    %4120 = vmatpush1.msra.mxu0 0.0
    %4121 = vmatprep.subr.mxu0 0.0
    %4122 = vmatpush1.msra.mxu0 0.0
    %4123 = vmatprep.subr.mxu0 0.0
    %4124 = vmatpush1.msra.mxu0 0.0
    %4125 = vmatprep.subr.mxu0 0.0
    %4126 = vmatpush1.msra.mxu0 0.0
    %4127 = vmatprep.subr.mxu0 0.0
    %4128 = vmatpush1.msra.mxu0 0.0
    %4129 = vmatprep.mubr.f32.mxu0 0.0
    %4130 = vmatmul.mubr.f32.gmra.mrb[0].mxu0 %v4063
    %v4131 = vpop.f32.mrb[0].mxu0
    %v4132 = vadd.f32 0.0, %v4131
    %v4133 = vpop.f32.mrb[0].mxu0
    %4134 = vdwg.mxu0
    %v4135 = vadd.f32 %v4062, %v4132
    %v4136 = vxor.u32 %v4135, 2147483648
    %v4137 = vmul.f32 %v4136, 1.442695
    %v4138 = vpow.pop %v4137
    %v4139 = vadd.f32 %v4138, 1.0
    %v4140 = vrcp.pop %v4139
    %v4141 = vmul.f32 1.0, %v4140
    %v4142 = vtanh.pop %v4135
    %v4143 = vmul.f32 %v4141, %v4050
    %4145 = vrot.lane.b32.xlu0 %v4142, 64
    %v4146 = vpop.permute.xlu0 %4145
    %v4148 = vmul.f32 %v4141, %v4146
    %4150 = vrot.lane.b32.xlu0 %v4148, 32
    %v4151 = vpop.permute.xlu0 %4150
    %v4153 = vadd.f32 %v4143, %v4151
    %v4154 = vtanh.pop %v4153
    %4156 = vrot.lane.b32.xlu0 %v4154, 64
    %v4157 = vpop.permute.xlu0 %4156
    %v4159 = vmul.f32 %v4141, %v4157
    %4161 = vrot.lane.b32.xlu0 %v4159, 32
    %v4162 = vpop.permute.xlu0 %4161
    %4164 = vst.msk [vmem:[#allocation3 + $0xc] sm:$0x3] %vm404, %v4162
    %v4165 = vld [vmem:[#allocation4 + $0xe] sm:$0x3]
    %v4166 = vsel %vm300, %v4162, 0
    %4168 = vmatprep.subr.mxu0 0.0
    %4169 = vmatpush1.msra.mxu0 %v3442
    %4170 = vmatprep.subr.mxu0 0.0
    %4171 = vmatpush1.msra.mxu0 %v3443
    %4172 = vmatprep.subr.mxu0 0.0
    %4173 = vmatpush1.msra.mxu0 %v3444
    %4174 = vmatprep.subr.mxu0 0.0
    %4175 = vmatpush1.msra.mxu0 %v3445
    %4176 = vmatprep.subr.mxu0 0.0
    %4177 = vmatpush1.msra.mxu0 0.0
    %4178 = vmatprep.subr.mxu0 0.0
    %4179 = vmatpush1.msra.mxu0 0.0
    %4180 = vmatprep.subr.mxu0 0.0
    %4181 = vmatpush1.msra.mxu0 0.0
    %4182 = vmatprep.subr.mxu0 0.0
    %4183 = vmatpush1.msra.mxu0 0.0
    %4184 = vmatprep.subr.mxu0 0.0
    %4185 = vmatpush1.msra.mxu0 0.0
    %4186 = vmatprep.subr.mxu0 0.0
    %4187 = vmatpush1.msra.mxu0 0.0
    %4188 = vmatprep.subr.mxu0 0.0
    %4189 = vmatpush1.msra.mxu0 0.0
    %4190 = vmatprep.subr.mxu0 0.0
    %4191 = vmatpush1.msra.mxu0 0.0
    %4192 = vmatprep.subr.mxu0 0.0
    %4193 = vmatpush1.msra.mxu0 0.0
    %4194 = vmatprep.subr.mxu0 0.0
    %4195 = vmatpush1.msra.mxu0 0.0
    %4196 = vmatprep.subr.mxu0 0.0
    %4197 = vmatpush1.msra.mxu0 0.0
    %4198 = vmatprep.subr.mxu0 0.0
    %4199 = vmatpush1.msra.mxu0 0.0
    %4200 = vmatprep.subr.mxu0 0.0
    %4201 = vmatpush1.msra.mxu0 0.0
    %4202 = vmatprep.subr.mxu0 0.0
    %4203 = vmatpush1.msra.mxu0 0.0
    %4204 = vmatprep.subr.mxu0 0.0
    %4205 = vmatpush1.msra.mxu0 0.0
    %4206 = vmatprep.subr.mxu0 0.0
    %4207 = vmatpush1.msra.mxu0 0.0
    %4208 = vmatprep.subr.mxu0 0.0
    %4209 = vmatpush1.msra.mxu0 0.0
    %4210 = vmatprep.subr.mxu0 0.0
    %4211 = vmatpush1.msra.mxu0 0.0
    %4212 = vmatprep.subr.mxu0 0.0
    %4213 = vmatpush1.msra.mxu0 0.0
    %4214 = vmatprep.subr.mxu0 0.0
    %4215 = vmatpush1.msra.mxu0 0.0
    %4216 = vmatprep.subr.mxu0 0.0
    %4217 = vmatpush1.msra.mxu0 0.0
    %4218 = vmatprep.subr.mxu0 0.0
    %4219 = vmatpush1.msra.mxu0 0.0
    %4220 = vmatprep.subr.mxu0 0.0
    %4221 = vmatpush1.msra.mxu0 0.0
    %4222 = vmatprep.subr.mxu0 0.0
    %4223 = vmatpush1.msra.mxu0 0.0
    %4224 = vmatprep.subr.mxu0 0.0
    %4225 = vmatpush1.msra.mxu0 0.0
    %4226 = vmatprep.subr.mxu0 0.0
    %4227 = vmatpush1.msra.mxu0 0.0
    %4228 = vmatprep.subr.mxu0 0.0
    %4229 = vmatpush1.msra.mxu0 0.0
    %4230 = vmatprep.subr.mxu0 0.0
    %4231 = vmatpush1.msra.mxu0 0.0
    %4232 = vmatprep.mubr.f32.mxu0 0.0
    %4233 = vmatmul.mubr.f32.gmra.mrb[0].mxu0 %v4166
    %v4234 = vpop.f32.mrb[0].mxu0
    %v4235 = vadd.f32 0.0, %v4234
    %v4236 = vpop.f32.mrb[0].mxu0
    %4237 = vdwg.mxu0
    %v4238 = vadd.f32 %v4165, %v4235
    %v4239 = vxor.u32 %v4238, 2147483648
    %v4240 = vmul.f32 %v4239, 1.442695
    %v4241 = vpow.pop %v4240
    %v4242 = vadd.f32 %v4241, 1.0
    %v4243 = vrcp.pop %v4242
    %v4244 = vmul.f32 1.0, %v4243
    %v4245 = vtanh.pop %v4238
    %v4246 = vmul.f32 %v4244, %v4153
    %4248 = vrot.lane.b32.xlu0 %v4245, 64
    %v4249 = vpop.permute.xlu0 %4248
    %v4251 = vmul.f32 %v4244, %v4249
    %4253 = vrot.lane.b32.xlu0 %v4251, 32
    %v4254 = vpop.permute.xlu0 %4253
    %v4256 = vadd.f32 %v4246, %v4254
    %v4257 = vtanh.pop %v4256
    %4259 = vrot.lane.b32.xlu0 %v4257, 64
    %v4260 = vpop.permute.xlu0 %4259
    %v4262 = vmul.f32 %v4244, %v4260
    %4264 = vrot.lane.b32.xlu0 %v4262, 32
    %v4265 = vpop.permute.xlu0 %4264
    %4267 = vst.msk [vmem:[#allocation3 + $0xe] sm:$0x3] %vm404, %v4265
    %v4268 = vld [vmem:[#allocation3] sm:$0xff]
    %v4269 = vld [vmem:[#allocation3 + $0x8] sm:$0xff]
    %v4270 = vld [vmem:[%s22] sm:$0xff]
    %v4271 = vld [vmem:[%s22 + $0x8] sm:$0xff]
    %v4272 = vld [vmem:[%s22 + $0x10] sm:$0xff]
    %v4273 = vld [vmem:[%s22 + $0x18] sm:$0xff]
    %v4274 = vld [vmem:[#allocation21] sm:$0x1]
    %v4276 = vlaneseq
    %v4277 = vshrl.u32 %v4276, 7
    %v4278 = vsub.s32 0, %v4277
    %v4279 = vrot.slane %v4274, %v4278
    %v4282 = vsel %vm300, %v4268, 0
    %v4285 = vsel %vm300, %v4269, 0
    %4287 = vmatprep.subr.mxu0 0.0
    %4288 = vmatpush1.msra.mxu0 %v4270
    %4289 = vmatprep.subr.mxu0 0.0
    %4290 = vmatpush1.msra.mxu0 %v4271
    %4291 = vmatprep.subr.mxu0 0.0
    %4292 = vmatpush1.msra.mxu0 %v4272
    %4293 = vmatprep.subr.mxu0 0.0
    %4294 = vmatpush1.msra.mxu0 %v4273
    %4295 = vmatprep.subr.mxu0 0.0
    %4296 = vmatpush1.msra.mxu0 0.0
    %4297 = vmatprep.subr.mxu0 0.0
    %4298 = vmatpush1.msra.mxu0 0.0
    %4299 = vmatprep.subr.mxu0 0.0
    %4300 = vmatpush1.msra.mxu0 0.0
    %4301 = vmatprep.subr.mxu0 0.0
    %4302 = vmatpush1.msra.mxu0 0.0
    %4303 = vmatprep.subr.mxu0 0.0
    %4304 = vmatpush1.msra.mxu0 0.0
    %4305 = vmatprep.subr.mxu0 0.0
    %4306 = vmatpush1.msra.mxu0 0.0
    %4307 = vmatprep.subr.mxu0 0.0
    %4308 = vmatpush1.msra.mxu0 0.0
    %4309 = vmatprep.subr.mxu0 0.0
    %4310 = vmatpush1.msra.mxu0 0.0
    %4311 = vmatprep.subr.mxu0 0.0
    %4312 = vmatpush1.msra.mxu0 0.0
    %4313 = vmatprep.subr.mxu0 0.0
    %4314 = vmatpush1.msra.mxu0 0.0
    %4315 = vmatprep.subr.mxu0 0.0
    %4316 = vmatpush1.msra.mxu0 0.0
    %4317 = vmatprep.subr.mxu0 0.0
    %4318 = vmatpush1.msra.mxu0 0.0
    %4319 = vmatprep.subr.mxu0 0.0
    %4320 = vmatpush1.msra.mxu0 0.0
    %4321 = vmatprep.subr.mxu0 0.0
    %4322 = vmatpush1.msra.mxu0 0.0
    %4323 = vmatprep.subr.mxu0 0.0
    %4324 = vmatpush1.msra.mxu0 0.0
    %4325 = vmatprep.subr.mxu0 0.0
    %4326 = vmatpush1.msra.mxu0 0.0
    %4327 = vmatprep.subr.mxu0 0.0
    %4328 = vmatpush1.msra.mxu0 0.0
    %4329 = vmatprep.subr.mxu0 0.0
    %4330 = vmatpush1.msra.mxu0 0.0
    %4331 = vmatprep.subr.mxu0 0.0
    %4332 = vmatpush1.msra.mxu0 0.0
    %4333 = vmatprep.subr.mxu0 0.0
    %4334 = vmatpush1.msra.mxu0 0.0
    %4335 = vmatprep.subr.mxu0 0.0
    %4336 = vmatpush1.msra.mxu0 0.0
    %4337 = vmatprep.subr.mxu0 0.0
    %4338 = vmatpush1.msra.mxu0 0.0
    %4339 = vmatprep.subr.mxu0 0.0
    %4340 = vmatpush1.msra.mxu0 0.0
    %4341 = vmatprep.subr.mxu0 0.0
    %4342 = vmatpush1.msra.mxu0 0.0
    %4343 = vmatprep.subr.mxu0 0.0
    %4344 = vmatpush1.msra.mxu0 0.0
    %4345 = vmatprep.subr.mxu0 0.0
    %4346 = vmatpush1.msra.mxu0 0.0
    %4347 = vmatprep.subr.mxu0 0.0
    %4348 = vmatpush1.msra.mxu0 0.0
    %4349 = vmatprep.subr.mxu0 0.0
    %4350 = vmatpush1.msra.mxu0 0.0
    %4351 = vmatprep.mubr.f32.mxu0 0.0
    %4352 = vmatmul.mubr.f32.gmra.mrb[0].mxu0 %v4282
    %v4353 = vpop.f32.mrb[0].mxu0
    %v4354 = vadd.f32 %v4279, %v4353
    %v4355 = vpop.f32.mrb[0].mxu0
    %4356 = vmatprep.mubr.f32.mxu0 0.0
    %4357 = vmatmul.mubr.f32.gmra.mrb[0].mxu0 %v4285
    %v4358 = vpop.f32.mrb[0].mxu0
    %v4359 = vadd.f32 %v4279, %v4358
    %v4360 = vpop.f32.mrb[0].mxu0
    %4361 = vdwg.mxu0
    %4362 = vst.msk [vmem:[#allocation7] sm:$0xff] %vm2191, %v4354
    %4363 = vst.msk [vmem:[#allocation7 + $0x8] sm:$0xff] %vm2191, %v4359
    %v4364 = vld [vmem:[#allocation7] sm:$0x3]
    %v4365 = vld [vmem:[#allocation7 + $0x2] sm:$0x3]
    %v4366 = vld [vmem:[#allocation7 + $0x4] sm:$0x3]
    %v4367 = vld [vmem:[#allocation7 + $0x6] sm:$0x3]
    %v4368 = vld [vmem:[#allocation7 + $0x8] sm:$0x3]
    %v4369 = vld [vmem:[#allocation7 + $0xa] sm:$0x3]
    %v4370 = vld [vmem:[#allocation7 + $0xc] sm:$0x3]
    %v4371 = vld [vmem:[#allocation7 + $0xe] sm:$0x3]
    %4373 = vrot.lane.b32.xlu0 %v4365, 8
    %v4374 = vpop.permute.xlu0 %4373
    %4377 = vrot.lane.b32.xlu0 %v4366, 16
    %v4378 = vpop.permute.xlu0 %4377
    %4381 = vrot.lane.b32.xlu0 %v4367, 24
    %v4382 = vpop.permute.xlu0 %4381
    %4385 = vrot.lane.b32.xlu0 %v4368, 32
    %v4386 = vpop.permute.xlu0 %4385
    %4389 = vrot.lane.b32.xlu0 %v4369, 40
    %v4390 = vpop.permute.xlu0 %4389
    %4393 = vrot.lane.b32.xlu0 %v4370, 48
    %v4394 = vpop.permute.xlu0 %4393
    %4397 = vrot.lane.b32.xlu0 %v4371, 56
    %v4398 = vpop.permute.xlu0 %4397
    %v4400 = vsel %vm2191, %v4364, %v4374
    %v4401 = vsel %vm2195, %v4400, %v4378
    %v4402 = vsel %vm2199, %v4401, %v4382
    %v4403 = vsel %vm300, %v4402, %v4386
    %vm4404 = vcmask 326656
    %v4405 = vsel %vm4404, %v4403, %v4390
    %vm4406 = vcmask 392192
    %v4407 = vsel %vm4406, %v4405, %v4394
    %vm4408 = vcmask 457728
    %v4409 = vsel %vm4408, %v4407, %v4398
    %v4410 = vmul.f32 %v4409, %v4409
    %4412 = vrot.lane.b32.xlu0 %v4410, 96
    %v4413 = vpop.permute.xlu0 %4412
    %v4415 = vadd.f32 %v4410, %v4413
    %4417 = vrot.lane.b32.xlu0 %v4409, 32
    %v4418 = vpop.permute.xlu0 %4417
    %4421 = vrot.lane.b32.xlu0 %v4415, 96
    %v4422 = vpop.permute.xlu0 %4421
    %v4424 = vsel %vm300, %v2295, %v4418
    %vm4425 = vcmask 523264
    %v4426 = vsel %vm4425, %v4424, %v4418
    %vm4427 = vcmask 785408
    %v4428 = vsel %vm4427, %v4426, %v4422
    %4429 = vst [vmem:[%s24] sm:$0x3] %v4428
    // Predicated region
    $region134: #{ciwlstm_forward.1} parent=1 // pred_check
      _
    $region135: #{ciwlstm_forward.1} parent=1 // pred_check_branch
      %4431 = sbr.rel (0) target = $region137
    $region136: #{ciwlstm_forward.1} parent=1 // pred_region
      _
    $region137: #{ciwlstm_forward.1} parent=1 // pred_fallthru
      _
    // Predicated region
    $region138: #{ciwlstm_forward.1} parent=1 // pred_check
      _
    $region139: #{ciwlstm_forward.1} parent=1 // pred_check_branch
      %4433 = sbr.rel (0) target = $region141
    $region140: #{ciwlstm_forward.1} parent=1 // pred_region
      _
    $region141: #{ciwlstm_forward.1} parent=1 // pred_fallthru
      _
    %4434 = vsyncpa [#allocation9], 1
    %4435 = vsyncpa [#allocation11], 1
    %4436 = vsyncpa [#allocation14], 1
    %4437 = vsyncpa [#allocation17], 1
    %4438 = vsyncpa [#allocation20], 1

</llo_original>
